<compile_context>
chip_gen: v5e
topology: v5e:2x2
jax: 0.10.0
libtpu: 0.0.40
codegen_flags: <defaults>
</compile_context>

<pallas_src>
import functools
import math

import jax
import jax.numpy as jnp
from jax.experimental import pallas as pl
from jax.experimental.pallas import tpu as pltpu


def _pick_q_block(S):
    """Largest q-tile that divides S (full S for typical SR3 feature maps)."""
    if S <= 1024:
        return S
    for t in (1024, 512, 256, 128, 64, 32, 16, 8):
        if S % t == 0:
            return t
    return S


def _sr3_self_attention_kernel(n_head, head_dim,
                               scale_ref, shift_ref, x_kv_ref, x_q_ref,
                               wq_ref, wk_ref, wv_ref, wout_ref, bout_ref,
                               o_ref):
    """One (batch, q-block) grid step.

    Refs:
      scale_ref : (1, 1, C) f32   fused GroupNorm scale (gamma * invstd)
      shift_ref : (1, 1, C) f32   fused GroupNorm shift (beta - gamma*invstd*mean)
      x_kv_ref  : (1, S,  C)      raw input, full sequence (K/V side)
      x_q_ref   : (1, TQ, C)      raw input, this q-block (Q side + residual)
      wq_ref    : (C, C) bf16     Q projection (1/sqrt(C) folded in), head-major cols
      wk_ref    : (C, C) bf16     K projection, head-major cols
      wv_ref    : (C, C) bf16     V projection, head-major cols
      wout_ref  : (C, C) bf16     out 1x1-conv weight, transposed
      bout_ref  : (1, C) f32      out 1x1-conv bias
      o_ref     : (1, TQ, C)      output block
    """
    scale = scale_ref[0]                                  # (1, C) f32
    shift = shift_ref[0]                                  # (1, C) f32

    x_kv = x_kv_ref[0].astype(jnp.float32)                # (S,  C)
    x_q = x_q_ref[0].astype(jnp.float32)                  # (TQ, C)
    S = x_kv.shape[0]
    TQ = x_q.shape[0]

    # Fused GroupNorm (normalize + affine as per-channel scale/shift).
    xn_kv = (x_kv * scale + shift).astype(jnp.bfloat16)   # (S,  C)
    xn_q = (x_q * scale + shift).astype(jnp.bfloat16)     # (TQ, C)

    # 1x1-conv projections = channel matmuls (bf16 operands, f32 accumulation).
    q = jnp.dot(xn_q, wq_ref[...], preferred_element_type=jnp.float32)   # (TQ, C)
    k = jnp.dot(xn_kv, wk_ref[...], preferred_element_type=jnp.float32)  # (S,  C)
    v = jnp.dot(xn_kv, wv_ref[...], preferred_element_type=jnp.float32)  # (S,  C)

    # (len, C) -> (n_head, len, head_dim): head-batched attention, no per-head loop.
    qh = jnp.transpose(q.astype(jnp.bfloat16).reshape(TQ, n_head, head_dim),
                       (1, 0, 2))                                         # (n, TQ, hd)
    kh = jnp.transpose(k.astype(jnp.bfloat16).reshape(S, n_head, head_dim),
                       (1, 0, 2))                                         # (n, S, hd)
    vh = jnp.transpose(v.astype(jnp.bfloat16).reshape(S, n_head, head_dim),
                       (1, 0, 2))                                         # (n, S, hd)

    # Scores (scale already folded into wq).  Softmax in f32.
    s = jnp.einsum('nqd,nkd->nqk', qh, kh,
                   preferred_element_type=jnp.float32)                    # (n, TQ, S)
    m = jnp.max(s, axis=-1, keepdims=True)
    p = jnp.exp(s - m)
    denom = jnp.sum(p, axis=-1, keepdims=True)
    p = (p * pl.reciprocal(denom, approx=True)).astype(jnp.bfloat16)

    oh = jnp.einsum('nqk,nkd->nqd', p, vh,
                    preferred_element_type=jnp.float32)                   # (n, TQ, hd)
    o_heads = jnp.transpose(oh, (1, 0, 2)).reshape(TQ, n_head * head_dim)
    o_heads = o_heads.astype(jnp.bfloat16)                                # (TQ, C)

    # Fused C-deep out-projection + bias + residual (bias/residual in f32).
    y = jnp.dot(o_heads, wout_ref[...], preferred_element_type=jnp.float32)
    y = y + bout_ref[...] + x_q
    o_ref[0] = y.astype(o_ref.dtype)


def self_attention(x_nchw, params, *, n_head, norm_groups, eps=1e-5):
    B, C, H, W = x_nchw.shape
    assert C % n_head == 0 and C % norm_groups == 0
    head_dim = C // n_head
    S = H * W
    TQ = _pick_q_block(S)
    num_q = S // TQ

    # ---- GroupNorm statistics, folded into per-(batch, channel) scale/shift.
    xf = x_nchw.astype(jnp.float32)
    xg = xf.reshape(B, norm_groups, -1)
    mean = jnp.mean(xg, axis=-1)                              # (B, G)
    var = jnp.var(xg, axis=-1)                                # (B, G)
    invstd = 1.0 / jnp.sqrt(var + eps)                        # (B, G)
    ch_per_g = C // norm_groups
    mean_c = jnp.repeat(mean, ch_per_g, axis=1)               # (B, C)
    invstd_c = jnp.repeat(invstd, ch_per_g, axis=1)           # (B, C)
    gamma = params["gn_weight"].astype(jnp.float32)[None, :]  # (1, C)
    beta = params["gn_bias"].astype(jnp.float32)[None, :]     # (1, C)
    gn_scale = (gamma * invstd_c).reshape(B, 1, C)
    gn_shift = (beta - gamma * invstd_c * mean_c).reshape(B, 1, C)

    # ---- NCHW -> (B, S, C) channels-last token layout.
    x_sc = jnp.transpose(x_nchw, (0, 2, 3, 1)).reshape(B, S, C)

    # ---- Weight prep: reorder qkv output channels to head-major [Q|K|V],
    #      transpose for channels-last matmuls, fold 1/sqrt(C) into Wq,
    #      cast weights to bf16 once.
    q_scale = 1.0 / math.sqrt(C)
    w = params["qkv_weight"].reshape(3 * C, C).reshape(n_head, 3, head_dim, C)
    wq_t = (jnp.transpose(w[:, 0].reshape(C, C)) * q_scale).astype(jnp.bfloat16)
    wk_t = jnp.transpose(w[:, 1].reshape(C, C)).astype(jnp.bfloat16)
    wv_t = jnp.transpose(w[:, 2].reshape(C, C)).astype(jnp.bfloat16)
    wout_t = jnp.transpose(params["out_weight"].reshape(C, C)).astype(jnp.bfloat16)
    bout = params["out_bias"].astype(jnp.float32).reshape(1, C)

    kernel = functools.partial(_sr3_self_attention_kernel, n_head, head_dim)

    out_sc = pl.pallas_call(
        kernel,
        out_shape=jax.ShapeDtypeStruct((B, S, C), x_nchw.dtype),
        grid=(B, num_q),
        in_specs=[
            pl.BlockSpec((1, 1, C), lambda b, qi: (b, 0, 0)),     # gn scale
            pl.BlockSpec((1, 1, C), lambda b, qi: (b, 0, 0)),     # gn shift
            pl.BlockSpec((1, S, C), lambda b, qi: (b, 0, 0)),     # x (K/V side, full S)
            pl.BlockSpec((1, TQ, C), lambda b, qi: (b, qi, 0)),   # x (Q block + residual)
            pl.BlockSpec((C, C), lambda b, qi: (0, 0)),           # Wq^T (scaled)
            pl.BlockSpec((C, C), lambda b, qi: (0, 0)),           # Wk^T
            pl.BlockSpec((C, C), lambda b, qi: (0, 0)),           # Wv^T
            pl.BlockSpec((C, C), lambda b, qi: (0, 0)),           # Wout^T
            pl.BlockSpec((1, C), lambda b, qi: (0, 0)),           # b_out
        ],
        out_specs=pl.BlockSpec((1, TQ, C), lambda b, qi: (b, qi, 0)),
        compiler_params=pltpu.CompilerParams(
            dimension_semantics=("parallel", "parallel"),
            vmem_limit_bytes=64 * 1024 * 1024),
    )(gn_scale, gn_shift, x_sc, x_sc, wq_t, wk_t, wv_t, wout_t, bout)

    # TODO(synk): for very large feature maps (S >> 4096) add a KV grid axis with
    # online-softmax accumulation; whole-S K/V per q-block is fine for SR3 sizes.

    # (B, S, C) -> NCHW
    return jnp.transpose(out_sc.reshape(B, H, W, C), (0, 3, 1, 2))


def self_attention_reference(x, params, *, n_head, norm_groups, eps=1e-5):
    """Pure-JAX (f32) reference mirroring the PyTorch module exactly."""
    B, C, H, W = x.shape
    hd = C // n_head
    xg = x.reshape(B, norm_groups, -1)
    mean = jnp.mean(xg, -1, keepdims=True)
    var = jnp.var(xg, -1, keepdims=True)
    xn = ((xg - mean) / jnp.sqrt(var + eps)).reshape(B, C, H, W)
    xn = xn * params["gn_weight"][None, :, None, None] \
            + params["gn_bias"][None, :, None, None]
    wq = params["qkv_weight"].reshape(3 * C, C)
    qkv = jnp.einsum('oi,bihw->bohw', wq, xn).reshape(B, n_head, hd * 3, H, W)
    q, k, v = jnp.split(qkv, 3, axis=2)
    attn = jnp.einsum('bnchw,bncyx->bnhwyx', q, k) / math.sqrt(C)
    attn = attn.reshape(B, n_head, H, W, -1)
    attn = jax.nn.softmax(attn, axis=-1).reshape(B, n_head, H, W, H, W)
    out = jnp.einsum('bnhwyx,bncyx->bnchw', attn, v).reshape(B, C, H, W)
    wo = params["out_weight"].reshape(C, C)
    out = jnp.einsum('oi,bihw->bohw', wo, out) \
          + params["out_bias"][None, :, None, None]
    return out + x


if __name__ == "__main__":
    # Small shapes consistent with the module: norm_groups and n_head divide C.
    B, C, H, W = 2, 32, 8, 8
    n_head, norm_groups = 2, 8

    key = jax.random.PRNGKey(0)
    k0, k1, k2, k3, k4, k5 = jax.random.split(key, 6)

    params = {
        "gn_weight": 1.0 + 0.1 * jax.random.normal(k0, (C,), jnp.float32),
        "gn_bias": 0.1 * jax.random.normal(k1, (C,), jnp.float32),
        "qkv_weight": 0.05 * jax.random.normal(k2, (3 * C, C, 1, 1), jnp.float32),
        "out_weight": 0.05 * jax.random.normal(k3, (C, C, 1, 1), jnp.float32),
        "out_bias": 0.02 * jax.random.normal(k4, (C,), jnp.float32),
    }

    x = jax.random.normal(k5, (B, C, H, W), jnp.float32)

    out = self_attention(x, params, n_head=n_head, norm_groups=norm_groups)
    out = jax.block_until_ready(out)

    ref = self_attention_reference(x, params, n_head=n_head,
                                   norm_groups=norm_groups)
    ref = jax.block_until_ready(ref)

    max_err = float(jnp.max(jnp.abs(out - ref)))
    assert out.shape == (B, C, H, W)
    # bf16 MXU operands with f32 accumulation vs an all-f32 reference.
    assert max_err < 2e-2, f"mismatch vs reference: {max_err}"

    print("KERNEL_OK")
</pallas_src>

<mosaic_0001>
module attributes {stable_mosaic.version = 11 : i64} {
  func.func @_sr3_self_attention_kernel(%arg0: i32, %arg1: i32, %arg2: memref<1x1x32xf32, #tpu.memory_space<vmem>>, %arg3: memref<1x1x32xf32, #tpu.memory_space<vmem>>, %arg4: memref<1x64x32xf32, #tpu.memory_space<vmem>>, %arg5: memref<1x64x32xf32, #tpu.memory_space<vmem>>, %arg6: memref<32x32xbf16, #tpu.memory_space<vmem>>, %arg7: memref<32x32xbf16, #tpu.memory_space<vmem>>, %arg8: memref<32x32xbf16, #tpu.memory_space<vmem>>, %arg9: memref<32x32xbf16, #tpu.memory_space<vmem>>, %arg10: memref<1x32xf32, #tpu.memory_space<vmem>>, %arg11: memref<1x64x32xf32, #tpu.memory_space<vmem>>) attributes {dimension_semantics = [#tpu.dimension_semantics<parallel>, #tpu.dimension_semantics<parallel>], iteration_bounds = array<i64: 2, 1>, scalar_prefetch = 0 : i64, scratch_operands = 0 : i64, tpu.core_type = #tpu.core_type<tc>, window_params = [{transform_indices = @transform_0, window_bounds = array<i64: 1, 1, 32>}, {transform_indices = @transform_1, window_bounds = array<i64: 1, 1, 32>}, {transform_indices = @transform_2, window_bounds = array<i64: 1, 64, 32>}, {transform_indices = @transform_3, window_bounds = array<i64: 1, 64, 32>}, {pipeline_mode = #tpu.pipeline_mode<synchronous>, transform_indices = @transform_4, window_bounds = array<i64: 32, 32>}, {pipeline_mode = #tpu.pipeline_mode<synchronous>, transform_indices = @transform_5, window_bounds = array<i64: 32, 32>}, {pipeline_mode = #tpu.pipeline_mode<synchronous>, transform_indices = @transform_6, window_bounds = array<i64: 32, 32>}, {pipeline_mode = #tpu.pipeline_mode<synchronous>, transform_indices = @transform_7, window_bounds = array<i64: 32, 32>}, {pipeline_mode = #tpu.pipeline_mode<synchronous>, transform_indices = @transform_8, window_bounds = array<i64: 1, 32>}, {transform_indices = @transform_9, window_bounds = array<i64: 1, 64, 32>}]} {
    %c0 = arith.constant 0 : index
    %c0_0 = arith.constant 0 : index
    %c0_1 = arith.constant 0 : index
    %0 = vector.load %arg2[%c0, %c0_0, %c0_1] : memref<1x1x32xf32, #tpu.memory_space<vmem>>, vector<1x1x32xf32>
    %1 = vector.shape_cast %0 : vector<1x1x32xf32> to vector<1x32xf32>
    %c0_2 = arith.constant 0 : index
    %c0_3 = arith.constant 0 : index
    %c0_4 = arith.constant 0 : index
    %2 = vector.load %arg3[%c0_2, %c0_3, %c0_4] : memref<1x1x32xf32, #tpu.memory_space<vmem>>, vector<1x1x32xf32>
    %3 = vector.shape_cast %2 : vector<1x1x32xf32> to vector<1x32xf32>
    %c0_5 = arith.constant 0 : index
    %c0_6 = arith.constant 0 : index
    %c0_7 = arith.constant 0 : index
    %4 = vector.load %arg4[%c0_5, %c0_6, %c0_7] : memref<1x64x32xf32, #tpu.memory_space<vmem>>, vector<1x64x32xf32>
    %5 = vector.shape_cast %4 : vector<1x64x32xf32> to vector<64x32xf32>
    %c0_8 = arith.constant 0 : index
    %c0_9 = arith.constant 0 : index
    %c0_10 = arith.constant 0 : index
    %6 = vector.load %arg5[%c0_8, %c0_9, %c0_10] : memref<1x64x32xf32, #tpu.memory_space<vmem>>, vector<1x64x32xf32>
    %7 = vector.shape_cast %6 : vector<1x64x32xf32> to vector<64x32xf32>
    %8 = vector.broadcast %1 : vector<1x32xf32> to vector<64x32xf32>
    %9 = arith.mulf %5, %8 : vector<64x32xf32>
    %10 = vector.broadcast %3 : vector<1x32xf32> to vector<64x32xf32>
    %11 = arith.addf %9, %10 : vector<64x32xf32>
    %12 = arith.truncf %11 : vector<64x32xf32> to vector<64x32xbf16>
    %13 = vector.broadcast %1 : vector<1x32xf32> to vector<64x32xf32>
    %14 = arith.mulf %7, %13 : vector<64x32xf32>
    %15 = vector.broadcast %3 : vector<1x32xf32> to vector<64x32xf32>
    %16 = arith.addf %14, %15 : vector<64x32xf32>
    %17 = arith.truncf %16 : vector<64x32xf32> to vector<64x32xbf16>
    %c0_11 = arith.constant 0 : index
    %c0_12 = arith.constant 0 : index
    %18 = vector.load %arg6[%c0_11, %c0_12] : memref<32x32xbf16, #tpu.memory_space<vmem>>, vector<32x32xbf16>
    %cst = arith.constant dense<0.000000e+00> : vector<64x32xf32>
    %19 = tpu.matmul %17, %18, %cst {dimension_numbers = #tpu.dot_dimension_numbers<[1], [0], [0], [1], [0, 0, 1, 1], [], []>} : vector<64x32xbf16>, vector<32x32xbf16>, vector<64x32xf32> -> vector<64x32xf32>
    %c0_13 = arith.constant 0 : index
    %c0_14 = arith.constant 0 : index
    %20 = vector.load %arg7[%c0_13, %c0_14] : memref<32x32xbf16, #tpu.memory_space<vmem>>, vector<32x32xbf16>
    %cst_15 = arith.constant dense<0.000000e+00> : vector<64x32xf32>
    %21 = tpu.matmul %12, %20, %cst_15 {dimension_numbers = #tpu.dot_dimension_numbers<[1], [0], [0], [1], [0, 0, 1, 1], [], []>} : vector<64x32xbf16>, vector<32x32xbf16>, vector<64x32xf32> -> vector<64x32xf32>
    %c0_16 = arith.constant 0 : index
    %c0_17 = arith.constant 0 : index
    %22 = vector.load %arg8[%c0_16, %c0_17] : memref<32x32xbf16, #tpu.memory_space<vmem>>, vector<32x32xbf16>
    %cst_18 = arith.constant dense<0.000000e+00> : vector<64x32xf32>
    %23 = tpu.matmul %12, %22, %cst_18 {dimension_numbers = #tpu.dot_dimension_numbers<[1], [0], [0], [1], [0, 0, 1, 1], [], []>} : vector<64x32xbf16>, vector<32x32xbf16>, vector<64x32xf32> -> vector<64x32xf32>
    %24 = arith.truncf %19 : vector<64x32xf32> to vector<64x32xbf16>
    %25 = vector.shape_cast %24 : vector<64x32xbf16> to vector<64x2x16xbf16>
    %26 = tpu.transpose %25, [1, 0, 2] : vector<64x2x16xbf16> -> vector<2x64x16xbf16>
    %27 = arith.truncf %21 : vector<64x32xf32> to vector<64x32xbf16>
    %28 = vector.shape_cast %27 : vector<64x32xbf16> to vector<64x2x16xbf16>
    %29 = tpu.transpose %28, [1, 0, 2] : vector<64x2x16xbf16> -> vector<2x64x16xbf16>
    %30 = arith.truncf %23 : vector<64x32xf32> to vector<64x32xbf16>
    %31 = vector.shape_cast %30 : vector<64x32xbf16> to vector<64x2x16xbf16>
    %32 = tpu.transpose %31, [1, 0, 2] : vector<64x2x16xbf16> -> vector<2x64x16xbf16>
    "tpu.trace_start"() <{level = 10 : i32, message = "nqd,nkd->nqk"}> : () -> ()
    %cst_19 = arith.constant dense<0.000000e+00> : vector<2x64x64xf32>
    %33 = tpu.matmul %26, %29, %cst_19 {dimension_numbers = #tpu.dot_dimension_numbers<[2], [2], [1], [1], [0, 0, 0, 1, 1, 1], [0], [0]>} : vector<2x64x16xbf16>, vector<2x64x16xbf16>, vector<2x64x64xf32> -> vector<2x64x64xf32>
    "tpu.trace_stop"() : () -> ()
    %cst_20 = arith.constant dense<0xFF800000> : vector<2x64xf32>
    %34 = vector.multi_reduction <maximumf>, %33, %cst_20 [2] : vector<2x64x64xf32> to vector<2x64xf32>
    %35 = vector.shape_cast %34 : vector<2x64xf32> to vector<2x64x1xf32>
    %36 = vector.broadcast %35 : vector<2x64x1xf32> to vector<2x64x64xf32>
    %37 = arith.subf %33, %36 : vector<2x64x64xf32>
    %38 = math.exp %37 : vector<2x64x64xf32>
    %cst_21 = arith.constant dense<0.000000e+00> : vector<2x64xf32>
    %39 = vector.multi_reduction <add>, %38, %cst_21 [2] : vector<2x64x64xf32> to vector<2x64xf32>
    %40 = vector.shape_cast %39 : vector<2x64xf32> to vector<2x64x1xf32>
    %41 = tpu.reciprocal %40 {approx = true} : vector<2x64x1xf32> -> vector<2x64x1xf32>
    %42 = vector.broadcast %41 : vector<2x64x1xf32> to vector<2x64x64xf32>
    %43 = arith.mulf %38, %42 : vector<2x64x64xf32>
    %44 = arith.truncf %43 : vector<2x64x64xf32> to vector<2x64x64xbf16>
    "tpu.trace_start"() <{level = 10 : i32, message = "nqk,nkd->nqd"}> : () -> ()
    %cst_22 = arith.constant dense<0.000000e+00> : vector<2x64x16xf32>
    %45 = tpu.matmul %44, %32, %cst_22 {dimension_numbers = #tpu.dot_dimension_numbers<[2], [1], [1], [2], [0, 0, 0, 1, 1, 2], [0], [0]>} : vector<2x64x64xbf16>, vector<2x64x16xbf16>, vector<2x64x16xf32> -> vector<2x64x16xf32>
    "tpu.trace_stop"() : () -> ()
    %46 = tpu.transpose %45, [1, 0, 2] : vector<2x64x16xf32> -> vector<64x2x16xf32>
    %47 = vector.shape_cast %46 : vector<64x2x16xf32> to vector<64x32xf32>
    %48 = arith.truncf %47 : vector<64x32xf32> to vector<64x32xbf16>
    %c0_23 = arith.constant 0 : index
    %c0_24 = arith.constant 0 : index
    %49 = vector.load %arg9[%c0_23, %c0_24] : memref<32x32xbf16, #tpu.memory_space<vmem>>, vector<32x32xbf16>
    %cst_25 = arith.constant dense<0.000000e+00> : vector<64x32xf32>
    %50 = tpu.matmul %48, %49, %cst_25 {dimension_numbers = #tpu.dot_dimension_numbers<[1], [0], [0], [1], [0, 0, 1, 1], [], []>} : vector<64x32xbf16>, vector<32x32xbf16>, vector<64x32xf32> -> vector<64x32xf32>
    %c0_26 = arith.constant 0 : index
    %c0_27 = arith.constant 0 : index
    %51 = vector.load %arg10[%c0_26, %c0_27] : memref<1x32xf32, #tpu.memory_space<vmem>>, vector<1x32xf32>
    %52 = vector.broadcast %51 : vector<1x32xf32> to vector<64x32xf32>
    %53 = arith.addf %50, %52 : vector<64x32xf32>
    %54 = arith.addf %53, %7 : vector<64x32xf32>
    %c0_28 = arith.constant 0 : index
    %c0_29 = arith.constant 0 : index
    %c0_30 = arith.constant 0 : index
    %55 = vector.load %arg11[%c0_28, %c0_29, %c0_30] : memref<1x64x32xf32, #tpu.memory_space<vmem>>, vector<1x64x32xf32>
    %56 = vector.shape_cast %55 : vector<1x64x32xf32> to vector<64x32xf32>
    %57 = vector.shape_cast %54 : vector<64x32xf32> to vector<1x64x32xf32>
    tpu.vector_store %arg11[%c0_28, %c0_29, %c0_30], %57 {strides = array<i32>} : memref<1x64x32xf32, #tpu.memory_space<vmem>>, vector<1x64x32xf32>,
    return
  }
  func.func @transform_0(%arg0: i32, %arg1: i32) -> (i32, i32, i32) {
    %c0_i32 = arith.constant 0 : i32
    %c0_i32_0 = arith.constant 0 : i32
    %c0_i32_1 = arith.constant 0 : i32
    return %arg0, %c0_i32, %c0_i32_0 : i32, i32, i32
  }
  func.func @transform_1(%arg0: i32, %arg1: i32) -> (i32, i32, i32) {
    %c0_i32 = arith.constant 0 : i32
    %c0_i32_0 = arith.constant 0 : i32
    %c0_i32_1 = arith.constant 0 : i32
    return %arg0, %c0_i32, %c0_i32_0 : i32, i32, i32
  }
  func.func @transform_2(%arg0: i32, %arg1: i32) -> (i32, i32, i32) {
    %c0_i32 = arith.constant 0 : i32
    %c0_i32_0 = arith.constant 0 : i32
    %c0_i32_1 = arith.constant 0 : i32
    return %arg0, %c0_i32, %c0_i32_0 : i32, i32, i32
  }
  func.func @transform_3(%arg0: i32, %arg1: i32) -> (i32, i32, i32) {
    %c0_i32 = arith.constant 0 : i32
    %c0_i32_0 = arith.constant 0 : i32
    return %arg0, %arg1, %c0_i32 : i32, i32, i32
  }
  func.func @transform_4(%arg0: i32, %arg1: i32) -> (i32, i32) {
    %c0_i32 = arith.constant 0 : i32
    %c0_i32_0 = arith.constant 0 : i32
    %c0_i32_1 = arith.constant 0 : i32
    return %c0_i32, %c0_i32_0 : i32, i32
  }
  func.func @transform_5(%arg0: i32, %arg1: i32) -> (i32, i32) {
    %c0_i32 = arith.constant 0 : i32
    %c0_i32_0 = arith.constant 0 : i32
    %c0_i32_1 = arith.constant 0 : i32
    return %c0_i32, %c0_i32_0 : i32, i32
  }
  func.func @transform_6(%arg0: i32, %arg1: i32) -> (i32, i32) {
    %c0_i32 = arith.constant 0 : i32
    %c0_i32_0 = arith.constant 0 : i32
    %c0_i32_1 = arith.constant 0 : i32
    return %c0_i32, %c0_i32_0 : i32, i32
  }
  func.func @transform_7(%arg0: i32, %arg1: i32) -> (i32, i32) {
    %c0_i32 = arith.constant 0 : i32
    %c0_i32_0 = arith.constant 0 : i32
    %c0_i32_1 = arith.constant 0 : i32
    return %c0_i32, %c0_i32_0 : i32, i32
  }
  func.func @transform_8(%arg0: i32, %arg1: i32) -> (i32, i32) {
    %c0_i32 = arith.constant 0 : i32
    %c0_i32_0 = arith.constant 0 : i32
    %c0_i32_1 = arith.constant 0 : i32
    return %c0_i32, %c0_i32_0 : i32, i32
  }
  func.func @transform_9(%arg0: i32, %arg1: i32) -> (i32, i32, i32) {
    %c0_i32 = arith.constant 0 : i32
    %c0_i32_0 = arith.constant 0 : i32
    return %arg0, %arg1, %c0_i32 : i32, i32, i32
  }
}

</mosaic_0001>

<llo_original>
// kernel: tpu_custom_call.1
$region0: #{tpu_custom_call.1}
  #allocation0 [shape = 'u32[]', space=smem, size = 0x4, offset = 0x4, fixed_abs, tag = 'smem constant byte address 0x4 - core index']
  #allocation1 [shape = 'u32[72,128]{1,0:T(1,128)}', space=vmem, size = 0x9000, scoped, tag = 'internal scratch']
  %s0 = inlined_call_operand.vmem [shape: f32[2,1,32], index: 0, kind: input, shape index: {}]
  %s1 = inlined_call_operand.vmem [shape: f32[2,1,32], index: 1, kind: input, shape index: {}]
  %s2 = inlined_call_operand.vmem [shape: f32[2,64,32], index: 2, kind: input, shape index: {}]
  %s3 = inlined_call_operand.vmem [shape: f32[2,64,32], index: 3, kind: input, shape index: {}]
  %s4 = inlined_call_operand.vmem [shape: bf16[32,32], index: 4, kind: input, shape index: {}]
  %s5 = inlined_call_operand.vmem [shape: bf16[32,32], index: 5, kind: input, shape index: {}]
  %s6 = inlined_call_operand.vmem [shape: bf16[32,32], index: 6, kind: input, shape index: {}]
  %s7 = inlined_call_operand.vmem [shape: bf16[32,32], index: 7, kind: input, shape index: {}]
  %s8 = inlined_call_operand.vmem [shape: f32[1,32], index: 8, kind: input, shape index: {}]
  %s9 = inlined_call_operand.vmem [shape: f32[2,64,32], index: 9, kind: output, shape index: {}]
  %s10 = sld [smem:[#allocation0]]
  $region69: #{tpu_custom_call.1} parent=0
    _
  %s12 = ssub.s32 1, %s10
  %s13 = scalar_select 0, %s12, %s10
  loop: start=0, step=1, limit=4
  $region2: #{tpu_custom_call.1} parent=0 // loop_pre_header
    _
  $region3: #{tpu_custom_call.1} parent=0 // loop_header
    %s15 = sphi 0, %s19
    %p16 = scmp.ge.s32.totalorder %s15, 4
    %s22 = sphi 0, %s34
    %s23 = sphi 0, %s30
    %s24 = sphi 0, %s22
    %s25 = sphi 0, %s23
    %s26 = sphi 0, %s24
    %s27 = sphi 0, %s25
    %s37 = sphi 0, %s39
    %s40 = sphi 0, %s37
    %s41 = sphi 0, %s40
    %s57 = sphi 0, %s41
    %s63 = sphi 0, %s65
    %s66 = sphi 0, %s63
    %s67 = sphi 0, %s66
    %s83 = sphi 0, %s67
    %s89 = sphi 0, %s91
    %s92 = sphi 0, %s89
    %s93 = sphi 0, %s92
    %s109 = sphi 0, %s93
    %s117 = sphi 0, %s119
    %s120 = sphi 0, %s117
    %s121 = sphi 0, %s120
    %s137 = sphi 0, %s121
    %s141 = sphi 0, %s141
    %s143 = sphi 0, %s141
    %s144 = sphi 0, %s143
    %s158 = sphi 0, %s144
    %s162 = sphi 0, %s162
    %s164 = sphi 0, %s162
    %s165 = sphi 0, %s164
    %s179 = sphi 0, %s165
    %s183 = sphi 0, %s183
    %s185 = sphi 0, %s183
    %s186 = sphi 0, %s185
    %s200 = sphi 0, %s186
    %s204 = sphi 0, %s204
    %s206 = sphi 0, %s204
    %s207 = sphi 0, %s206
    %s221 = sphi 0, %s207
    %s225 = sphi 0, %s225
    %s227 = sphi 0, %s225
    %s228 = sphi 0, %s227
    %s242 = sphi 0, %s228
    %s250 = sphi 0, %s252
    %s253 = sphi 0, %s250
    %s254 = sphi 0, %s253
    %s270 = sphi 0, %s254
  $region4: #{tpu_custom_call.1} parent=0 // loop_header_branch
    %18 = sbr.rel (%p16) target = $region8
  $region5: #{tpu_custom_call.1} parent=0 // loop_body
    %s20 = ssub.s32 %s15, 1
    %s21 = ssub.s32 %s15, 2
    %s28 = sadd.s32 1, %s23
    %p29 = scmp.ge.s32.totalorder %s28, 1
    %s30 = scalar_select %p29, 0, %s28
    %s31 = sadd.s32 1, %s22
    %s32 = scalar_select %p29, %s31, %s22
    %p33 = scmp.ge.s32.totalorder %s32, 2
    %s34 = scalar_select %p33, 0, %s32
    %s35 = ssub.s32 %s22, %s34
    %p36 = scmp.eq.s32.totalorder %s35, 0
    %s38 = sadd.s32 %s37, 1
    %s39 = scalar_select %p36, %s37, %s38
    %p42 = pneg %p36
    %p43 = scmp.eq.s32.totalorder %s15, 1
    %p44 = por %p42, %p43
    %p45 = scmp.ne.s32.totalorder %s37, %s40
    %p46 = scmp.eq.s32.totalorder %s15, 0
    %p47 = por %p45, %p46
    %p48 = scmp.ne.s32.totalorder %s37, %s40
    %p49 = scmp.eq.s32.totalorder %s20, 1
    %p50 = por %p48, %p49
    %p51 = scmp.ne.s32.totalorder %s40, %s41
    %p52 = scmp.eq.s32.totalorder %s20, 0
    %p53 = por %p51, %p52
    %p54 = scmp.ne.s32.totalorder %s40, %s41
    %p55 = scmp.eq.s32.totalorder %s21, 1
    %p56 = por %p54, %p55
    %p58 = scmp.ne.s32.totalorder %s41, %s57
    %p59 = scmp.eq.s32.totalorder %s21, 0
    %p60 = por %p58, %p59
    %s61 = ssub.s32 %s22, %s34
    %p62 = scmp.eq.s32.totalorder %s61, 0
    %s64 = sadd.s32 %s63, 1
    %s65 = scalar_select %p62, %s63, %s64
    %p68 = pneg %p62
    %p69 = scmp.eq.s32.totalorder %s15, 1
    %p70 = por %p68, %p69
    %p71 = scmp.ne.s32.totalorder %s63, %s66
    %p72 = scmp.eq.s32.totalorder %s15, 0
    %p73 = por %p71, %p72
    %p74 = scmp.ne.s32.totalorder %s63, %s66
    %p75 = scmp.eq.s32.totalorder %s20, 1
    %p76 = por %p74, %p75
    %p77 = scmp.ne.s32.totalorder %s66, %s67
    %p78 = scmp.eq.s32.totalorder %s20, 0
    %p79 = por %p77, %p78
    %p80 = scmp.ne.s32.totalorder %s66, %s67
    %p81 = scmp.eq.s32.totalorder %s21, 1
    %p82 = por %p80, %p81
    %p84 = scmp.ne.s32.totalorder %s67, %s83
    %p85 = scmp.eq.s32.totalorder %s21, 0
    %p86 = por %p84, %p85
    %s87 = ssub.s32 %s22, %s34
    %p88 = scmp.eq.s32.totalorder %s87, 0
    %s90 = sadd.s32 %s89, 1
    %s91 = scalar_select %p88, %s89, %s90
    %p94 = pneg %p88
    %p95 = scmp.eq.s32.totalorder %s15, 1
    %p96 = por %p94, %p95
    %p97 = scmp.ne.s32.totalorder %s89, %s92
    %p98 = scmp.eq.s32.totalorder %s15, 0
    %p99 = por %p97, %p98
    %p100 = scmp.ne.s32.totalorder %s89, %s92
    %p101 = scmp.eq.s32.totalorder %s20, 1
    %p102 = por %p100, %p101
    %p103 = scmp.ne.s32.totalorder %s92, %s93
    %p104 = scmp.eq.s32.totalorder %s20, 0
    %p105 = por %p103, %p104
    %p106 = scmp.ne.s32.totalorder %s92, %s93
    %p107 = scmp.eq.s32.totalorder %s21, 1
    %p108 = por %p106, %p107
    %p110 = scmp.ne.s32.totalorder %s93, %s109
    %p111 = scmp.eq.s32.totalorder %s21, 0
    %p112 = por %p110, %p111
    %s113 = ssub.s32 %s22, %s34
    %s114 = ssub.s32 %s23, %s30
    %s115 = sor.u32 %s113, %s114
    %p116 = scmp.eq.s32.totalorder %s115, 0
    %s118 = sadd.s32 %s117, 1
    %s119 = scalar_select %p116, %s117, %s118
    %p122 = pneg %p116
    %p123 = scmp.eq.s32.totalorder %s15, 1
    %p124 = por %p122, %p123
    %p125 = scmp.ne.s32.totalorder %s117, %s120
    %p126 = scmp.eq.s32.totalorder %s15, 0
    %p127 = por %p125, %p126
    %p128 = scmp.ne.s32.totalorder %s117, %s120
    %p129 = scmp.eq.s32.totalorder %s20, 1
    %p130 = por %p128, %p129
    %p131 = scmp.ne.s32.totalorder %s120, %s121
    %p132 = scmp.eq.s32.totalorder %s20, 0
    %p133 = por %p131, %p132
    %p134 = scmp.ne.s32.totalorder %s120, %s121
    %p135 = scmp.eq.s32.totalorder %s21, 1
    %p136 = por %p134, %p135
    %p138 = scmp.ne.s32.totalorder %s121, %s137
    %p139 = scmp.eq.s32.totalorder %s21, 0
    %p140 = por %p138, %p139
    %s142 = sadd.s32 %s141, 1
    %p145 = scmp.eq.s32.totalorder %s15, 1
    %p146 = scmp.ne.s32.totalorder %s141, %s143
    %p147 = scmp.eq.s32.totalorder %s15, 0
    %p148 = por %p146, %p147
    %p149 = scmp.ne.s32.totalorder %s141, %s143
    %p150 = scmp.eq.s32.totalorder %s20, 1
    %p151 = por %p149, %p150
    %p152 = scmp.ne.s32.totalorder %s143, %s144
    %p153 = scmp.eq.s32.totalorder %s20, 0
    %p154 = por %p152, %p153
    %p155 = scmp.ne.s32.totalorder %s143, %s144
    %p156 = scmp.eq.s32.totalorder %s21, 1
    %p157 = por %p155, %p156
    %p159 = scmp.ne.s32.totalorder %s144, %s158
    %p160 = scmp.eq.s32.totalorder %s21, 0
    %p161 = por %p159, %p160
    %s163 = sadd.s32 %s162, 1
    %p166 = scmp.eq.s32.totalorder %s15, 1
    %p167 = scmp.ne.s32.totalorder %s162, %s164
    %p168 = scmp.eq.s32.totalorder %s15, 0
    %p169 = por %p167, %p168
    %p170 = scmp.ne.s32.totalorder %s162, %s164
    %p171 = scmp.eq.s32.totalorder %s20, 1
    %p172 = por %p170, %p171
    %p173 = scmp.ne.s32.totalorder %s164, %s165
    %p174 = scmp.eq.s32.totalorder %s20, 0
    %p175 = por %p173, %p174
    %p176 = scmp.ne.s32.totalorder %s164, %s165
    %p177 = scmp.eq.s32.totalorder %s21, 1
    %p178 = por %p176, %p177
    %p180 = scmp.ne.s32.totalorder %s165, %s179
    %p181 = scmp.eq.s32.totalorder %s21, 0
    %p182 = por %p180, %p181
    %s184 = sadd.s32 %s183, 1
    %p187 = scmp.eq.s32.totalorder %s15, 1
    %p188 = scmp.ne.s32.totalorder %s183, %s185
    %p189 = scmp.eq.s32.totalorder %s15, 0
    %p190 = por %p188, %p189
    %p191 = scmp.ne.s32.totalorder %s183, %s185
    %p192 = scmp.eq.s32.totalorder %s20, 1
    %p193 = por %p191, %p192
    %p194 = scmp.ne.s32.totalorder %s185, %s186
    %p195 = scmp.eq.s32.totalorder %s20, 0
    %p196 = por %p194, %p195
    %p197 = scmp.ne.s32.totalorder %s185, %s186
    %p198 = scmp.eq.s32.totalorder %s21, 1
    %p199 = por %p197, %p198
    %p201 = scmp.ne.s32.totalorder %s186, %s200
    %p202 = scmp.eq.s32.totalorder %s21, 0
    %p203 = por %p201, %p202
    %s205 = sadd.s32 %s204, 1
    %p208 = scmp.eq.s32.totalorder %s15, 1
    %p209 = scmp.ne.s32.totalorder %s204, %s206
    %p210 = scmp.eq.s32.totalorder %s15, 0
    %p211 = por %p209, %p210
    %p212 = scmp.ne.s32.totalorder %s204, %s206
    %p213 = scmp.eq.s32.totalorder %s20, 1
    %p214 = por %p212, %p213
    %p215 = scmp.ne.s32.totalorder %s206, %s207
    %p216 = scmp.eq.s32.totalorder %s20, 0
    %p217 = por %p215, %p216
    %p218 = scmp.ne.s32.totalorder %s206, %s207
    %p219 = scmp.eq.s32.totalorder %s21, 1
    %p220 = por %p218, %p219
    %p222 = scmp.ne.s32.totalorder %s207, %s221
    %p223 = scmp.eq.s32.totalorder %s21, 0
    %p224 = por %p222, %p223
    %s226 = sadd.s32 %s225, 1
    %p229 = scmp.eq.s32.totalorder %s15, 1
    %p230 = scmp.ne.s32.totalorder %s225, %s227
    %p231 = scmp.eq.s32.totalorder %s15, 0
    %p232 = por %p230, %p231
    %p233 = scmp.ne.s32.totalorder %s225, %s227
    %p234 = scmp.eq.s32.totalorder %s20, 1
    %p235 = por %p233, %p234
    %p236 = scmp.ne.s32.totalorder %s227, %s228
    %p237 = scmp.eq.s32.totalorder %s20, 0
    %p238 = por %p236, %p237
    %p239 = scmp.ne.s32.totalorder %s227, %s228
    %p240 = scmp.eq.s32.totalorder %s21, 1
    %p241 = por %p239, %p240
    %p243 = scmp.ne.s32.totalorder %s228, %s242
    %p244 = scmp.eq.s32.totalorder %s21, 0
    %p245 = por %p243, %p244
    %s246 = ssub.s32 %s22, %s34
    %s247 = ssub.s32 %s23, %s30
    %s248 = sor.u32 %s246, %s247
    %p249 = scmp.eq.s32.totalorder %s248, 0
    %s251 = sadd.s32 %s250, 1
    %s252 = scalar_select %p249, %s250, %s251
    %p255 = pneg %p249
    %p256 = scmp.eq.s32.totalorder %s15, 1
    %p257 = por %p255, %p256
    %p258 = scmp.ne.s32.totalorder %s250, %s253
    %p259 = scmp.eq.s32.totalorder %s15, 0
    %p260 = por %p258, %p259
    %p261 = scmp.ne.s32.totalorder %s250, %s253
    %p262 = scmp.eq.s32.totalorder %s20, 1
    %p263 = por %p261, %p262
    %p264 = scmp.ne.s32.totalorder %s253, %s254
    %p265 = scmp.eq.s32.totalorder %s20, 0
    %p266 = por %p264, %p265
    %p267 = scmp.ne.s32.totalorder %s253, %s254
    %p268 = scmp.eq.s32.totalorder %s21, 1
    %p269 = por %p267, %p268
    %p271 = scmp.ne.s32.totalorder %s254, %s270
    %p272 = scmp.eq.s32.totalorder %s21, 0
    %p273 = por %p271, %p272
    %p274 = scmp.le.s32.totalorder 1, %s15
    %p275 = scmp.lt.s32.totalorder %s15, 3
    %p276 = pnand %p274, %p275
    %p277 = pneg %p276
    // Predicated region
    $region9: #{tpu_custom_call.1} parent=5 // pred_check
      _
    $region10: #{tpu_custom_call.1} parent=5 // pred_check_branch
      %279 = sbr.rel (%p276) target = $region12
    $region11: #{tpu_custom_call.1} parent=5 // pred_region
      %s280 = ssub.s32 %s15, 1
      // Predicated region
      $region13: #{tpu_custom_call.1} parent=11 // pred_check
        %p281 = pneg %p154
      $region14: #{tpu_custom_call.1} parent=11 // pred_check_branch
        %283 = sbr.rel (%p281) target = $region16
      $region15: #{tpu_custom_call.1} parent=11 // pred_region
        _
      $region16: #{tpu_custom_call.1} parent=11 // pred_fallthru
        _
      // Predicated region
      $region17: #{tpu_custom_call.1} parent=11 // pred_check
        %p284 = pneg %p175
      $region18: #{tpu_custom_call.1} parent=11 // pred_check_branch
        %286 = sbr.rel (%p284) target = $region20
      $region19: #{tpu_custom_call.1} parent=11 // pred_region
        _
      $region20: #{tpu_custom_call.1} parent=11 // pred_fallthru
        _
      // Predicated region
      $region21: #{tpu_custom_call.1} parent=11 // pred_check
        %p287 = pneg %p196
      $region22: #{tpu_custom_call.1} parent=11 // pred_check_branch
        %289 = sbr.rel (%p287) target = $region24
      $region23: #{tpu_custom_call.1} parent=11 // pred_region
        _
      $region24: #{tpu_custom_call.1} parent=11 // pred_fallthru
        _
      // Predicated region
      $region25: #{tpu_custom_call.1} parent=11 // pred_check
        %p290 = pneg %p217
      $region26: #{tpu_custom_call.1} parent=11 // pred_check_branch
        %292 = sbr.rel (%p290) target = $region28
      $region27: #{tpu_custom_call.1} parent=11 // pred_region
        _
      $region28: #{tpu_custom_call.1} parent=11 // pred_fallthru
        _
      // Predicated region
      $region29: #{tpu_custom_call.1} parent=11 // pred_check
        %p293 = pneg %p238
      $region30: #{tpu_custom_call.1} parent=11 // pred_check_branch
        %295 = sbr.rel (%p293) target = $region32
      $region31: #{tpu_custom_call.1} parent=11 // pred_region
        _
      $region32: #{tpu_custom_call.1} parent=11 // pred_fallthru
        _
    $region12: #{tpu_custom_call.1} parent=5 // pred_fallthru
      _
    %p296 = scmp.lt.s32.totalorder %s15, 2
    // Predicated region
    $region33: #{tpu_custom_call.1} parent=5 // pred_check
      %p297 = pneg %p296
    $region34: #{tpu_custom_call.1} parent=5 // pred_check_branch
      %299 = sbr.rel (%p297) target = $region36
    $region35: #{tpu_custom_call.1} parent=5 // pred_region
      // Predicated region
      $region37: #{tpu_custom_call.1} parent=35 // pred_check
        %p300 = pneg %p47
      $region38: #{tpu_custom_call.1} parent=35 // pred_check_branch
        %302 = sbr.rel (%p300) target = $region40
      $region39: #{tpu_custom_call.1} parent=35 // pred_region
        %p303 = scmp.lt.s32.totalorder %s22, 1
        %s304 = scalar_select %p303, %s22, 1
        %s305 = scalar_lea.vmem %s0, %s304
      $region40: #{tpu_custom_call.1} parent=35 // pred_fallthru
        _
      // Predicated region
      $region41: #{tpu_custom_call.1} parent=35 // pred_check
        %p306 = pneg %p73
      $region42: #{tpu_custom_call.1} parent=35 // pred_check_branch
        %308 = sbr.rel (%p306) target = $region44
      $region43: #{tpu_custom_call.1} parent=35 // pred_region
        %p309 = scmp.lt.s32.totalorder %s22, 1
        %s310 = scalar_select %p309, %s22, 1
        %s311 = scalar_lea.vmem %s1, %s310
      $region44: #{tpu_custom_call.1} parent=35 // pred_fallthru
        _
      // Predicated region
      $region45: #{tpu_custom_call.1} parent=35 // pred_check
        %p312 = pneg %p99
      $region46: #{tpu_custom_call.1} parent=35 // pred_check_branch
        %314 = sbr.rel (%p312) target = $region48
      $region47: #{tpu_custom_call.1} parent=35 // pred_region
        %p315 = scmp.lt.s32.totalorder %s22, 1
        %s316 = scalar_select %p315, %s22, 1
        %s317 = smul.addr %s316, 8
        %s318 = smul.addr %s317, 8
        %s319 = scalar_lea.vmem %s2, %s318
      $region48: #{tpu_custom_call.1} parent=35 // pred_fallthru
        _
      // Predicated region
      $region49: #{tpu_custom_call.1} parent=35 // pred_check
        %p320 = pneg %p127
      $region50: #{tpu_custom_call.1} parent=35 // pred_check_branch
        %322 = sbr.rel (%p320) target = $region52
      $region51: #{tpu_custom_call.1} parent=35 // pred_region
        %s323 = smul.u32 8, %s23
        %p324 = scmp.lt.s32.totalorder %s22, 1
        %s325 = scalar_select %p324, %s22, 1
        %p326 = scmp.lt.s32.totalorder %s323, 7
        %s327 = scalar_select %p326, %s323, 7
        %s328 = smul.addr %s325, 8
        %s329 = sadd.s32 %s327, %s328
        %s330 = smul.addr %s329, 8
        %s331 = scalar_lea.vmem %s3, %s330
        %s332 = smul.u32 8, %s23
      $region52: #{tpu_custom_call.1} parent=35 // pred_fallthru
        _
    $region36: #{tpu_custom_call.1} parent=5 // pred_fallthru
      _
    %p333 = scmp.le.s32.totalorder 1, %s15
    %p334 = scmp.lt.s32.totalorder %s15, 3
    %p335 = pnand %p333, %p334
    %p336 = pneg %p335
    // Predicated region
    $region53: #{tpu_custom_call.1} parent=5 // pred_check
      _
    $region54: #{tpu_custom_call.1} parent=5 // pred_check_branch
      %338 = sbr.rel (%p335) target = $region56
    $region55: #{tpu_custom_call.1} parent=5 // pred_region
      %s339 = ssub.s32 %s15, 1
      %p340 = scmp.lt.s32.totalorder %s24, 1
      %s341 = scalar_select %p340, %s24, 1
      %s342 = scalar_lea.vmem %s0, %s341
      %p343 = pneg %p53
      %p344 = pneg %p50
      %p345 = scmp.lt.s32.totalorder %s24, 1
      %s346 = scalar_select %p345, %s24, 1
      %s347 = scalar_lea.vmem %s1, %s346
      %p348 = pneg %p79
      %p349 = pneg %p76
      %p350 = scmp.lt.s32.totalorder %s24, 1
      %s351 = scalar_select %p350, %s24, 1
      %s352 = smul.addr %s351, 8
      %s353 = smul.addr %s352, 8
      %s354 = scalar_lea.vmem %s2, %s353
      %p355 = pneg %p105
      %p356 = pneg %p102
      %s357 = smul.u32 8, %s25
      %p358 = scmp.lt.s32.totalorder %s24, 1
      %s359 = scalar_select %p358, %s24, 1
      %p360 = scmp.lt.s32.totalorder %s357, 7
      %s361 = scalar_select %p360, %s357, 7
      %s362 = smul.addr %s359, 8
      %s363 = sadd.s32 %s361, %s362
      %s364 = smul.addr %s363, 8
      %s365 = scalar_lea.vmem %s3, %s364
      %p366 = pneg %p133
      %p367 = pneg %p130
      %p368 = pneg %p154
      %p369 = pneg %p151
      %p370 = pneg %p175
      %p371 = pneg %p172
      %p372 = pneg %p196
      %p373 = pneg %p193
      %p374 = pneg %p217
      %p375 = pneg %p214
      %p376 = pneg %p238
      %p377 = pneg %p235
      %p378 = pneg %p266
      %p379 = pneg %p263
      %s380 = smul.u32 8, %s25
      %p381 = scmp.lt.s32.totalorder %s24, 1
      %s382 = scalar_select %p381, %s24, 1
      %p383 = scmp.lt.s32.totalorder %s380, 7
      %s384 = scalar_select %p383, %s380, 7
      %s385 = smul.addr %s382, 8
      %s386 = sadd.s32 %s384, %s385
      %s387 = smul.addr %s386, 8
      %s388 = scalar_lea.vmem %s9, %s387
      %p389 = scmp.lt.s32.totalorder %s24, 1
      %s390 = scalar_select %p389, %s24, 1
      %s391 = scalar_lea.vmem %s0, %s390
      %p392 = scmp.lt.s32.totalorder %s24, 1
      %s393 = scalar_select %p392, %s24, 1
      %s394 = scalar_lea.vmem %s1, %s393
      %p395 = scmp.lt.s32.totalorder %s24, 1
      %s396 = scalar_select %p395, %s24, 1
      %s397 = smul.addr %s396, 8
      %s398 = smul.addr %s397, 8
      %s399 = scalar_lea.vmem %s2, %s398
      %s400 = smul.u32 8, %s25
      %p401 = scmp.lt.s32.totalorder %s24, 1
      %s402 = scalar_select %p401, %s24, 1
      %p403 = scmp.lt.s32.totalorder %s400, 7
      %s404 = scalar_select %p403, %s400, 7
      %s405 = smul.addr %s402, 8
      %s406 = sadd.s32 %s404, %s405
      %s407 = smul.addr %s406, 8
      %s408 = scalar_lea.vmem %s3, %s407
      %s409 = smul.u32 8, %s25
      %s410 = smul.u32 8, %s25
      %p411 = scmp.lt.s32.totalorder %s24, 1
      %s412 = scalar_select %p411, %s24, 1
      %p413 = scmp.lt.s32.totalorder %s410, 7
      %s414 = scalar_select %p413, %s410, 7
      %s415 = smul.addr %s412, 8
      %s416 = sadd.s32 %s414, %s415
      %s417 = smul.addr %s416, 8
      %s418 = scalar_lea.vmem %s9, %s417
      %s419 = smul.u32 8, %s25
      %v421 = vld [vmem:[%s391] sm:$0x1]
      %v422 = vld [vmem:[%s394] sm:$0x1]
      %v423 = vld [vmem:[%s399] sm:$0xff]
      %v424 = vld [vmem:[%s399 + $0x8] sm:$0xff]
      %v425 = vld [vmem:[%s399 + $0x10] sm:$0xff]
      %v426 = vld [vmem:[%s399 + $0x18] sm:$0xff]
      %v427 = vld [vmem:[%s399 + $0x20] sm:$0xff]
      %v428 = vld [vmem:[%s399 + $0x28] sm:$0xff]
      %v429 = vld [vmem:[%s399 + $0x30] sm:$0xff]
      %v430 = vld [vmem:[%s399 + $0x38] sm:$0xff]
      %v431 = vld [vmem:[%s408] sm:$0xff]
      %v432 = vld [vmem:[%s408 + $0x8] sm:$0xff]
      %v433 = vld [vmem:[%s408 + $0x10] sm:$0xff]
      %v434 = vld [vmem:[%s408 + $0x18] sm:$0xff]
      %v435 = vld [vmem:[%s408 + $0x20] sm:$0xff]
      %v436 = vld [vmem:[%s408 + $0x28] sm:$0xff]
      %v437 = vld [vmem:[%s408 + $0x30] sm:$0xff]
      %v438 = vld [vmem:[%s408 + $0x38] sm:$0xff]
      %v440 = vperm.slane %v421, 0
      %v442 = vmul.f32 %v423, %v440
      %v443 = vmul.f32 %v424, %v440
      %v444 = vmul.f32 %v425, %v440
      %v445 = vmul.f32 %v426, %v440
      %v446 = vmul.f32 %v427, %v440
      %v447 = vmul.f32 %v428, %v440
      %v448 = vmul.f32 %v429, %v440
      %v449 = vmul.f32 %v430, %v440
      %v451 = vperm.slane %v422, 0
      %v453 = vadd.f32 %v442, %v451
      %v454 = vadd.f32 %v443, %v451
      %v455 = vadd.f32 %v444, %v451
      %v456 = vadd.f32 %v445, %v451
      %v457 = vadd.f32 %v446, %v451
      %v458 = vadd.f32 %v447, %v451
      %v459 = vadd.f32 %v448, %v451
      %v460 = vadd.f32 %v449, %v451
      %v461 = vpack.c.bf16 %v454, %v453
      %v462 = vpack.c.bf16 %v456, %v455
      %v463 = vpack.c.bf16 %v458, %v457
      %v464 = vpack.c.bf16 %v460, %v459
      %v465 = vmul.f32 %v431, %v440
      %v466 = vmul.f32 %v432, %v440
      %v467 = vmul.f32 %v433, %v440
      %v468 = vmul.f32 %v434, %v440
      %v469 = vmul.f32 %v435, %v440
      %v470 = vmul.f32 %v436, %v440
      %v471 = vmul.f32 %v437, %v440
      %v472 = vmul.f32 %v438, %v440
      %v473 = vadd.f32 %v465, %v451
      %v474 = vadd.f32 %v466, %v451
      %v475 = vadd.f32 %v467, %v451
      %v476 = vadd.f32 %v468, %v451
      %v477 = vadd.f32 %v469, %v451
      %v478 = vadd.f32 %v470, %v451
      %v479 = vadd.f32 %v471, %v451
      %v480 = vadd.f32 %v472, %v451
      %v481 = vpack.c.bf16 %v474, %v473
      %v482 = vpack.c.bf16 %v476, %v475
      %v483 = vpack.c.bf16 %v478, %v477
      %v484 = vpack.c.bf16 %v480, %v479
      %v485 = vld [vmem:[%s4] sm:$0xf]
      %v486 = vld [vmem:[%s4 + $0x4] sm:$0xf]
      %v487 = vld [vmem:[%s4 + $0x8] sm:$0xf]
      %v488 = vld [vmem:[%s4 + $0xc] sm:$0xf]
      %v493 = vunpack.c.l.b16 %v485
      %v494 = vunpack.c.l.b16 %v486
      %v495 = vunpack.c.l.b16 %v487
      %v496 = vunpack.c.l.b16 %v488
      %v497 = vpack.c.b16 %v494, %v493
      %v498 = vpack.c.b16 %v496, %v495
      %vm501 = vcmask 261120
      %v503 = vsel %vm501, %v481, 0
      %v506 = vsel %vm501, %v482, 0
      %v509 = vsel %vm501, %v483, 0
      %v512 = vsel %vm501, %v484, 0
      %514 = vmatpush.bf16.msra.mxu0 0
      %515 = vmatpush.bf16.msra.mxu0 0
      %516 = vmatpush.bf16.msra.mxu0 0
      %517 = vmatpush.bf16.msra.mxu0 0
      %518 = vmatpush.bf16.msra.mxu0 0
      %519 = vmatpush.bf16.msra.mxu0 0
      %520 = vmatpush.bf16.msra.mxu0 %v498
      %521 = vmatpush.bf16.msra.mxu0 %v497
      %522 = vmatmul.bf16.gmra.mxu0 %v503
      %v523 = vpop.f32.mrf.mxu0
      %v524 = vadd.f32 0.0, %v523
      %v525 = vpop.f32.mrf.mxu0
      %v526 = vadd.f32 0.0, %v525
      %527 = vmatmul.bf16.gmra.mxu0 %v506
      %v528 = vpop.f32.mrf.mxu0
      %v529 = vadd.f32 0.0, %v528
      %v530 = vpop.f32.mrf.mxu0
      %v531 = vadd.f32 0.0, %v530
      %532 = vmatmul.bf16.gmra.mxu0 %v509
      %v533 = vpop.f32.mrf.mxu0
      %v534 = vadd.f32 0.0, %v533
      %v535 = vpop.f32.mrf.mxu0
      %v536 = vadd.f32 0.0, %v535
      %537 = vmatmul.bf16.gmra.mxu0 %v512
      %v538 = vpop.f32.mrf.mxu0
      %v539 = vadd.f32 0.0, %v538
      %v540 = vpop.f32.mrf.mxu0
      %v541 = vadd.f32 0.0, %v540
      %542 = vdwg.mxu0
      %v543 = vld [vmem:[%s5] sm:$0xf]
      %v544 = vld [vmem:[%s5 + $0x4] sm:$0xf]
      %v545 = vld [vmem:[%s5 + $0x8] sm:$0xf]
      %v546 = vld [vmem:[%s5 + $0xc] sm:$0xf]
      %v551 = vunpack.c.l.b16 %v543
      %v552 = vunpack.c.l.b16 %v544
      %v553 = vunpack.c.l.b16 %v545
      %v554 = vunpack.c.l.b16 %v546
      %v555 = vpack.c.b16 %v552, %v551
      %v556 = vpack.c.b16 %v554, %v553
      %v560 = vsel %vm501, %v461, 0
      %v563 = vsel %vm501, %v462, 0
      %v566 = vsel %vm501, %v463, 0
      %v569 = vsel %vm501, %v464, 0
      %571 = vmatpush.bf16.msra.mxu0 0
      %572 = vmatpush.bf16.msra.mxu0 0
      %573 = vmatpush.bf16.msra.mxu0 0
      %574 = vmatpush.bf16.msra.mxu0 0
      %575 = vmatpush.bf16.msra.mxu0 0
      %576 = vmatpush.bf16.msra.mxu0 0
      %577 = vmatpush.bf16.msra.mxu0 %v556
      %578 = vmatpush.bf16.msra.mxu0 %v555
      %579 = vmatmul.bf16.gmra.mxu0 %v560
      %v580 = vpop.f32.mrf.mxu0
      %v581 = vadd.f32 0.0, %v580
      %v582 = vpop.f32.mrf.mxu0
      %v583 = vadd.f32 0.0, %v582
      %584 = vmatmul.bf16.gmra.mxu0 %v563
      %v585 = vpop.f32.mrf.mxu0
      %v586 = vadd.f32 0.0, %v585
      %v587 = vpop.f32.mrf.mxu0
      %v588 = vadd.f32 0.0, %v587
      %589 = vmatmul.bf16.gmra.mxu0 %v566
      %v590 = vpop.f32.mrf.mxu0
      %v591 = vadd.f32 0.0, %v590
      %v592 = vpop.f32.mrf.mxu0
      %v593 = vadd.f32 0.0, %v592
      %594 = vmatmul.bf16.gmra.mxu0 %v569
      %v595 = vpop.f32.mrf.mxu0
      %v596 = vadd.f32 0.0, %v595
      %v597 = vpop.f32.mrf.mxu0
      %v598 = vadd.f32 0.0, %v597
      %599 = vdwg.mxu0
      %v600 = vld [vmem:[%s6] sm:$0xf]
      %v601 = vld [vmem:[%s6 + $0x4] sm:$0xf]
      %v602 = vld [vmem:[%s6 + $0x8] sm:$0xf]
      %v603 = vld [vmem:[%s6 + $0xc] sm:$0xf]
      %v608 = vunpack.c.l.b16 %v600
      %v609 = vunpack.c.l.b16 %v601
      %v610 = vunpack.c.l.b16 %v602
      %v611 = vunpack.c.l.b16 %v603
      %v612 = vpack.c.b16 %v609, %v608
      %v613 = vpack.c.b16 %v611, %v610
      %616 = vmatpush.bf16.msra.mxu0 0
      %617 = vmatpush.bf16.msra.mxu0 0
      %618 = vmatpush.bf16.msra.mxu0 0
      %619 = vmatpush.bf16.msra.mxu0 0
      %620 = vmatpush.bf16.msra.mxu0 0
      %621 = vmatpush.bf16.msra.mxu0 0
      %622 = vmatpush.bf16.msra.mxu0 %v613
      %623 = vmatpush.bf16.msra.mxu0 %v612
      %624 = vmatmul.bf16.gmra.mxu0 %v560
      %v625 = vpop.f32.mrf.mxu0
      %v626 = vadd.f32 0.0, %v625
      %v627 = vpop.f32.mrf.mxu0
      %v628 = vadd.f32 0.0, %v627
      %629 = vmatmul.bf16.gmra.mxu0 %v563
      %v630 = vpop.f32.mrf.mxu0
      %v631 = vadd.f32 0.0, %v630
      %v632 = vpop.f32.mrf.mxu0
      %v633 = vadd.f32 0.0, %v632
      %634 = vmatmul.bf16.gmra.mxu0 %v566
      %v635 = vpop.f32.mrf.mxu0
      %v636 = vadd.f32 0.0, %v635
      %v637 = vpop.f32.mrf.mxu0
      %v638 = vadd.f32 0.0, %v637
      %639 = vmatmul.bf16.gmra.mxu0 %v569
      %v640 = vpop.f32.mrf.mxu0
      %v641 = vadd.f32 0.0, %v640
      %v642 = vpop.f32.mrf.mxu0
      %v643 = vadd.f32 0.0, %v642
      %644 = vdwg.mxu0
      %v645 = vpack.c.bf16 %v524, %v524
      %v646 = vpack.c.bf16 %v526, %v526
      %v647 = vpack.c.bf16 %v529, %v529
      %v648 = vpack.c.bf16 %v531, %v531
      %v649 = vpack.c.bf16 %v534, %v534
      %v650 = vpack.c.bf16 %v536, %v536
      %v651 = vpack.c.bf16 %v539, %v539
      %v652 = vpack.c.bf16 %v541, %v541
      %661 = vrot.lane.b32.xlu0 %v645, 112
      %v662 = vpop.permute.xlu0 %661
      %663 = vrot.lane.b32.xlu0 %v646, 112
      %v664 = vpop.permute.xlu0 %663
      %665 = vrot.lane.b32.xlu0 %v647, 112
      %v666 = vpop.permute.xlu0 %665
      %667 = vrot.lane.b32.xlu0 %v648, 112
      %v668 = vpop.permute.xlu0 %667
      %669 = vrot.lane.b32.xlu0 %v649, 112
      %v670 = vpop.permute.xlu0 %669
      %671 = vrot.lane.b32.xlu0 %v650, 112
      %v672 = vpop.permute.xlu0 %671
      %673 = vrot.lane.b32.xlu0 %v651, 112
      %v674 = vpop.permute.xlu0 %673
      %675 = vrot.lane.b32.xlu0 %v652, 112
      %v676 = vpop.permute.xlu0 %675
      %v679 = vpack.i.b16 %v662, %v645
      %v680 = vshrl.u32 %v645, 16
      %v681 = vshrl.u32 %v662, 16
      %v682 = vpack.i.b16 %v681, %v680
      %v685 = vpack.i.b16 %v664, %v646
      %v686 = vshrl.u32 %v646, 16
      %v687 = vshrl.u32 %v664, 16
      %v688 = vpack.i.b16 %v687, %v686
      %v691 = vpack.i.b16 %v666, %v647
      %v692 = vshrl.u32 %v647, 16
      %v693 = vshrl.u32 %v666, 16
      %v694 = vpack.i.b16 %v693, %v692
      %v697 = vpack.i.b16 %v668, %v648
      %v698 = vshrl.u32 %v648, 16
      %v699 = vshrl.u32 %v668, 16
      %v700 = vpack.i.b16 %v699, %v698
      %v703 = vpack.i.b16 %v670, %v649
      %v704 = vshrl.u32 %v649, 16
      %v705 = vshrl.u32 %v670, 16
      %v706 = vpack.i.b16 %v705, %v704
      %v709 = vpack.i.b16 %v672, %v650
      %v710 = vshrl.u32 %v650, 16
      %v711 = vshrl.u32 %v672, 16
      %v712 = vpack.i.b16 %v711, %v710
      %v715 = vpack.i.b16 %v674, %v651
      %v716 = vshrl.u32 %v651, 16
      %v717 = vshrl.u32 %v674, 16
      %v718 = vpack.i.b16 %v717, %v716
      %v721 = vpack.i.b16 %v676, %v652
      %v722 = vshrl.u32 %v652, 16
      %v723 = vshrl.u32 %v676, 16
      %v724 = vpack.i.b16 %v723, %v722
      %v727 = vunpack.c.l.s4 1983009808
      %v728 = vunpack.c.0.s8 %v727
      %v729 = vperm.slane %v679, %v728
      %v730 = vrot.slane %v729, 4
      %vm731 = vcmask 1047556
      %v732 = vsel %vm731, 0, %v730
      %v734 = vunpack.c.l.s4 1934713408
      %v735 = vunpack.c.0.s8 %v734
      %v736 = vperm.slane %v729, %v735
      %v738 = vunpack.c.l.s4 1934713408
      %v739 = vunpack.c.0.s8 %v738
      %v740 = vperm.slane %v732, %v739
      %v741 = vrot.slane %v736, 4
      %v742 = vsel %vm731, 0, %v741
      %v743 = vrot.slane %v740, 4
      %v744 = vsel %vm731, 0, %v743
      %v747 = vunpack.c.l.s4 1983009808
      %v748 = vunpack.c.0.s8 %v747
      %v749 = vperm.slane %v682, %v748
      %v750 = vrot.slane %v749, 4
      %v751 = vsel %vm731, 0, %v750
      %v753 = vunpack.c.l.s4 1934713408
      %v754 = vunpack.c.0.s8 %v753
      %v755 = vperm.slane %v749, %v754
      %v757 = vunpack.c.l.s4 1934713408
      %v758 = vunpack.c.0.s8 %v757
      %v759 = vperm.slane %v751, %v758
      %v760 = vrot.slane %v755, 4
      %v761 = vsel %vm731, 0, %v760
      %v762 = vrot.slane %v759, 4
      %v763 = vsel %vm731, 0, %v762
      %v766 = vunpack.c.l.s4 1983009808
      %v767 = vunpack.c.0.s8 %v766
      %v768 = vperm.slane %v685, %v767
      %v769 = vrot.slane %v768, 4
      %v770 = vsel %vm731, 0, %v769
      %v772 = vunpack.c.l.s4 1934713408
      %v773 = vunpack.c.0.s8 %v772
      %v774 = vperm.slane %v768, %v773
      %v776 = vunpack.c.l.s4 1934713408
      %v777 = vunpack.c.0.s8 %v776
      %v778 = vperm.slane %v770, %v777
      %v779 = vrot.slane %v774, 4
      %v780 = vsel %vm731, 0, %v779
      %v781 = vrot.slane %v778, 4
      %v782 = vsel %vm731, 0, %v781
      %v785 = vunpack.c.l.s4 1983009808
      %v786 = vunpack.c.0.s8 %v785
      %v787 = vperm.slane %v688, %v786
      %v788 = vrot.slane %v787, 4
      %v789 = vsel %vm731, 0, %v788
      %v791 = vunpack.c.l.s4 1934713408
      %v792 = vunpack.c.0.s8 %v791
      %v793 = vperm.slane %v787, %v792
      %v795 = vunpack.c.l.s4 1934713408
      %v796 = vunpack.c.0.s8 %v795
      %v797 = vperm.slane %v789, %v796
      %v798 = vrot.slane %v793, 4
      %v799 = vsel %vm731, 0, %v798
      %v800 = vrot.slane %v797, 4
      %v801 = vsel %vm731, 0, %v800
      %v804 = vunpack.c.l.s4 1983009808
      %v805 = vunpack.c.0.s8 %v804
      %v806 = vperm.slane %v691, %v805
      %v807 = vrot.slane %v806, 4
      %v808 = vsel %vm731, 0, %v807
      %v810 = vunpack.c.l.s4 1934713408
      %v811 = vunpack.c.0.s8 %v810
      %v812 = vperm.slane %v806, %v811
      %v814 = vunpack.c.l.s4 1934713408
      %v815 = vunpack.c.0.s8 %v814
      %v816 = vperm.slane %v808, %v815
      %v817 = vrot.slane %v812, 4
      %v818 = vsel %vm731, 0, %v817
      %v819 = vrot.slane %v816, 4
      %v820 = vsel %vm731, 0, %v819
      %v823 = vunpack.c.l.s4 1983009808
      %v824 = vunpack.c.0.s8 %v823
      %v825 = vperm.slane %v694, %v824
      %v826 = vrot.slane %v825, 4
      %v827 = vsel %vm731, 0, %v826
      %v829 = vunpack.c.l.s4 1934713408
      %v830 = vunpack.c.0.s8 %v829
      %v831 = vperm.slane %v825, %v830
      %v833 = vunpack.c.l.s4 1934713408
      %v834 = vunpack.c.0.s8 %v833
      %v835 = vperm.slane %v827, %v834
      %v836 = vrot.slane %v831, 4
      %v837 = vsel %vm731, 0, %v836
      %v838 = vrot.slane %v835, 4
      %v839 = vsel %vm731, 0, %v838
      %v842 = vunpack.c.l.s4 1983009808
      %v843 = vunpack.c.0.s8 %v842
      %v844 = vperm.slane %v697, %v843
      %v845 = vrot.slane %v844, 4
      %v846 = vsel %vm731, 0, %v845
      %v848 = vunpack.c.l.s4 1934713408
      %v849 = vunpack.c.0.s8 %v848
      %v850 = vperm.slane %v844, %v849
      %v852 = vunpack.c.l.s4 1934713408
      %v853 = vunpack.c.0.s8 %v852
      %v854 = vperm.slane %v846, %v853
      %v855 = vrot.slane %v850, 4
      %v856 = vsel %vm731, 0, %v855
      %v857 = vrot.slane %v854, 4
      %v858 = vsel %vm731, 0, %v857
      %v861 = vunpack.c.l.s4 1983009808
      %v862 = vunpack.c.0.s8 %v861
      %v863 = vperm.slane %v700, %v862
      %v864 = vrot.slane %v863, 4
      %v865 = vsel %vm731, 0, %v864
      %v867 = vunpack.c.l.s4 1934713408
      %v868 = vunpack.c.0.s8 %v867
      %v869 = vperm.slane %v863, %v868
      %v871 = vunpack.c.l.s4 1934713408
      %v872 = vunpack.c.0.s8 %v871
      %v873 = vperm.slane %v865, %v872
      %v874 = vrot.slane %v869, 4
      %v875 = vsel %vm731, 0, %v874
      %v876 = vrot.slane %v873, 4
      %v877 = vsel %vm731, 0, %v876
      %v880 = vunpack.c.l.s4 1983009808
      %v881 = vunpack.c.0.s8 %v880
      %v882 = vperm.slane %v703, %v881
      %v883 = vrot.slane %v882, 4
      %v884 = vsel %vm731, 0, %v883
      %v886 = vunpack.c.l.s4 1934713408
      %v887 = vunpack.c.0.s8 %v886
      %v888 = vperm.slane %v882, %v887
      %v890 = vunpack.c.l.s4 1934713408
      %v891 = vunpack.c.0.s8 %v890
      %v892 = vperm.slane %v884, %v891
      %v893 = vrot.slane %v888, 4
      %v894 = vsel %vm731, 0, %v893
      %v895 = vrot.slane %v892, 4
      %v896 = vsel %vm731, 0, %v895
      %v899 = vunpack.c.l.s4 1983009808
      %v900 = vunpack.c.0.s8 %v899
      %v901 = vperm.slane %v706, %v900
      %v902 = vrot.slane %v901, 4
      %v903 = vsel %vm731, 0, %v902
      %v905 = vunpack.c.l.s4 1934713408
      %v906 = vunpack.c.0.s8 %v905
      %v907 = vperm.slane %v901, %v906
      %v909 = vunpack.c.l.s4 1934713408
      %v910 = vunpack.c.0.s8 %v909
      %v911 = vperm.slane %v903, %v910
      %v912 = vrot.slane %v907, 4
      %v913 = vsel %vm731, 0, %v912
      %v914 = vrot.slane %v911, 4
      %v915 = vsel %vm731, 0, %v914
      %v918 = vunpack.c.l.s4 1983009808
      %v919 = vunpack.c.0.s8 %v918
      %v920 = vperm.slane %v709, %v919
      %v921 = vrot.slane %v920, 4
      %v922 = vsel %vm731, 0, %v921
      %v924 = vunpack.c.l.s4 1934713408
      %v925 = vunpack.c.0.s8 %v924
      %v926 = vperm.slane %v920, %v925
      %v928 = vunpack.c.l.s4 1934713408
      %v929 = vunpack.c.0.s8 %v928
      %v930 = vperm.slane %v922, %v929
      %v931 = vrot.slane %v926, 4
      %v932 = vsel %vm731, 0, %v931
      %v933 = vrot.slane %v930, 4
      %v934 = vsel %vm731, 0, %v933
      %v937 = vunpack.c.l.s4 1983009808
      %v938 = vunpack.c.0.s8 %v937
      %v939 = vperm.slane %v712, %v938
      %v940 = vrot.slane %v939, 4
      %v941 = vsel %vm731, 0, %v940
      %v943 = vunpack.c.l.s4 1934713408
      %v944 = vunpack.c.0.s8 %v943
      %v945 = vperm.slane %v939, %v944
      %v947 = vunpack.c.l.s4 1934713408
      %v948 = vunpack.c.0.s8 %v947
      %v949 = vperm.slane %v941, %v948
      %v950 = vrot.slane %v945, 4
      %v951 = vsel %vm731, 0, %v950
      %v952 = vrot.slane %v949, 4
      %v953 = vsel %vm731, 0, %v952
      %v956 = vunpack.c.l.s4 1983009808
      %v957 = vunpack.c.0.s8 %v956
      %v958 = vperm.slane %v715, %v957
      %v959 = vrot.slane %v958, 4
      %v960 = vsel %vm731, 0, %v959
      %v962 = vunpack.c.l.s4 1934713408
      %v963 = vunpack.c.0.s8 %v962
      %v964 = vperm.slane %v958, %v963
      %v966 = vunpack.c.l.s4 1934713408
      %v967 = vunpack.c.0.s8 %v966
      %v968 = vperm.slane %v960, %v967
      %v969 = vrot.slane %v964, 4
      %v970 = vsel %vm731, 0, %v969
      %v971 = vrot.slane %v968, 4
      %v972 = vsel %vm731, 0, %v971
      %v975 = vunpack.c.l.s4 1983009808
      %v976 = vunpack.c.0.s8 %v975
      %v977 = vperm.slane %v718, %v976
      %v978 = vrot.slane %v977, 4
      %v979 = vsel %vm731, 0, %v978
      %v981 = vunpack.c.l.s4 1934713408
      %v982 = vunpack.c.0.s8 %v981
      %v983 = vperm.slane %v977, %v982
      %v985 = vunpack.c.l.s4 1934713408
      %v986 = vunpack.c.0.s8 %v985
      %v987 = vperm.slane %v979, %v986
      %v988 = vrot.slane %v983, 4
      %v989 = vsel %vm731, 0, %v988
      %v990 = vrot.slane %v987, 4
      %v991 = vsel %vm731, 0, %v990
      %v994 = vunpack.c.l.s4 1983009808
      %v995 = vunpack.c.0.s8 %v994
      %v996 = vperm.slane %v721, %v995
      %v997 = vrot.slane %v996, 4
      %v998 = vsel %vm731, 0, %v997
      %v1000 = vunpack.c.l.s4 1934713408
      %v1001 = vunpack.c.0.s8 %v1000
      %v1002 = vperm.slane %v996, %v1001
      %v1004 = vunpack.c.l.s4 1934713408
      %v1005 = vunpack.c.0.s8 %v1004
      %v1006 = vperm.slane %v998, %v1005
      %v1007 = vrot.slane %v1002, 4
      %v1008 = vsel %vm731, 0, %v1007
      %v1009 = vrot.slane %v1006, 4
      %v1010 = vsel %vm731, 0, %v1009
      %v1013 = vunpack.c.l.s4 1983009808
      %v1014 = vunpack.c.0.s8 %v1013
      %v1015 = vperm.slane %v724, %v1014
      %v1016 = vrot.slane %v1015, 4
      %v1017 = vsel %vm731, 0, %v1016
      %v1019 = vunpack.c.l.s4 1934713408
      %v1020 = vunpack.c.0.s8 %v1019
      %v1021 = vperm.slane %v1015, %v1020
      %v1023 = vunpack.c.l.s4 1934713408
      %v1024 = vunpack.c.0.s8 %v1023
      %v1025 = vperm.slane %v1017, %v1024
      %v1026 = vrot.slane %v1021, 4
      %v1027 = vsel %vm731, 0, %v1026
      %v1028 = vrot.slane %v1025, 4
      %v1029 = vsel %vm731, 0, %v1028
      %v1030 = vsel %vm731, %v743, %v736
      %v1032 = vunpack.c.l.s4 1983009808
      %v1033 = vunpack.c.0.s8 %v1032
      %v1034 = vperm.slane %v1030, %v1033
      %v1035 = vrot.slane %v744, 4
      %v1036 = vsel %vm731, %v1035, %v742
      %v1038 = vunpack.c.l.s4 1983009808
      %v1039 = vunpack.c.0.s8 %v1038
      %v1040 = vperm.slane %v1036, %v1039
      %v1041 = vrot.slane %v1040, 4
      %v1042 = vsel %vm731, %v1041, %v1034
      %v1044 = vunpack.c.l.s4 1934713408
      %v1045 = vunpack.c.0.s8 %v1044
      %v1046 = vperm.slane %v1042, %v1045
      %v1047 = vsel %vm731, %v762, %v755
      %v1049 = vunpack.c.l.s4 1983009808
      %v1050 = vunpack.c.0.s8 %v1049
      %v1051 = vperm.slane %v1047, %v1050
      %v1052 = vrot.slane %v763, 4
      %v1053 = vsel %vm731, %v1052, %v761
      %v1055 = vunpack.c.l.s4 1983009808
      %v1056 = vunpack.c.0.s8 %v1055
      %v1057 = vperm.slane %v1053, %v1056
      %v1058 = vrot.slane %v1057, 4
      %v1059 = vsel %vm731, %v1058, %v1051
      %v1061 = vunpack.c.l.s4 1934713408
      %v1062 = vunpack.c.0.s8 %v1061
      %v1063 = vperm.slane %v1059, %v1062
      %v1064 = vsel %vm731, %v781, %v774
      %v1066 = vunpack.c.l.s4 1983009808
      %v1067 = vunpack.c.0.s8 %v1066
      %v1068 = vperm.slane %v1064, %v1067
      %v1069 = vrot.slane %v782, 4
      %v1070 = vsel %vm731, %v1069, %v780
      %v1072 = vunpack.c.l.s4 1983009808
      %v1073 = vunpack.c.0.s8 %v1072
      %v1074 = vperm.slane %v1070, %v1073
      %v1075 = vrot.slane %v1074, 4
      %v1076 = vsel %vm731, %v1075, %v1068
      %v1078 = vunpack.c.l.s4 1934713408
      %v1079 = vunpack.c.0.s8 %v1078
      %v1080 = vperm.slane %v1076, %v1079
      %v1081 = vsel %vm731, %v800, %v793
      %v1083 = vunpack.c.l.s4 1983009808
      %v1084 = vunpack.c.0.s8 %v1083
      %v1085 = vperm.slane %v1081, %v1084
      %v1086 = vrot.slane %v801, 4
      %v1087 = vsel %vm731, %v1086, %v799
      %v1089 = vunpack.c.l.s4 1983009808
      %v1090 = vunpack.c.0.s8 %v1089
      %v1091 = vperm.slane %v1087, %v1090
      %v1092 = vrot.slane %v1091, 4
      %v1093 = vsel %vm731, %v1092, %v1085
      %v1095 = vunpack.c.l.s4 1934713408
      %v1096 = vunpack.c.0.s8 %v1095
      %v1097 = vperm.slane %v1093, %v1096
      %v1098 = vsel %vm731, %v819, %v812
      %v1100 = vunpack.c.l.s4 1983009808
      %v1101 = vunpack.c.0.s8 %v1100
      %v1102 = vperm.slane %v1098, %v1101
      %v1103 = vrot.slane %v820, 4
      %v1104 = vsel %vm731, %v1103, %v818
      %v1106 = vunpack.c.l.s4 1983009808
      %v1107 = vunpack.c.0.s8 %v1106
      %v1108 = vperm.slane %v1104, %v1107
      %v1109 = vrot.slane %v1108, 4
      %v1110 = vsel %vm731, %v1109, %v1102
      %v1112 = vunpack.c.l.s4 1934713408
      %v1113 = vunpack.c.0.s8 %v1112
      %v1114 = vperm.slane %v1110, %v1113
      %v1115 = vsel %vm731, %v838, %v831
      %v1117 = vunpack.c.l.s4 1983009808
      %v1118 = vunpack.c.0.s8 %v1117
      %v1119 = vperm.slane %v1115, %v1118
      %v1120 = vrot.slane %v839, 4
      %v1121 = vsel %vm731, %v1120, %v837
      %v1123 = vunpack.c.l.s4 1983009808
      %v1124 = vunpack.c.0.s8 %v1123
      %v1125 = vperm.slane %v1121, %v1124
      %v1126 = vrot.slane %v1125, 4
      %v1127 = vsel %vm731, %v1126, %v1119
      %v1129 = vunpack.c.l.s4 1934713408
      %v1130 = vunpack.c.0.s8 %v1129
      %v1131 = vperm.slane %v1127, %v1130
      %v1132 = vsel %vm731, %v857, %v850
      %v1134 = vunpack.c.l.s4 1983009808
      %v1135 = vunpack.c.0.s8 %v1134
      %v1136 = vperm.slane %v1132, %v1135
      %v1137 = vrot.slane %v858, 4
      %v1138 = vsel %vm731, %v1137, %v856
      %v1140 = vunpack.c.l.s4 1983009808
      %v1141 = vunpack.c.0.s8 %v1140
      %v1142 = vperm.slane %v1138, %v1141
      %v1143 = vrot.slane %v1142, 4
      %v1144 = vsel %vm731, %v1143, %v1136
      %v1146 = vunpack.c.l.s4 1934713408
      %v1147 = vunpack.c.0.s8 %v1146
      %v1148 = vperm.slane %v1144, %v1147
      %v1149 = vsel %vm731, %v876, %v869
      %v1151 = vunpack.c.l.s4 1983009808
      %v1152 = vunpack.c.0.s8 %v1151
      %v1153 = vperm.slane %v1149, %v1152
      %v1154 = vrot.slane %v877, 4
      %v1155 = vsel %vm731, %v1154, %v875
      %v1157 = vunpack.c.l.s4 1983009808
      %v1158 = vunpack.c.0.s8 %v1157
      %v1159 = vperm.slane %v1155, %v1158
      %v1160 = vrot.slane %v1159, 4
      %v1161 = vsel %vm731, %v1160, %v1153
      %v1163 = vunpack.c.l.s4 1934713408
      %v1164 = vunpack.c.0.s8 %v1163
      %v1165 = vperm.slane %v1161, %v1164
      %v1166 = vsel %vm731, %v895, %v888
      %v1168 = vunpack.c.l.s4 1983009808
      %v1169 = vunpack.c.0.s8 %v1168
      %v1170 = vperm.slane %v1166, %v1169
      %v1171 = vrot.slane %v896, 4
      %v1172 = vsel %vm731, %v1171, %v894
      %v1174 = vunpack.c.l.s4 1983009808
      %v1175 = vunpack.c.0.s8 %v1174
      %v1176 = vperm.slane %v1172, %v1175
      %v1177 = vrot.slane %v1176, 4
      %v1178 = vsel %vm731, %v1177, %v1170
      %v1180 = vunpack.c.l.s4 1934713408
      %v1181 = vunpack.c.0.s8 %v1180
      %v1182 = vperm.slane %v1178, %v1181
      %v1183 = vsel %vm731, %v914, %v907
      %v1185 = vunpack.c.l.s4 1983009808
      %v1186 = vunpack.c.0.s8 %v1185
      %v1187 = vperm.slane %v1183, %v1186
      %v1188 = vrot.slane %v915, 4
      %v1189 = vsel %vm731, %v1188, %v913
      %v1191 = vunpack.c.l.s4 1983009808
      %v1192 = vunpack.c.0.s8 %v1191
      %v1193 = vperm.slane %v1189, %v1192
      %v1194 = vrot.slane %v1193, 4
      %v1195 = vsel %vm731, %v1194, %v1187
      %v1197 = vunpack.c.l.s4 1934713408
      %v1198 = vunpack.c.0.s8 %v1197
      %v1199 = vperm.slane %v1195, %v1198
      %v1200 = vsel %vm731, %v933, %v926
      %v1202 = vunpack.c.l.s4 1983009808
      %v1203 = vunpack.c.0.s8 %v1202
      %v1204 = vperm.slane %v1200, %v1203
      %v1205 = vrot.slane %v934, 4
      %v1206 = vsel %vm731, %v1205, %v932
      %v1208 = vunpack.c.l.s4 1983009808
      %v1209 = vunpack.c.0.s8 %v1208
      %v1210 = vperm.slane %v1206, %v1209
      %v1211 = vrot.slane %v1210, 4
      %v1212 = vsel %vm731, %v1211, %v1204
      %v1214 = vunpack.c.l.s4 1934713408
      %v1215 = vunpack.c.0.s8 %v1214
      %v1216 = vperm.slane %v1212, %v1215
      %v1217 = vsel %vm731, %v952, %v945
      %v1219 = vunpack.c.l.s4 1983009808
      %v1220 = vunpack.c.0.s8 %v1219
      %v1221 = vperm.slane %v1217, %v1220
      %v1222 = vrot.slane %v953, 4
      %v1223 = vsel %vm731, %v1222, %v951
      %v1225 = vunpack.c.l.s4 1983009808
      %v1226 = vunpack.c.0.s8 %v1225
      %v1227 = vperm.slane %v1223, %v1226
      %v1228 = vrot.slane %v1227, 4
      %v1229 = vsel %vm731, %v1228, %v1221
      %v1231 = vunpack.c.l.s4 1934713408
      %v1232 = vunpack.c.0.s8 %v1231
      %v1233 = vperm.slane %v1229, %v1232
      %v1234 = vsel %vm731, %v971, %v964
      %v1236 = vunpack.c.l.s4 1983009808
      %v1237 = vunpack.c.0.s8 %v1236
      %v1238 = vperm.slane %v1234, %v1237
      %v1239 = vrot.slane %v972, 4
      %v1240 = vsel %vm731, %v1239, %v970
      %v1242 = vunpack.c.l.s4 1983009808
      %v1243 = vunpack.c.0.s8 %v1242
      %v1244 = vperm.slane %v1240, %v1243
      %v1245 = vrot.slane %v1244, 4
      %v1246 = vsel %vm731, %v1245, %v1238
      %v1248 = vunpack.c.l.s4 1934713408
      %v1249 = vunpack.c.0.s8 %v1248
      %v1250 = vperm.slane %v1246, %v1249
      %v1251 = vsel %vm731, %v990, %v983
      %v1253 = vunpack.c.l.s4 1983009808
      %v1254 = vunpack.c.0.s8 %v1253
      %v1255 = vperm.slane %v1251, %v1254
      %v1256 = vrot.slane %v991, 4
      %v1257 = vsel %vm731, %v1256, %v989
      %v1259 = vunpack.c.l.s4 1983009808
      %v1260 = vunpack.c.0.s8 %v1259
      %v1261 = vperm.slane %v1257, %v1260
      %v1262 = vrot.slane %v1261, 4
      %v1263 = vsel %vm731, %v1262, %v1255
      %v1265 = vunpack.c.l.s4 1934713408
      %v1266 = vunpack.c.0.s8 %v1265
      %v1267 = vperm.slane %v1263, %v1266
      %v1268 = vsel %vm731, %v1009, %v1002
      %v1270 = vunpack.c.l.s4 1983009808
      %v1271 = vunpack.c.0.s8 %v1270
      %v1272 = vperm.slane %v1268, %v1271
      %v1273 = vrot.slane %v1010, 4
      %v1274 = vsel %vm731, %v1273, %v1008
      %v1276 = vunpack.c.l.s4 1983009808
      %v1277 = vunpack.c.0.s8 %v1276
      %v1278 = vperm.slane %v1274, %v1277
      %v1279 = vrot.slane %v1278, 4
      %v1280 = vsel %vm731, %v1279, %v1272
      %v1282 = vunpack.c.l.s4 1934713408
      %v1283 = vunpack.c.0.s8 %v1282
      %v1284 = vperm.slane %v1280, %v1283
      %v1285 = vsel %vm731, %v1028, %v1021
      %v1287 = vunpack.c.l.s4 1983009808
      %v1288 = vunpack.c.0.s8 %v1287
      %v1289 = vperm.slane %v1285, %v1288
      %v1290 = vrot.slane %v1029, 4
      %v1291 = vsel %vm731, %v1290, %v1027
      %v1293 = vunpack.c.l.s4 1983009808
      %v1294 = vunpack.c.0.s8 %v1293
      %v1295 = vperm.slane %v1291, %v1294
      %v1296 = vrot.slane %v1295, 4
      %v1297 = vsel %vm731, %v1296, %v1289
      %v1299 = vunpack.c.l.s4 1934713408
      %v1300 = vunpack.c.0.s8 %v1299
      %v1301 = vperm.slane %v1297, %v1300
      %v1304 = vpack.i.b16 %v1063, %v1046
      %v1305 = vshrl.u32 %v1046, 16
      %v1306 = vshrl.u32 %v1063, 16
      %v1307 = vpack.i.b16 %v1306, %v1305
      %v1310 = vpack.i.b16 %v1097, %v1080
      %v1311 = vshrl.u32 %v1080, 16
      %v1312 = vshrl.u32 %v1097, 16
      %v1313 = vpack.i.b16 %v1312, %v1311
      %v1316 = vpack.i.b16 %v1131, %v1114
      %v1317 = vshrl.u32 %v1114, 16
      %v1318 = vshrl.u32 %v1131, 16
      %v1319 = vpack.i.b16 %v1318, %v1317
      %v1322 = vpack.i.b16 %v1165, %v1148
      %v1323 = vshrl.u32 %v1148, 16
      %v1324 = vshrl.u32 %v1165, 16
      %v1325 = vpack.i.b16 %v1324, %v1323
      %v1328 = vpack.i.b16 %v1199, %v1182
      %v1329 = vshrl.u32 %v1182, 16
      %v1330 = vshrl.u32 %v1199, 16
      %v1331 = vpack.i.b16 %v1330, %v1329
      %v1334 = vpack.i.b16 %v1233, %v1216
      %v1335 = vshrl.u32 %v1216, 16
      %v1336 = vshrl.u32 %v1233, 16
      %v1337 = vpack.i.b16 %v1336, %v1335
      %v1340 = vpack.i.b16 %v1267, %v1250
      %v1341 = vshrl.u32 %v1250, 16
      %v1342 = vshrl.u32 %v1267, 16
      %v1343 = vpack.i.b16 %v1342, %v1341
      %v1346 = vpack.i.b16 %v1301, %v1284
      %v1347 = vshrl.u32 %v1284, 16
      %v1348 = vshrl.u32 %v1301, 16
      %v1349 = vpack.i.b16 %v1348, %v1347
      %v1350 = vpack.c.bf16 %v581, %v581
      %v1351 = vpack.c.bf16 %v583, %v583
      %v1352 = vpack.c.bf16 %v586, %v586
      %v1353 = vpack.c.bf16 %v588, %v588
      %v1354 = vpack.c.bf16 %v591, %v591
      %v1355 = vpack.c.bf16 %v593, %v593
      %v1356 = vpack.c.bf16 %v596, %v596
      %v1357 = vpack.c.bf16 %v598, %v598
      %1366 = vrot.lane.b32.xlu0 %v1350, 112
      %v1367 = vpop.permute.xlu0 %1366
      %1368 = vrot.lane.b32.xlu0 %v1351, 112
      %v1369 = vpop.permute.xlu0 %1368
      %1370 = vrot.lane.b32.xlu0 %v1352, 112
      %v1371 = vpop.permute.xlu0 %1370
      %1372 = vrot.lane.b32.xlu0 %v1353, 112
      %v1373 = vpop.permute.xlu0 %1372
      %1374 = vrot.lane.b32.xlu0 %v1354, 112
      %v1375 = vpop.permute.xlu0 %1374
      %1376 = vrot.lane.b32.xlu0 %v1355, 112
      %v1377 = vpop.permute.xlu0 %1376
      %1378 = vrot.lane.b32.xlu0 %v1356, 112
      %v1379 = vpop.permute.xlu0 %1378
      %1380 = vrot.lane.b32.xlu0 %v1357, 112
      %v1381 = vpop.permute.xlu0 %1380
      %v1384 = vpack.i.b16 %v1367, %v1350
      %v1385 = vshrl.u32 %v1350, 16
      %v1386 = vshrl.u32 %v1367, 16
      %v1387 = vpack.i.b16 %v1386, %v1385
      %v1390 = vpack.i.b16 %v1369, %v1351
      %v1391 = vshrl.u32 %v1351, 16
      %v1392 = vshrl.u32 %v1369, 16
      %v1393 = vpack.i.b16 %v1392, %v1391
      %v1396 = vpack.i.b16 %v1371, %v1352
      %v1397 = vshrl.u32 %v1352, 16
      %v1398 = vshrl.u32 %v1371, 16
      %v1399 = vpack.i.b16 %v1398, %v1397
      %v1402 = vpack.i.b16 %v1373, %v1353
      %v1403 = vshrl.u32 %v1353, 16
      %v1404 = vshrl.u32 %v1373, 16
      %v1405 = vpack.i.b16 %v1404, %v1403
      %v1408 = vpack.i.b16 %v1375, %v1354
      %v1409 = vshrl.u32 %v1354, 16
      %v1410 = vshrl.u32 %v1375, 16
      %v1411 = vpack.i.b16 %v1410, %v1409
      %v1414 = vpack.i.b16 %v1377, %v1355
      %v1415 = vshrl.u32 %v1355, 16
      %v1416 = vshrl.u32 %v1377, 16
      %v1417 = vpack.i.b16 %v1416, %v1415
      %v1420 = vpack.i.b16 %v1379, %v1356
      %v1421 = vshrl.u32 %v1356, 16
      %v1422 = vshrl.u32 %v1379, 16
      %v1423 = vpack.i.b16 %v1422, %v1421
      %v1426 = vpack.i.b16 %v1381, %v1357
      %v1427 = vshrl.u32 %v1357, 16
      %v1428 = vshrl.u32 %v1381, 16
      %v1429 = vpack.i.b16 %v1428, %v1427
      %v1432 = vunpack.c.l.s4 1983009808
      %v1433 = vunpack.c.0.s8 %v1432
      %v1434 = vperm.slane %v1384, %v1433
      %v1435 = vrot.slane %v1434, 4
      %v1436 = vsel %vm731, 0, %v1435
      %v1438 = vunpack.c.l.s4 1934713408
      %v1439 = vunpack.c.0.s8 %v1438
      %v1440 = vperm.slane %v1434, %v1439
      %v1442 = vunpack.c.l.s4 1934713408
      %v1443 = vunpack.c.0.s8 %v1442
      %v1444 = vperm.slane %v1436, %v1443
      %v1445 = vrot.slane %v1440, 4
      %v1446 = vsel %vm731, 0, %v1445
      %v1447 = vrot.slane %v1444, 4
      %v1448 = vsel %vm731, 0, %v1447
      %v1451 = vunpack.c.l.s4 1983009808
      %v1452 = vunpack.c.0.s8 %v1451
      %v1453 = vperm.slane %v1387, %v1452
      %v1454 = vrot.slane %v1453, 4
      %v1455 = vsel %vm731, 0, %v1454
      %v1457 = vunpack.c.l.s4 1934713408
      %v1458 = vunpack.c.0.s8 %v1457
      %v1459 = vperm.slane %v1453, %v1458
      %v1461 = vunpack.c.l.s4 1934713408
      %v1462 = vunpack.c.0.s8 %v1461
      %v1463 = vperm.slane %v1455, %v1462
      %v1464 = vrot.slane %v1459, 4
      %v1465 = vsel %vm731, 0, %v1464
      %v1466 = vrot.slane %v1463, 4
      %v1467 = vsel %vm731, 0, %v1466
      %v1470 = vunpack.c.l.s4 1983009808
      %v1471 = vunpack.c.0.s8 %v1470
      %v1472 = vperm.slane %v1390, %v1471
      %v1473 = vrot.slane %v1472, 4
      %v1474 = vsel %vm731, 0, %v1473
      %v1476 = vunpack.c.l.s4 1934713408
      %v1477 = vunpack.c.0.s8 %v1476
      %v1478 = vperm.slane %v1472, %v1477
      %v1480 = vunpack.c.l.s4 1934713408
      %v1481 = vunpack.c.0.s8 %v1480
      %v1482 = vperm.slane %v1474, %v1481
      %v1483 = vrot.slane %v1478, 4
      %v1484 = vsel %vm731, 0, %v1483
      %v1485 = vrot.slane %v1482, 4
      %v1486 = vsel %vm731, 0, %v1485
      %v1489 = vunpack.c.l.s4 1983009808
      %v1490 = vunpack.c.0.s8 %v1489
      %v1491 = vperm.slane %v1393, %v1490
      %v1492 = vrot.slane %v1491, 4
      %v1493 = vsel %vm731, 0, %v1492
      %v1495 = vunpack.c.l.s4 1934713408
      %v1496 = vunpack.c.0.s8 %v1495
      %v1497 = vperm.slane %v1491, %v1496
      %v1499 = vunpack.c.l.s4 1934713408
      %v1500 = vunpack.c.0.s8 %v1499
      %v1501 = vperm.slane %v1493, %v1500
      %v1502 = vrot.slane %v1497, 4
      %v1503 = vsel %vm731, 0, %v1502
      %v1504 = vrot.slane %v1501, 4
      %v1505 = vsel %vm731, 0, %v1504
      %v1508 = vunpack.c.l.s4 1983009808
      %v1509 = vunpack.c.0.s8 %v1508
      %v1510 = vperm.slane %v1396, %v1509
      %v1511 = vrot.slane %v1510, 4
      %v1512 = vsel %vm731, 0, %v1511
      %v1514 = vunpack.c.l.s4 1934713408
      %v1515 = vunpack.c.0.s8 %v1514
      %v1516 = vperm.slane %v1510, %v1515
      %v1518 = vunpack.c.l.s4 1934713408
      %v1519 = vunpack.c.0.s8 %v1518
      %v1520 = vperm.slane %v1512, %v1519
      %v1521 = vrot.slane %v1516, 4
      %v1522 = vsel %vm731, 0, %v1521
      %v1523 = vrot.slane %v1520, 4
      %v1524 = vsel %vm731, 0, %v1523
      %v1527 = vunpack.c.l.s4 1983009808
      %v1528 = vunpack.c.0.s8 %v1527
      %v1529 = vperm.slane %v1399, %v1528
      %v1530 = vrot.slane %v1529, 4
      %v1531 = vsel %vm731, 0, %v1530
      %v1533 = vunpack.c.l.s4 1934713408
      %v1534 = vunpack.c.0.s8 %v1533
      %v1535 = vperm.slane %v1529, %v1534
      %v1537 = vunpack.c.l.s4 1934713408
      %v1538 = vunpack.c.0.s8 %v1537
      %v1539 = vperm.slane %v1531, %v1538
      %v1540 = vrot.slane %v1535, 4
      %v1541 = vsel %vm731, 0, %v1540
      %v1542 = vrot.slane %v1539, 4
      %v1543 = vsel %vm731, 0, %v1542
      %v1546 = vunpack.c.l.s4 1983009808
      %v1547 = vunpack.c.0.s8 %v1546
      %v1548 = vperm.slane %v1402, %v1547
      %v1549 = vrot.slane %v1548, 4
      %v1550 = vsel %vm731, 0, %v1549
      %v1552 = vunpack.c.l.s4 1934713408
      %v1553 = vunpack.c.0.s8 %v1552
      %v1554 = vperm.slane %v1548, %v1553
      %v1556 = vunpack.c.l.s4 1934713408
      %v1557 = vunpack.c.0.s8 %v1556
      %v1558 = vperm.slane %v1550, %v1557
      %v1559 = vrot.slane %v1554, 4
      %v1560 = vsel %vm731, 0, %v1559
      %v1561 = vrot.slane %v1558, 4
      %v1562 = vsel %vm731, 0, %v1561
      %v1565 = vunpack.c.l.s4 1983009808
      %v1566 = vunpack.c.0.s8 %v1565
      %v1567 = vperm.slane %v1405, %v1566
      %v1568 = vrot.slane %v1567, 4
      %v1569 = vsel %vm731, 0, %v1568
      %v1571 = vunpack.c.l.s4 1934713408
      %v1572 = vunpack.c.0.s8 %v1571
      %v1573 = vperm.slane %v1567, %v1572
      %v1575 = vunpack.c.l.s4 1934713408
      %v1576 = vunpack.c.0.s8 %v1575
      %v1577 = vperm.slane %v1569, %v1576
      %v1578 = vrot.slane %v1573, 4
      %v1579 = vsel %vm731, 0, %v1578
      %v1580 = vrot.slane %v1577, 4
      %v1581 = vsel %vm731, 0, %v1580
      %v1584 = vunpack.c.l.s4 1983009808
      %v1585 = vunpack.c.0.s8 %v1584
      %v1586 = vperm.slane %v1408, %v1585
      %v1587 = vrot.slane %v1586, 4
      %v1588 = vsel %vm731, 0, %v1587
      %v1590 = vunpack.c.l.s4 1934713408
      %v1591 = vunpack.c.0.s8 %v1590
      %v1592 = vperm.slane %v1586, %v1591
      %v1594 = vunpack.c.l.s4 1934713408
      %v1595 = vunpack.c.0.s8 %v1594
      %v1596 = vperm.slane %v1588, %v1595
      %v1597 = vrot.slane %v1592, 4
      %v1598 = vsel %vm731, 0, %v1597
      %v1599 = vrot.slane %v1596, 4
      %v1600 = vsel %vm731, 0, %v1599
      %v1603 = vunpack.c.l.s4 1983009808
      %v1604 = vunpack.c.0.s8 %v1603
      %v1605 = vperm.slane %v1411, %v1604
      %v1606 = vrot.slane %v1605, 4
      %v1607 = vsel %vm731, 0, %v1606
      %v1609 = vunpack.c.l.s4 1934713408
      %v1610 = vunpack.c.0.s8 %v1609
      %v1611 = vperm.slane %v1605, %v1610
      %v1613 = vunpack.c.l.s4 1934713408
      %v1614 = vunpack.c.0.s8 %v1613
      %v1615 = vperm.slane %v1607, %v1614
      %v1616 = vrot.slane %v1611, 4
      %v1617 = vsel %vm731, 0, %v1616
      %v1618 = vrot.slane %v1615, 4
      %v1619 = vsel %vm731, 0, %v1618
      %v1622 = vunpack.c.l.s4 1983009808
      %v1623 = vunpack.c.0.s8 %v1622
      %v1624 = vperm.slane %v1414, %v1623
      %v1625 = vrot.slane %v1624, 4
      %v1626 = vsel %vm731, 0, %v1625
      %v1628 = vunpack.c.l.s4 1934713408
      %v1629 = vunpack.c.0.s8 %v1628
      %v1630 = vperm.slane %v1624, %v1629
      %v1632 = vunpack.c.l.s4 1934713408
      %v1633 = vunpack.c.0.s8 %v1632
      %v1634 = vperm.slane %v1626, %v1633
      %v1635 = vrot.slane %v1630, 4
      %v1636 = vsel %vm731, 0, %v1635
      %v1637 = vrot.slane %v1634, 4
      %v1638 = vsel %vm731, 0, %v1637
      %v1641 = vunpack.c.l.s4 1983009808
      %v1642 = vunpack.c.0.s8 %v1641
      %v1643 = vperm.slane %v1417, %v1642
      %v1644 = vrot.slane %v1643, 4
      %v1645 = vsel %vm731, 0, %v1644
      %v1647 = vunpack.c.l.s4 1934713408
      %v1648 = vunpack.c.0.s8 %v1647
      %v1649 = vperm.slane %v1643, %v1648
      %v1651 = vunpack.c.l.s4 1934713408
      %v1652 = vunpack.c.0.s8 %v1651
      %v1653 = vperm.slane %v1645, %v1652
      %v1654 = vrot.slane %v1649, 4
      %v1655 = vsel %vm731, 0, %v1654
      %v1656 = vrot.slane %v1653, 4
      %v1657 = vsel %vm731, 0, %v1656
      %v1660 = vunpack.c.l.s4 1983009808
      %v1661 = vunpack.c.0.s8 %v1660
      %v1662 = vperm.slane %v1420, %v1661
      %v1663 = vrot.slane %v1662, 4
      %v1664 = vsel %vm731, 0, %v1663
      %v1666 = vunpack.c.l.s4 1934713408
      %v1667 = vunpack.c.0.s8 %v1666
      %v1668 = vperm.slane %v1662, %v1667
      %v1670 = vunpack.c.l.s4 1934713408
      %v1671 = vunpack.c.0.s8 %v1670
      %v1672 = vperm.slane %v1664, %v1671
      %v1673 = vrot.slane %v1668, 4
      %v1674 = vsel %vm731, 0, %v1673
      %v1675 = vrot.slane %v1672, 4
      %v1676 = vsel %vm731, 0, %v1675
      %v1679 = vunpack.c.l.s4 1983009808
      %v1680 = vunpack.c.0.s8 %v1679
      %v1681 = vperm.slane %v1423, %v1680
      %v1682 = vrot.slane %v1681, 4
      %v1683 = vsel %vm731, 0, %v1682
      %v1685 = vunpack.c.l.s4 1934713408
      %v1686 = vunpack.c.0.s8 %v1685
      %v1687 = vperm.slane %v1681, %v1686
      %v1689 = vunpack.c.l.s4 1934713408
      %v1690 = vunpack.c.0.s8 %v1689
      %v1691 = vperm.slane %v1683, %v1690
      %v1692 = vrot.slane %v1687, 4
      %v1693 = vsel %vm731, 0, %v1692
      %v1694 = vrot.slane %v1691, 4
      %v1695 = vsel %vm731, 0, %v1694
      %v1698 = vunpack.c.l.s4 1983009808
      %v1699 = vunpack.c.0.s8 %v1698
      %v1700 = vperm.slane %v1426, %v1699
      %v1701 = vrot.slane %v1700, 4
      %v1702 = vsel %vm731, 0, %v1701
      %v1704 = vunpack.c.l.s4 1934713408
      %v1705 = vunpack.c.0.s8 %v1704
      %v1706 = vperm.slane %v1700, %v1705
      %v1708 = vunpack.c.l.s4 1934713408
      %v1709 = vunpack.c.0.s8 %v1708
      %v1710 = vperm.slane %v1702, %v1709
      %v1711 = vrot.slane %v1706, 4
      %v1712 = vsel %vm731, 0, %v1711
      %v1713 = vrot.slane %v1710, 4
      %v1714 = vsel %vm731, 0, %v1713
      %v1717 = vunpack.c.l.s4 1983009808
      %v1718 = vunpack.c.0.s8 %v1717
      %v1719 = vperm.slane %v1429, %v1718
      %v1720 = vrot.slane %v1719, 4
      %v1721 = vsel %vm731, 0, %v1720
      %v1723 = vunpack.c.l.s4 1934713408
      %v1724 = vunpack.c.0.s8 %v1723
      %v1725 = vperm.slane %v1719, %v1724
      %v1727 = vunpack.c.l.s4 1934713408
      %v1728 = vunpack.c.0.s8 %v1727
      %v1729 = vperm.slane %v1721, %v1728
      %v1730 = vrot.slane %v1725, 4
      %v1731 = vsel %vm731, 0, %v1730
      %v1732 = vrot.slane %v1729, 4
      %v1733 = vsel %vm731, 0, %v1732
      %v1734 = vsel %vm731, %v1447, %v1440
      %v1736 = vunpack.c.l.s4 1983009808
      %v1737 = vunpack.c.0.s8 %v1736
      %v1738 = vperm.slane %v1734, %v1737
      %v1739 = vrot.slane %v1448, 4
      %v1740 = vsel %vm731, %v1739, %v1446
      %v1742 = vunpack.c.l.s4 1983009808
      %v1743 = vunpack.c.0.s8 %v1742
      %v1744 = vperm.slane %v1740, %v1743
      %v1745 = vrot.slane %v1744, 4
      %v1746 = vsel %vm731, %v1745, %v1738
      %v1748 = vunpack.c.l.s4 1934713408
      %v1749 = vunpack.c.0.s8 %v1748
      %v1750 = vperm.slane %v1746, %v1749
      %v1751 = vsel %vm731, %v1466, %v1459
      %v1753 = vunpack.c.l.s4 1983009808
      %v1754 = vunpack.c.0.s8 %v1753
      %v1755 = vperm.slane %v1751, %v1754
      %v1756 = vrot.slane %v1467, 4
      %v1757 = vsel %vm731, %v1756, %v1465
      %v1759 = vunpack.c.l.s4 1983009808
      %v1760 = vunpack.c.0.s8 %v1759
      %v1761 = vperm.slane %v1757, %v1760
      %v1762 = vrot.slane %v1761, 4
      %v1763 = vsel %vm731, %v1762, %v1755
      %v1765 = vunpack.c.l.s4 1934713408
      %v1766 = vunpack.c.0.s8 %v1765
      %v1767 = vperm.slane %v1763, %v1766
      %v1768 = vsel %vm731, %v1485, %v1478
      %v1770 = vunpack.c.l.s4 1983009808
      %v1771 = vunpack.c.0.s8 %v1770
      %v1772 = vperm.slane %v1768, %v1771
      %v1773 = vrot.slane %v1486, 4
      %v1774 = vsel %vm731, %v1773, %v1484
      %v1776 = vunpack.c.l.s4 1983009808
      %v1777 = vunpack.c.0.s8 %v1776
      %v1778 = vperm.slane %v1774, %v1777
      %v1779 = vrot.slane %v1778, 4
      %v1780 = vsel %vm731, %v1779, %v1772
      %v1782 = vunpack.c.l.s4 1934713408
      %v1783 = vunpack.c.0.s8 %v1782
      %v1784 = vperm.slane %v1780, %v1783
      %v1785 = vsel %vm731, %v1504, %v1497
      %v1787 = vunpack.c.l.s4 1983009808
      %v1788 = vunpack.c.0.s8 %v1787
      %v1789 = vperm.slane %v1785, %v1788
      %v1790 = vrot.slane %v1505, 4
      %v1791 = vsel %vm731, %v1790, %v1503
      %v1793 = vunpack.c.l.s4 1983009808
      %v1794 = vunpack.c.0.s8 %v1793
      %v1795 = vperm.slane %v1791, %v1794
      %v1796 = vrot.slane %v1795, 4
      %v1797 = vsel %vm731, %v1796, %v1789
      %v1799 = vunpack.c.l.s4 1934713408
      %v1800 = vunpack.c.0.s8 %v1799
      %v1801 = vperm.slane %v1797, %v1800
      %v1802 = vsel %vm731, %v1523, %v1516
      %v1804 = vunpack.c.l.s4 1983009808
      %v1805 = vunpack.c.0.s8 %v1804
      %v1806 = vperm.slane %v1802, %v1805
      %v1807 = vrot.slane %v1524, 4
      %v1808 = vsel %vm731, %v1807, %v1522
      %v1810 = vunpack.c.l.s4 1983009808
      %v1811 = vunpack.c.0.s8 %v1810
      %v1812 = vperm.slane %v1808, %v1811
      %v1813 = vrot.slane %v1812, 4
      %v1814 = vsel %vm731, %v1813, %v1806
      %v1816 = vunpack.c.l.s4 1934713408
      %v1817 = vunpack.c.0.s8 %v1816
      %v1818 = vperm.slane %v1814, %v1817
      %v1819 = vsel %vm731, %v1542, %v1535
      %v1821 = vunpack.c.l.s4 1983009808
      %v1822 = vunpack.c.0.s8 %v1821
      %v1823 = vperm.slane %v1819, %v1822
      %v1824 = vrot.slane %v1543, 4
      %v1825 = vsel %vm731, %v1824, %v1541
      %v1827 = vunpack.c.l.s4 1983009808
      %v1828 = vunpack.c.0.s8 %v1827
      %v1829 = vperm.slane %v1825, %v1828
      %v1830 = vrot.slane %v1829, 4
      %v1831 = vsel %vm731, %v1830, %v1823
      %v1833 = vunpack.c.l.s4 1934713408
      %v1834 = vunpack.c.0.s8 %v1833
      %v1835 = vperm.slane %v1831, %v1834
      %v1836 = vsel %vm731, %v1561, %v1554
      %v1838 = vunpack.c.l.s4 1983009808
      %v1839 = vunpack.c.0.s8 %v1838
      %v1840 = vperm.slane %v1836, %v1839
      %v1841 = vrot.slane %v1562, 4
      %v1842 = vsel %vm731, %v1841, %v1560
      %v1844 = vunpack.c.l.s4 1983009808
      %v1845 = vunpack.c.0.s8 %v1844
      %v1846 = vperm.slane %v1842, %v1845
      %v1847 = vrot.slane %v1846, 4
      %v1848 = vsel %vm731, %v1847, %v1840
      %v1850 = vunpack.c.l.s4 1934713408
      %v1851 = vunpack.c.0.s8 %v1850
      %v1852 = vperm.slane %v1848, %v1851
      %v1853 = vsel %vm731, %v1580, %v1573
      %v1855 = vunpack.c.l.s4 1983009808
      %v1856 = vunpack.c.0.s8 %v1855
      %v1857 = vperm.slane %v1853, %v1856
      %v1858 = vrot.slane %v1581, 4
      %v1859 = vsel %vm731, %v1858, %v1579
      %v1861 = vunpack.c.l.s4 1983009808
      %v1862 = vunpack.c.0.s8 %v1861
      %v1863 = vperm.slane %v1859, %v1862
      %v1864 = vrot.slane %v1863, 4
      %v1865 = vsel %vm731, %v1864, %v1857
      %v1867 = vunpack.c.l.s4 1934713408
      %v1868 = vunpack.c.0.s8 %v1867
      %v1869 = vperm.slane %v1865, %v1868
      %v1870 = vsel %vm731, %v1599, %v1592
      %v1872 = vunpack.c.l.s4 1983009808
      %v1873 = vunpack.c.0.s8 %v1872
      %v1874 = vperm.slane %v1870, %v1873
      %v1875 = vrot.slane %v1600, 4
      %v1876 = vsel %vm731, %v1875, %v1598
      %v1878 = vunpack.c.l.s4 1983009808
      %v1879 = vunpack.c.0.s8 %v1878
      %v1880 = vperm.slane %v1876, %v1879
      %v1881 = vrot.slane %v1880, 4
      %v1882 = vsel %vm731, %v1881, %v1874
      %v1884 = vunpack.c.l.s4 1934713408
      %v1885 = vunpack.c.0.s8 %v1884
      %v1886 = vperm.slane %v1882, %v1885
      %v1887 = vsel %vm731, %v1618, %v1611
      %v1889 = vunpack.c.l.s4 1983009808
      %v1890 = vunpack.c.0.s8 %v1889
      %v1891 = vperm.slane %v1887, %v1890
      %v1892 = vrot.slane %v1619, 4
      %v1893 = vsel %vm731, %v1892, %v1617
      %v1895 = vunpack.c.l.s4 1983009808
      %v1896 = vunpack.c.0.s8 %v1895
      %v1897 = vperm.slane %v1893, %v1896
      %v1898 = vrot.slane %v1897, 4
      %v1899 = vsel %vm731, %v1898, %v1891
      %v1901 = vunpack.c.l.s4 1934713408
      %v1902 = vunpack.c.0.s8 %v1901
      %v1903 = vperm.slane %v1899, %v1902
      %v1904 = vsel %vm731, %v1637, %v1630
      %v1906 = vunpack.c.l.s4 1983009808
      %v1907 = vunpack.c.0.s8 %v1906
      %v1908 = vperm.slane %v1904, %v1907
      %v1909 = vrot.slane %v1638, 4
      %v1910 = vsel %vm731, %v1909, %v1636
      %v1912 = vunpack.c.l.s4 1983009808
      %v1913 = vunpack.c.0.s8 %v1912
      %v1914 = vperm.slane %v1910, %v1913
      %v1915 = vrot.slane %v1914, 4
      %v1916 = vsel %vm731, %v1915, %v1908
      %v1918 = vunpack.c.l.s4 1934713408
      %v1919 = vunpack.c.0.s8 %v1918
      %v1920 = vperm.slane %v1916, %v1919
      %v1921 = vsel %vm731, %v1656, %v1649
      %v1923 = vunpack.c.l.s4 1983009808
      %v1924 = vunpack.c.0.s8 %v1923
      %v1925 = vperm.slane %v1921, %v1924
      %v1926 = vrot.slane %v1657, 4
      %v1927 = vsel %vm731, %v1926, %v1655
      %v1929 = vunpack.c.l.s4 1983009808
      %v1930 = vunpack.c.0.s8 %v1929
      %v1931 = vperm.slane %v1927, %v1930
      %v1932 = vrot.slane %v1931, 4
      %v1933 = vsel %vm731, %v1932, %v1925
      %v1935 = vunpack.c.l.s4 1934713408
      %v1936 = vunpack.c.0.s8 %v1935
      %v1937 = vperm.slane %v1933, %v1936
      %v1938 = vsel %vm731, %v1675, %v1668
      %v1940 = vunpack.c.l.s4 1983009808
      %v1941 = vunpack.c.0.s8 %v1940
      %v1942 = vperm.slane %v1938, %v1941
      %v1943 = vrot.slane %v1676, 4
      %v1944 = vsel %vm731, %v1943, %v1674
      %v1946 = vunpack.c.l.s4 1983009808
      %v1947 = vunpack.c.0.s8 %v1946
      %v1948 = vperm.slane %v1944, %v1947
      %v1949 = vrot.slane %v1948, 4
      %v1950 = vsel %vm731, %v1949, %v1942
      %v1952 = vunpack.c.l.s4 1934713408
      %v1953 = vunpack.c.0.s8 %v1952
      %v1954 = vperm.slane %v1950, %v1953
      %v1955 = vsel %vm731, %v1694, %v1687
      %v1957 = vunpack.c.l.s4 1983009808
      %v1958 = vunpack.c.0.s8 %v1957
      %v1959 = vperm.slane %v1955, %v1958
      %v1960 = vrot.slane %v1695, 4
      %v1961 = vsel %vm731, %v1960, %v1693
      %v1963 = vunpack.c.l.s4 1983009808
      %v1964 = vunpack.c.0.s8 %v1963
      %v1965 = vperm.slane %v1961, %v1964
      %v1966 = vrot.slane %v1965, 4
      %v1967 = vsel %vm731, %v1966, %v1959
      %v1969 = vunpack.c.l.s4 1934713408
      %v1970 = vunpack.c.0.s8 %v1969
      %v1971 = vperm.slane %v1967, %v1970
      %v1972 = vsel %vm731, %v1713, %v1706
      %v1974 = vunpack.c.l.s4 1983009808
      %v1975 = vunpack.c.0.s8 %v1974
      %v1976 = vperm.slane %v1972, %v1975
      %v1977 = vrot.slane %v1714, 4
      %v1978 = vsel %vm731, %v1977, %v1712
      %v1980 = vunpack.c.l.s4 1983009808
      %v1981 = vunpack.c.0.s8 %v1980
      %v1982 = vperm.slane %v1978, %v1981
      %v1983 = vrot.slane %v1982, 4
      %v1984 = vsel %vm731, %v1983, %v1976
      %v1986 = vunpack.c.l.s4 1934713408
      %v1987 = vunpack.c.0.s8 %v1986
      %v1988 = vperm.slane %v1984, %v1987
      %v1989 = vsel %vm731, %v1732, %v1725
      %v1991 = vunpack.c.l.s4 1983009808
      %v1992 = vunpack.c.0.s8 %v1991
      %v1993 = vperm.slane %v1989, %v1992
      %v1994 = vrot.slane %v1733, 4
      %v1995 = vsel %vm731, %v1994, %v1731
      %v1997 = vunpack.c.l.s4 1983009808
      %v1998 = vunpack.c.0.s8 %v1997
      %v1999 = vperm.slane %v1995, %v1998
      %v2000 = vrot.slane %v1999, 4
      %v2001 = vsel %vm731, %v2000, %v1993
      %v2003 = vunpack.c.l.s4 1934713408
      %v2004 = vunpack.c.0.s8 %v2003
      %v2005 = vperm.slane %v2001, %v2004
      %v2008 = vpack.i.b16 %v1767, %v1750
      %v2009 = vshrl.u32 %v1750, 16
      %v2010 = vshrl.u32 %v1767, 16
      %v2011 = vpack.i.b16 %v2010, %v2009
      %v2014 = vpack.i.b16 %v1801, %v1784
      %v2015 = vshrl.u32 %v1784, 16
      %v2016 = vshrl.u32 %v1801, 16
      %v2017 = vpack.i.b16 %v2016, %v2015
      %v2020 = vpack.i.b16 %v1835, %v1818
      %v2021 = vshrl.u32 %v1818, 16
      %v2022 = vshrl.u32 %v1835, 16
      %v2023 = vpack.i.b16 %v2022, %v2021
      %v2026 = vpack.i.b16 %v1869, %v1852
      %v2027 = vshrl.u32 %v1852, 16
      %v2028 = vshrl.u32 %v1869, 16
      %v2029 = vpack.i.b16 %v2028, %v2027
      %v2032 = vpack.i.b16 %v1903, %v1886
      %v2033 = vshrl.u32 %v1886, 16
      %v2034 = vshrl.u32 %v1903, 16
      %v2035 = vpack.i.b16 %v2034, %v2033
      %v2038 = vpack.i.b16 %v1937, %v1920
      %v2039 = vshrl.u32 %v1920, 16
      %v2040 = vshrl.u32 %v1937, 16
      %v2041 = vpack.i.b16 %v2040, %v2039
      %v2044 = vpack.i.b16 %v1971, %v1954
      %v2045 = vshrl.u32 %v1954, 16
      %v2046 = vshrl.u32 %v1971, 16
      %v2047 = vpack.i.b16 %v2046, %v2045
      %v2050 = vpack.i.b16 %v2005, %v1988
      %v2051 = vshrl.u32 %v1988, 16
      %v2052 = vshrl.u32 %v2005, 16
      %v2053 = vpack.i.b16 %v2052, %v2051
      %v2054 = vpack.c.bf16 %v626, %v626
      %v2055 = vpack.c.bf16 %v628, %v628
      %v2056 = vpack.c.bf16 %v631, %v631
      %v2057 = vpack.c.bf16 %v633, %v633
      %v2058 = vpack.c.bf16 %v636, %v636
      %v2059 = vpack.c.bf16 %v638, %v638
      %v2060 = vpack.c.bf16 %v641, %v641
      %v2061 = vpack.c.bf16 %v643, %v643
      %2070 = vrot.lane.b32.xlu0 %v2054, 112
      %v2071 = vpop.permute.xlu0 %2070
      %2072 = vrot.lane.b32.xlu0 %v2055, 112
      %v2073 = vpop.permute.xlu0 %2072
      %2074 = vrot.lane.b32.xlu0 %v2056, 112
      %v2075 = vpop.permute.xlu0 %2074
      %2076 = vrot.lane.b32.xlu0 %v2057, 112
      %v2077 = vpop.permute.xlu0 %2076
      %2078 = vrot.lane.b32.xlu0 %v2058, 112
      %v2079 = vpop.permute.xlu0 %2078
      %2080 = vrot.lane.b32.xlu0 %v2059, 112
      %v2081 = vpop.permute.xlu0 %2080
      %2082 = vrot.lane.b32.xlu0 %v2060, 112
      %v2083 = vpop.permute.xlu0 %2082
      %2084 = vrot.lane.b32.xlu0 %v2061, 112
      %v2085 = vpop.permute.xlu0 %2084
      %v2088 = vpack.i.b16 %v2071, %v2054
      %v2089 = vshrl.u32 %v2054, 16
      %v2090 = vshrl.u32 %v2071, 16
      %v2091 = vpack.i.b16 %v2090, %v2089
      %v2094 = vpack.i.b16 %v2073, %v2055
      %v2095 = vshrl.u32 %v2055, 16
      %v2096 = vshrl.u32 %v2073, 16
      %v2097 = vpack.i.b16 %v2096, %v2095
      %v2100 = vpack.i.b16 %v2075, %v2056
      %v2101 = vshrl.u32 %v2056, 16
      %v2102 = vshrl.u32 %v2075, 16
      %v2103 = vpack.i.b16 %v2102, %v2101
      %v2106 = vpack.i.b16 %v2077, %v2057
      %v2107 = vshrl.u32 %v2057, 16
      %v2108 = vshrl.u32 %v2077, 16
      %v2109 = vpack.i.b16 %v2108, %v2107
      %v2112 = vpack.i.b16 %v2079, %v2058
      %v2113 = vshrl.u32 %v2058, 16
      %v2114 = vshrl.u32 %v2079, 16
      %v2115 = vpack.i.b16 %v2114, %v2113
      %v2118 = vpack.i.b16 %v2081, %v2059
      %v2119 = vshrl.u32 %v2059, 16
      %v2120 = vshrl.u32 %v2081, 16
      %v2121 = vpack.i.b16 %v2120, %v2119
      %v2124 = vpack.i.b16 %v2083, %v2060
      %v2125 = vshrl.u32 %v2060, 16
      %v2126 = vshrl.u32 %v2083, 16
      %v2127 = vpack.i.b16 %v2126, %v2125
      %v2130 = vpack.i.b16 %v2085, %v2061
      %v2131 = vshrl.u32 %v2061, 16
      %v2132 = vshrl.u32 %v2085, 16
      %v2133 = vpack.i.b16 %v2132, %v2131
      %v2136 = vunpack.c.l.s4 1983009808
      %v2137 = vunpack.c.0.s8 %v2136
      %v2138 = vperm.slane %v2088, %v2137
      %v2139 = vrot.slane %v2138, 4
      %v2140 = vsel %vm731, 0, %v2139
      %v2142 = vunpack.c.l.s4 1934713408
      %v2143 = vunpack.c.0.s8 %v2142
      %v2144 = vperm.slane %v2138, %v2143
      %v2146 = vunpack.c.l.s4 1934713408
      %v2147 = vunpack.c.0.s8 %v2146
      %v2148 = vperm.slane %v2140, %v2147
      %v2149 = vrot.slane %v2144, 4
      %v2150 = vsel %vm731, 0, %v2149
      %v2151 = vrot.slane %v2148, 4
      %v2152 = vsel %vm731, 0, %v2151
      %v2155 = vunpack.c.l.s4 1983009808
      %v2156 = vunpack.c.0.s8 %v2155
      %v2157 = vperm.slane %v2091, %v2156
      %v2158 = vrot.slane %v2157, 4
      %v2159 = vsel %vm731, 0, %v2158
      %v2161 = vunpack.c.l.s4 1934713408
      %v2162 = vunpack.c.0.s8 %v2161
      %v2163 = vperm.slane %v2157, %v2162
      %v2165 = vunpack.c.l.s4 1934713408
      %v2166 = vunpack.c.0.s8 %v2165
      %v2167 = vperm.slane %v2159, %v2166
      %v2168 = vrot.slane %v2163, 4
      %v2169 = vsel %vm731, 0, %v2168
      %v2170 = vrot.slane %v2167, 4
      %v2171 = vsel %vm731, 0, %v2170
      %v2174 = vunpack.c.l.s4 1983009808
      %v2175 = vunpack.c.0.s8 %v2174
      %v2176 = vperm.slane %v2094, %v2175
      %v2177 = vrot.slane %v2176, 4
      %v2178 = vsel %vm731, 0, %v2177
      %v2180 = vunpack.c.l.s4 1934713408
      %v2181 = vunpack.c.0.s8 %v2180
      %v2182 = vperm.slane %v2176, %v2181
      %v2184 = vunpack.c.l.s4 1934713408
      %v2185 = vunpack.c.0.s8 %v2184
      %v2186 = vperm.slane %v2178, %v2185
      %v2187 = vrot.slane %v2182, 4
      %v2188 = vsel %vm731, 0, %v2187
      %v2189 = vrot.slane %v2186, 4
      %v2190 = vsel %vm731, 0, %v2189
      %v2193 = vunpack.c.l.s4 1983009808
      %v2194 = vunpack.c.0.s8 %v2193
      %v2195 = vperm.slane %v2097, %v2194
      %v2196 = vrot.slane %v2195, 4
      %v2197 = vsel %vm731, 0, %v2196
      %v2199 = vunpack.c.l.s4 1934713408
      %v2200 = vunpack.c.0.s8 %v2199
      %v2201 = vperm.slane %v2195, %v2200
      %v2203 = vunpack.c.l.s4 1934713408
      %v2204 = vunpack.c.0.s8 %v2203
      %v2205 = vperm.slane %v2197, %v2204
      %v2206 = vrot.slane %v2201, 4
      %v2207 = vsel %vm731, 0, %v2206
      %v2208 = vrot.slane %v2205, 4
      %v2209 = vsel %vm731, 0, %v2208
      %v2212 = vunpack.c.l.s4 1983009808
      %v2213 = vunpack.c.0.s8 %v2212
      %v2214 = vperm.slane %v2100, %v2213
      %v2215 = vrot.slane %v2214, 4
      %v2216 = vsel %vm731, 0, %v2215
      %v2218 = vunpack.c.l.s4 1934713408
      %v2219 = vunpack.c.0.s8 %v2218
      %v2220 = vperm.slane %v2214, %v2219
      %v2222 = vunpack.c.l.s4 1934713408
      %v2223 = vunpack.c.0.s8 %v2222
      %v2224 = vperm.slane %v2216, %v2223
      %v2225 = vrot.slane %v2220, 4
      %v2226 = vsel %vm731, 0, %v2225
      %v2227 = vrot.slane %v2224, 4
      %v2228 = vsel %vm731, 0, %v2227
      %v2231 = vunpack.c.l.s4 1983009808
      %v2232 = vunpack.c.0.s8 %v2231
      %v2233 = vperm.slane %v2103, %v2232
      %v2234 = vrot.slane %v2233, 4
      %v2235 = vsel %vm731, 0, %v2234
      %v2237 = vunpack.c.l.s4 1934713408
      %v2238 = vunpack.c.0.s8 %v2237
      %v2239 = vperm.slane %v2233, %v2238
      %v2241 = vunpack.c.l.s4 1934713408
      %v2242 = vunpack.c.0.s8 %v2241
      %v2243 = vperm.slane %v2235, %v2242
      %v2244 = vrot.slane %v2239, 4
      %v2245 = vsel %vm731, 0, %v2244
      %v2246 = vrot.slane %v2243, 4
      %v2247 = vsel %vm731, 0, %v2246
      %v2250 = vunpack.c.l.s4 1983009808
      %v2251 = vunpack.c.0.s8 %v2250
      %v2252 = vperm.slane %v2106, %v2251
      %v2253 = vrot.slane %v2252, 4
      %v2254 = vsel %vm731, 0, %v2253
      %v2256 = vunpack.c.l.s4 1934713408
      %v2257 = vunpack.c.0.s8 %v2256
      %v2258 = vperm.slane %v2252, %v2257
      %v2260 = vunpack.c.l.s4 1934713408
      %v2261 = vunpack.c.0.s8 %v2260
      %v2262 = vperm.slane %v2254, %v2261
      %v2263 = vrot.slane %v2258, 4
      %v2264 = vsel %vm731, 0, %v2263
      %v2265 = vrot.slane %v2262, 4
      %v2266 = vsel %vm731, 0, %v2265
      %v2269 = vunpack.c.l.s4 1983009808
      %v2270 = vunpack.c.0.s8 %v2269
      %v2271 = vperm.slane %v2109, %v2270
      %v2272 = vrot.slane %v2271, 4
      %v2273 = vsel %vm731, 0, %v2272
      %v2275 = vunpack.c.l.s4 1934713408
      %v2276 = vunpack.c.0.s8 %v2275
      %v2277 = vperm.slane %v2271, %v2276
      %v2279 = vunpack.c.l.s4 1934713408
      %v2280 = vunpack.c.0.s8 %v2279
      %v2281 = vperm.slane %v2273, %v2280
      %v2282 = vrot.slane %v2277, 4
      %v2283 = vsel %vm731, 0, %v2282
      %v2284 = vrot.slane %v2281, 4
      %v2285 = vsel %vm731, 0, %v2284
      %v2288 = vunpack.c.l.s4 1983009808
      %v2289 = vunpack.c.0.s8 %v2288
      %v2290 = vperm.slane %v2112, %v2289
      %v2291 = vrot.slane %v2290, 4
      %v2292 = vsel %vm731, 0, %v2291
      %v2294 = vunpack.c.l.s4 1934713408
      %v2295 = vunpack.c.0.s8 %v2294
      %v2296 = vperm.slane %v2290, %v2295
      %v2298 = vunpack.c.l.s4 1934713408
      %v2299 = vunpack.c.0.s8 %v2298
      %v2300 = vperm.slane %v2292, %v2299
      %v2301 = vrot.slane %v2296, 4
      %v2302 = vsel %vm731, 0, %v2301
      %v2303 = vrot.slane %v2300, 4
      %v2304 = vsel %vm731, 0, %v2303
      %v2307 = vunpack.c.l.s4 1983009808
      %v2308 = vunpack.c.0.s8 %v2307
      %v2309 = vperm.slane %v2115, %v2308
      %v2310 = vrot.slane %v2309, 4
      %v2311 = vsel %vm731, 0, %v2310
      %v2313 = vunpack.c.l.s4 1934713408
      %v2314 = vunpack.c.0.s8 %v2313
      %v2315 = vperm.slane %v2309, %v2314
      %v2317 = vunpack.c.l.s4 1934713408
      %v2318 = vunpack.c.0.s8 %v2317
      %v2319 = vperm.slane %v2311, %v2318
      %v2320 = vrot.slane %v2315, 4
      %v2321 = vsel %vm731, 0, %v2320
      %v2322 = vrot.slane %v2319, 4
      %v2323 = vsel %vm731, 0, %v2322
      %v2326 = vunpack.c.l.s4 1983009808
      %v2327 = vunpack.c.0.s8 %v2326
      %v2328 = vperm.slane %v2118, %v2327
      %v2329 = vrot.slane %v2328, 4
      %v2330 = vsel %vm731, 0, %v2329
      %v2332 = vunpack.c.l.s4 1934713408
      %v2333 = vunpack.c.0.s8 %v2332
      %v2334 = vperm.slane %v2328, %v2333
      %v2336 = vunpack.c.l.s4 1934713408
      %v2337 = vunpack.c.0.s8 %v2336
      %v2338 = vperm.slane %v2330, %v2337
      %v2339 = vrot.slane %v2334, 4
      %v2340 = vsel %vm731, 0, %v2339
      %v2341 = vrot.slane %v2338, 4
      %v2342 = vsel %vm731, 0, %v2341
      %v2345 = vunpack.c.l.s4 1983009808
      %v2346 = vunpack.c.0.s8 %v2345
      %v2347 = vperm.slane %v2121, %v2346
      %v2348 = vrot.slane %v2347, 4
      %v2349 = vsel %vm731, 0, %v2348
      %v2351 = vunpack.c.l.s4 1934713408
      %v2352 = vunpack.c.0.s8 %v2351
      %v2353 = vperm.slane %v2347, %v2352
      %v2355 = vunpack.c.l.s4 1934713408
      %v2356 = vunpack.c.0.s8 %v2355
      %v2357 = vperm.slane %v2349, %v2356
      %v2358 = vrot.slane %v2353, 4
      %v2359 = vsel %vm731, 0, %v2358
      %v2360 = vrot.slane %v2357, 4
      %v2361 = vsel %vm731, 0, %v2360
      %v2364 = vunpack.c.l.s4 1983009808
      %v2365 = vunpack.c.0.s8 %v2364
      %v2366 = vperm.slane %v2124, %v2365
      %v2367 = vrot.slane %v2366, 4
      %v2368 = vsel %vm731, 0, %v2367
      %v2370 = vunpack.c.l.s4 1934713408
      %v2371 = vunpack.c.0.s8 %v2370
      %v2372 = vperm.slane %v2366, %v2371
      %v2374 = vunpack.c.l.s4 1934713408
      %v2375 = vunpack.c.0.s8 %v2374
      %v2376 = vperm.slane %v2368, %v2375
      %v2377 = vrot.slane %v2372, 4
      %v2378 = vsel %vm731, 0, %v2377
      %v2379 = vrot.slane %v2376, 4
      %v2380 = vsel %vm731, 0, %v2379
      %v2383 = vunpack.c.l.s4 1983009808
      %v2384 = vunpack.c.0.s8 %v2383
      %v2385 = vperm.slane %v2127, %v2384
      %v2386 = vrot.slane %v2385, 4
      %v2387 = vsel %vm731, 0, %v2386
      %v2389 = vunpack.c.l.s4 1934713408
      %v2390 = vunpack.c.0.s8 %v2389
      %v2391 = vperm.slane %v2385, %v2390
      %v2393 = vunpack.c.l.s4 1934713408
      %v2394 = vunpack.c.0.s8 %v2393
      %v2395 = vperm.slane %v2387, %v2394
      %v2396 = vrot.slane %v2391, 4
      %v2397 = vsel %vm731, 0, %v2396
      %v2398 = vrot.slane %v2395, 4
      %v2399 = vsel %vm731, 0, %v2398
      %v2402 = vunpack.c.l.s4 1983009808
      %v2403 = vunpack.c.0.s8 %v2402
      %v2404 = vperm.slane %v2130, %v2403
      %v2405 = vrot.slane %v2404, 4
      %v2406 = vsel %vm731, 0, %v2405
      %v2408 = vunpack.c.l.s4 1934713408
      %v2409 = vunpack.c.0.s8 %v2408
      %v2410 = vperm.slane %v2404, %v2409
      %v2412 = vunpack.c.l.s4 1934713408
      %v2413 = vunpack.c.0.s8 %v2412
      %v2414 = vperm.slane %v2406, %v2413
      %v2415 = vrot.slane %v2410, 4
      %v2416 = vsel %vm731, 0, %v2415
      %v2417 = vrot.slane %v2414, 4
      %v2418 = vsel %vm731, 0, %v2417
      %v2421 = vunpack.c.l.s4 1983009808
      %v2422 = vunpack.c.0.s8 %v2421
      %v2423 = vperm.slane %v2133, %v2422
      %v2424 = vrot.slane %v2423, 4
      %v2425 = vsel %vm731, 0, %v2424
      %v2427 = vunpack.c.l.s4 1934713408
      %v2428 = vunpack.c.0.s8 %v2427
      %v2429 = vperm.slane %v2423, %v2428
      %v2431 = vunpack.c.l.s4 1934713408
      %v2432 = vunpack.c.0.s8 %v2431
      %v2433 = vperm.slane %v2425, %v2432
      %v2434 = vrot.slane %v2429, 4
      %v2435 = vsel %vm731, 0, %v2434
      %v2436 = vrot.slane %v2433, 4
      %v2437 = vsel %vm731, 0, %v2436
      %v2438 = vsel %vm731, %v2151, %v2144
      %v2440 = vunpack.c.l.s4 1983009808
      %v2441 = vunpack.c.0.s8 %v2440
      %v2442 = vperm.slane %v2438, %v2441
      %v2443 = vrot.slane %v2152, 4
      %v2444 = vsel %vm731, %v2443, %v2150
      %v2446 = vunpack.c.l.s4 1983009808
      %v2447 = vunpack.c.0.s8 %v2446
      %v2448 = vperm.slane %v2444, %v2447
      %v2449 = vrot.slane %v2448, 4
      %v2450 = vsel %vm731, %v2449, %v2442
      %v2452 = vunpack.c.l.s4 1934713408
      %v2453 = vunpack.c.0.s8 %v2452
      %v2454 = vperm.slane %v2450, %v2453
      %v2455 = vsel %vm731, %v2170, %v2163
      %v2457 = vunpack.c.l.s4 1983009808
      %v2458 = vunpack.c.0.s8 %v2457
      %v2459 = vperm.slane %v2455, %v2458
      %v2460 = vrot.slane %v2171, 4
      %v2461 = vsel %vm731, %v2460, %v2169
      %v2463 = vunpack.c.l.s4 1983009808
      %v2464 = vunpack.c.0.s8 %v2463
      %v2465 = vperm.slane %v2461, %v2464
      %v2466 = vrot.slane %v2465, 4
      %v2467 = vsel %vm731, %v2466, %v2459
      %v2469 = vunpack.c.l.s4 1934713408
      %v2470 = vunpack.c.0.s8 %v2469
      %v2471 = vperm.slane %v2467, %v2470
      %v2472 = vsel %vm731, %v2189, %v2182
      %v2474 = vunpack.c.l.s4 1983009808
      %v2475 = vunpack.c.0.s8 %v2474
      %v2476 = vperm.slane %v2472, %v2475
      %v2477 = vrot.slane %v2190, 4
      %v2478 = vsel %vm731, %v2477, %v2188
      %v2480 = vunpack.c.l.s4 1983009808
      %v2481 = vunpack.c.0.s8 %v2480
      %v2482 = vperm.slane %v2478, %v2481
      %v2483 = vrot.slane %v2482, 4
      %v2484 = vsel %vm731, %v2483, %v2476
      %v2486 = vunpack.c.l.s4 1934713408
      %v2487 = vunpack.c.0.s8 %v2486
      %v2488 = vperm.slane %v2484, %v2487
      %v2489 = vsel %vm731, %v2208, %v2201
      %v2491 = vunpack.c.l.s4 1983009808
      %v2492 = vunpack.c.0.s8 %v2491
      %v2493 = vperm.slane %v2489, %v2492
      %v2494 = vrot.slane %v2209, 4
      %v2495 = vsel %vm731, %v2494, %v2207
      %v2497 = vunpack.c.l.s4 1983009808
      %v2498 = vunpack.c.0.s8 %v2497
      %v2499 = vperm.slane %v2495, %v2498
      %v2500 = vrot.slane %v2499, 4
      %v2501 = vsel %vm731, %v2500, %v2493
      %v2503 = vunpack.c.l.s4 1934713408
      %v2504 = vunpack.c.0.s8 %v2503
      %v2505 = vperm.slane %v2501, %v2504
      %v2506 = vsel %vm731, %v2227, %v2220
      %v2508 = vunpack.c.l.s4 1983009808
      %v2509 = vunpack.c.0.s8 %v2508
      %v2510 = vperm.slane %v2506, %v2509
      %v2511 = vrot.slane %v2228, 4
      %v2512 = vsel %vm731, %v2511, %v2226
      %v2514 = vunpack.c.l.s4 1983009808
      %v2515 = vunpack.c.0.s8 %v2514
      %v2516 = vperm.slane %v2512, %v2515
      %v2517 = vrot.slane %v2516, 4
      %v2518 = vsel %vm731, %v2517, %v2510
      %v2520 = vunpack.c.l.s4 1934713408
      %v2521 = vunpack.c.0.s8 %v2520
      %v2522 = vperm.slane %v2518, %v2521
      %v2523 = vsel %vm731, %v2246, %v2239
      %v2525 = vunpack.c.l.s4 1983009808
      %v2526 = vunpack.c.0.s8 %v2525
      %v2527 = vperm.slane %v2523, %v2526
      %v2528 = vrot.slane %v2247, 4
      %v2529 = vsel %vm731, %v2528, %v2245
      %v2531 = vunpack.c.l.s4 1983009808
      %v2532 = vunpack.c.0.s8 %v2531
      %v2533 = vperm.slane %v2529, %v2532
      %v2534 = vrot.slane %v2533, 4
      %v2535 = vsel %vm731, %v2534, %v2527
      %v2537 = vunpack.c.l.s4 1934713408
      %v2538 = vunpack.c.0.s8 %v2537
      %v2539 = vperm.slane %v2535, %v2538
      %v2540 = vsel %vm731, %v2265, %v2258
      %v2542 = vunpack.c.l.s4 1983009808
      %v2543 = vunpack.c.0.s8 %v2542
      %v2544 = vperm.slane %v2540, %v2543
      %v2545 = vrot.slane %v2266, 4
      %v2546 = vsel %vm731, %v2545, %v2264
      %v2548 = vunpack.c.l.s4 1983009808
      %v2549 = vunpack.c.0.s8 %v2548
      %v2550 = vperm.slane %v2546, %v2549
      %v2551 = vrot.slane %v2550, 4
      %v2552 = vsel %vm731, %v2551, %v2544
      %v2554 = vunpack.c.l.s4 1934713408
      %v2555 = vunpack.c.0.s8 %v2554
      %v2556 = vperm.slane %v2552, %v2555
      %v2557 = vsel %vm731, %v2284, %v2277
      %v2559 = vunpack.c.l.s4 1983009808
      %v2560 = vunpack.c.0.s8 %v2559
      %v2561 = vperm.slane %v2557, %v2560
      %v2562 = vrot.slane %v2285, 4
      %v2563 = vsel %vm731, %v2562, %v2283
      %v2565 = vunpack.c.l.s4 1983009808
      %v2566 = vunpack.c.0.s8 %v2565
      %v2567 = vperm.slane %v2563, %v2566
      %v2568 = vrot.slane %v2567, 4
      %v2569 = vsel %vm731, %v2568, %v2561
      %v2571 = vunpack.c.l.s4 1934713408
      %v2572 = vunpack.c.0.s8 %v2571
      %v2573 = vperm.slane %v2569, %v2572
      %v2574 = vsel %vm731, %v2303, %v2296
      %v2576 = vunpack.c.l.s4 1983009808
      %v2577 = vunpack.c.0.s8 %v2576
      %v2578 = vperm.slane %v2574, %v2577
      %v2579 = vrot.slane %v2304, 4
      %v2580 = vsel %vm731, %v2579, %v2302
      %v2582 = vunpack.c.l.s4 1983009808
      %v2583 = vunpack.c.0.s8 %v2582
      %v2584 = vperm.slane %v2580, %v2583
      %v2585 = vrot.slane %v2584, 4
      %v2586 = vsel %vm731, %v2585, %v2578
      %v2588 = vunpack.c.l.s4 1934713408
      %v2589 = vunpack.c.0.s8 %v2588
      %v2590 = vperm.slane %v2586, %v2589
      %v2591 = vsel %vm731, %v2322, %v2315
      %v2593 = vunpack.c.l.s4 1983009808
      %v2594 = vunpack.c.0.s8 %v2593
      %v2595 = vperm.slane %v2591, %v2594
      %v2596 = vrot.slane %v2323, 4
      %v2597 = vsel %vm731, %v2596, %v2321
      %v2599 = vunpack.c.l.s4 1983009808
      %v2600 = vunpack.c.0.s8 %v2599
      %v2601 = vperm.slane %v2597, %v2600
      %v2602 = vrot.slane %v2601, 4
      %v2603 = vsel %vm731, %v2602, %v2595
      %v2605 = vunpack.c.l.s4 1934713408
      %v2606 = vunpack.c.0.s8 %v2605
      %v2607 = vperm.slane %v2603, %v2606
      %v2608 = vsel %vm731, %v2341, %v2334
      %v2610 = vunpack.c.l.s4 1983009808
      %v2611 = vunpack.c.0.s8 %v2610
      %v2612 = vperm.slane %v2608, %v2611
      %v2613 = vrot.slane %v2342, 4
      %v2614 = vsel %vm731, %v2613, %v2340
      %v2616 = vunpack.c.l.s4 1983009808
      %v2617 = vunpack.c.0.s8 %v2616
      %v2618 = vperm.slane %v2614, %v2617
      %v2619 = vrot.slane %v2618, 4
      %v2620 = vsel %vm731, %v2619, %v2612
      %v2622 = vunpack.c.l.s4 1934713408
      %v2623 = vunpack.c.0.s8 %v2622
      %v2624 = vperm.slane %v2620, %v2623
      %v2625 = vsel %vm731, %v2360, %v2353
      %v2627 = vunpack.c.l.s4 1983009808
      %v2628 = vunpack.c.0.s8 %v2627
      %v2629 = vperm.slane %v2625, %v2628
      %v2630 = vrot.slane %v2361, 4
      %v2631 = vsel %vm731, %v2630, %v2359
      %v2633 = vunpack.c.l.s4 1983009808
      %v2634 = vunpack.c.0.s8 %v2633
      %v2635 = vperm.slane %v2631, %v2634
      %v2636 = vrot.slane %v2635, 4
      %v2637 = vsel %vm731, %v2636, %v2629
      %v2639 = vunpack.c.l.s4 1934713408
      %v2640 = vunpack.c.0.s8 %v2639
      %v2641 = vperm.slane %v2637, %v2640
      %v2642 = vsel %vm731, %v2379, %v2372
      %v2644 = vunpack.c.l.s4 1983009808
      %v2645 = vunpack.c.0.s8 %v2644
      %v2646 = vperm.slane %v2642, %v2645
      %v2647 = vrot.slane %v2380, 4
      %v2648 = vsel %vm731, %v2647, %v2378
      %v2650 = vunpack.c.l.s4 1983009808
      %v2651 = vunpack.c.0.s8 %v2650
      %v2652 = vperm.slane %v2648, %v2651
      %v2653 = vrot.slane %v2652, 4
      %v2654 = vsel %vm731, %v2653, %v2646
      %v2656 = vunpack.c.l.s4 1934713408
      %v2657 = vunpack.c.0.s8 %v2656
      %v2658 = vperm.slane %v2654, %v2657
      %v2659 = vsel %vm731, %v2398, %v2391
      %v2661 = vunpack.c.l.s4 1983009808
      %v2662 = vunpack.c.0.s8 %v2661
      %v2663 = vperm.slane %v2659, %v2662
      %v2664 = vrot.slane %v2399, 4
      %v2665 = vsel %vm731, %v2664, %v2397
      %v2667 = vunpack.c.l.s4 1983009808
      %v2668 = vunpack.c.0.s8 %v2667
      %v2669 = vperm.slane %v2665, %v2668
      %v2670 = vrot.slane %v2669, 4
      %v2671 = vsel %vm731, %v2670, %v2663
      %v2673 = vunpack.c.l.s4 1934713408
      %v2674 = vunpack.c.0.s8 %v2673
      %v2675 = vperm.slane %v2671, %v2674
      %v2676 = vsel %vm731, %v2417, %v2410
      %v2678 = vunpack.c.l.s4 1983009808
      %v2679 = vunpack.c.0.s8 %v2678
      %v2680 = vperm.slane %v2676, %v2679
      %v2681 = vrot.slane %v2418, 4
      %v2682 = vsel %vm731, %v2681, %v2416
      %v2684 = vunpack.c.l.s4 1983009808
      %v2685 = vunpack.c.0.s8 %v2684
      %v2686 = vperm.slane %v2682, %v2685
      %v2687 = vrot.slane %v2686, 4
      %v2688 = vsel %vm731, %v2687, %v2680
      %v2690 = vunpack.c.l.s4 1934713408
      %v2691 = vunpack.c.0.s8 %v2690
      %v2692 = vperm.slane %v2688, %v2691
      %v2693 = vsel %vm731, %v2436, %v2429
      %v2695 = vunpack.c.l.s4 1983009808
      %v2696 = vunpack.c.0.s8 %v2695
      %v2697 = vperm.slane %v2693, %v2696
      %v2698 = vrot.slane %v2437, 4
      %v2699 = vsel %vm731, %v2698, %v2435
      %v2701 = vunpack.c.l.s4 1983009808
      %v2702 = vunpack.c.0.s8 %v2701
      %v2703 = vperm.slane %v2699, %v2702
      %v2704 = vrot.slane %v2703, 4
      %v2705 = vsel %vm731, %v2704, %v2697
      %v2707 = vunpack.c.l.s4 1934713408
      %v2708 = vunpack.c.0.s8 %v2707
      %v2709 = vperm.slane %v2705, %v2708
      %v2712 = vpack.i.b16 %v2471, %v2454
      %v2713 = vshrl.u32 %v2454, 16
      %v2714 = vshrl.u32 %v2471, 16
      %v2715 = vpack.i.b16 %v2714, %v2713
      %v2718 = vpack.i.b16 %v2505, %v2488
      %v2719 = vshrl.u32 %v2488, 16
      %v2720 = vshrl.u32 %v2505, 16
      %v2721 = vpack.i.b16 %v2720, %v2719
      %v2724 = vpack.i.b16 %v2539, %v2522
      %v2725 = vshrl.u32 %v2522, 16
      %v2726 = vshrl.u32 %v2539, 16
      %v2727 = vpack.i.b16 %v2726, %v2725
      %v2730 = vpack.i.b16 %v2573, %v2556
      %v2731 = vshrl.u32 %v2556, 16
      %v2732 = vshrl.u32 %v2573, 16
      %v2733 = vpack.i.b16 %v2732, %v2731
      %v2736 = vpack.i.b16 %v2607, %v2590
      %v2737 = vshrl.u32 %v2590, 16
      %v2738 = vshrl.u32 %v2607, 16
      %v2739 = vpack.i.b16 %v2738, %v2737
      %v2742 = vpack.i.b16 %v2641, %v2624
      %v2743 = vshrl.u32 %v2624, 16
      %v2744 = vshrl.u32 %v2641, 16
      %v2745 = vpack.i.b16 %v2744, %v2743
      %v2748 = vpack.i.b16 %v2675, %v2658
      %v2749 = vshrl.u32 %v2658, 16
      %v2750 = vshrl.u32 %v2675, 16
      %v2751 = vpack.i.b16 %v2750, %v2749
      %v2754 = vpack.i.b16 %v2709, %v2692
      %v2755 = vshrl.u32 %v2692, 16
      %v2756 = vshrl.u32 %v2709, 16
      %v2757 = vpack.i.b16 %v2756, %v2755
      %v2758 = vunpack.c.l.b16 %v1304
      %v2759 = vunpack.c.l.b16 %v1310
      %v2760 = vunpack.c.l.b16 %v1316
      %v2761 = vunpack.c.l.b16 %v1322
      %v2762 = vunpack.c.l.b16 %v1328
      %v2763 = vunpack.c.l.b16 %v1334
      %v2764 = vunpack.c.l.b16 %v1340
      %v2765 = vunpack.c.l.b16 %v1346
      %v2766 = vpack.c.b16 %v2759, %v2758
      %v2767 = vpack.c.b16 %v2761, %v2760
      %v2768 = vpack.c.b16 %v2763, %v2762
      %v2769 = vpack.c.b16 %v2765, %v2764
      %v2770 = vunpack.c.l.b16 %v2008
      %v2771 = vunpack.c.l.b16 %v2014
      %v2772 = vunpack.c.l.b16 %v2020
      %v2773 = vunpack.c.l.b16 %v2026
      %v2774 = vunpack.c.l.b16 %v2032
      %v2775 = vunpack.c.l.b16 %v2038
      %v2776 = vunpack.c.l.b16 %v2044
      %v2777 = vunpack.c.l.b16 %v2050
      %v2778 = vpack.c.b16 %v2771, %v2770
      %v2779 = vpack.c.b16 %v2773, %v2772
      %v2780 = vpack.c.b16 %v2775, %v2774
      %v2781 = vpack.c.b16 %v2777, %v2776
      %vm2782 = vcmask 130048
      %v2784 = vsel %vm2782, %v2766, 0
      %v2787 = vsel %vm2782, %v2767, 0
      %v2790 = vsel %vm2782, %v2768, 0
      %v2793 = vsel %vm2782, %v2769, 0
      %v2796 = vsel %vm2782, %v2778, 0
      %v2799 = vsel %vm2782, %v2779, 0
      %v2802 = vsel %vm2782, %v2780, 0
      %v2805 = vsel %vm2782, %v2781, 0
      %2807 = vmatpush.bf16.xpose.msra.mxu0 0
      %2808 = vmatpush.bf16.xpose.msra.mxu0 0
      %2809 = vmatpush.bf16.xpose.msra.mxu0 0
      %2810 = vmatpush.bf16.xpose.msra.mxu0 0
      %2811 = vmatpush.bf16.xpose.msra.mxu0 %v2805
      %2812 = vmatpush.bf16.xpose.msra.mxu0 %v2802
      %2813 = vmatpush.bf16.xpose.msra.mxu0 %v2799
      %2814 = vmatpush.bf16.xpose.msra.mxu0 %v2796
      %2815 = vmatmul.bf16.gmra.mxu0 %v2784
      %v2816 = vpop.f32.mrf.mxu0
      %v2817 = vadd.f32 0.0, %v2816
      %v2818 = vpop.f32.mrf.mxu0
      %v2819 = vadd.f32 0.0, %v2818
      %2820 = vmatmul.bf16.gmra.mxu0 %v2787
      %v2821 = vpop.f32.mrf.mxu0
      %v2822 = vadd.f32 0.0, %v2821
      %v2823 = vpop.f32.mrf.mxu0
      %v2824 = vadd.f32 0.0, %v2823
      %2825 = vmatmul.bf16.gmra.mxu0 %v2790
      %v2826 = vpop.f32.mrf.mxu0
      %v2827 = vadd.f32 0.0, %v2826
      %v2828 = vpop.f32.mrf.mxu0
      %v2829 = vadd.f32 0.0, %v2828
      %2830 = vmatmul.bf16.gmra.mxu0 %v2793
      %v2831 = vpop.f32.mrf.mxu0
      %v2832 = vadd.f32 0.0, %v2831
      %v2833 = vpop.f32.mrf.mxu0
      %v2834 = vadd.f32 0.0, %v2833
      %2835 = vdwg.mxu0
      %v2836 = vunpack.c.l.b16 %v1307
      %v2837 = vunpack.c.l.b16 %v1313
      %v2838 = vunpack.c.l.b16 %v1319
      %v2839 = vunpack.c.l.b16 %v1325
      %v2840 = vunpack.c.l.b16 %v1331
      %v2841 = vunpack.c.l.b16 %v1337
      %v2842 = vunpack.c.l.b16 %v1343
      %v2843 = vunpack.c.l.b16 %v1349
      %v2844 = vpack.c.b16 %v2837, %v2836
      %v2845 = vpack.c.b16 %v2839, %v2838
      %v2846 = vpack.c.b16 %v2841, %v2840
      %v2847 = vpack.c.b16 %v2843, %v2842
      %v2848 = vunpack.c.l.b16 %v2011
      %v2849 = vunpack.c.l.b16 %v2017
      %v2850 = vunpack.c.l.b16 %v2023
      %v2851 = vunpack.c.l.b16 %v2029
      %v2852 = vunpack.c.l.b16 %v2035
      %v2853 = vunpack.c.l.b16 %v2041
      %v2854 = vunpack.c.l.b16 %v2047
      %v2855 = vunpack.c.l.b16 %v2053
      %v2856 = vpack.c.b16 %v2849, %v2848
      %v2857 = vpack.c.b16 %v2851, %v2850
      %v2858 = vpack.c.b16 %v2853, %v2852
      %v2859 = vpack.c.b16 %v2855, %v2854
      %v2861 = vsel %vm2782, %v2844, 0
      %v2864 = vsel %vm2782, %v2845, 0
      %v2867 = vsel %vm2782, %v2846, 0
      %v2870 = vsel %vm2782, %v2847, 0
      %v2873 = vsel %vm2782, %v2856, 0
      %v2876 = vsel %vm2782, %v2857, 0
      %v2879 = vsel %vm2782, %v2858, 0
      %v2882 = vsel %vm2782, %v2859, 0
      %2884 = vmatpush.bf16.xpose.msra.mxu0 0
      %2885 = vmatpush.bf16.xpose.msra.mxu0 0
      %2886 = vmatpush.bf16.xpose.msra.mxu0 0
      %2887 = vmatpush.bf16.xpose.msra.mxu0 0
      %2888 = vmatpush.bf16.xpose.msra.mxu0 %v2882
      %2889 = vmatpush.bf16.xpose.msra.mxu0 %v2879
      %2890 = vmatpush.bf16.xpose.msra.mxu0 %v2876
      %2891 = vmatpush.bf16.xpose.msra.mxu0 %v2873
      %2892 = vmatmul.bf16.gmra.mxu0 %v2861
      %v2893 = vpop.f32.mrf.mxu0
      %v2894 = vadd.f32 0.0, %v2893
      %v2895 = vpop.f32.mrf.mxu0
      %v2896 = vadd.f32 0.0, %v2895
      %2897 = vmatmul.bf16.gmra.mxu0 %v2864
      %v2898 = vpop.f32.mrf.mxu0
      %v2899 = vadd.f32 0.0, %v2898
      %v2900 = vpop.f32.mrf.mxu0
      %v2901 = vadd.f32 0.0, %v2900
      %2902 = vmatmul.bf16.gmra.mxu0 %v2867
      %v2903 = vpop.f32.mrf.mxu0
      %v2904 = vadd.f32 0.0, %v2903
      %v2905 = vpop.f32.mrf.mxu0
      %v2906 = vadd.f32 0.0, %v2905
      %2907 = vmatmul.bf16.gmra.mxu0 %v2870
      %v2908 = vpop.f32.mrf.mxu0
      %v2909 = vadd.f32 0.0, %v2908
      %v2910 = vpop.f32.mrf.mxu0
      %v2911 = vadd.f32 0.0, %v2910
      %2912 = vdwg.mxu0
      %vm2913 = vcmask 523264
      %v2914 = vsel %vm2913, %v2817, -inf
      %2915 = vmax.xlane.f32.xlu0 %v2914
      %v2916 = vpop.xlane.xlu0 %2915
      %v2917 = vsel %vm2913, %v2819, -inf
      %2918 = vmax.xlane.f32.xlu0 %v2917
      %v2919 = vpop.xlane.xlu0 %2918
      %v2920 = vsel %vm2913, %v2822, -inf
      %2921 = vmax.xlane.f32.xlu0 %v2920
      %v2922 = vpop.xlane.xlu0 %2921
      %v2923 = vsel %vm2913, %v2824, -inf
      %2924 = vmax.xlane.f32.xlu0 %v2923
      %v2925 = vpop.xlane.xlu0 %2924
      %v2926 = vsel %vm2913, %v2827, -inf
      %2927 = vmax.xlane.f32.xlu0 %v2926
      %v2928 = vpop.xlane.xlu0 %2927
      %v2929 = vsel %vm2913, %v2829, -inf
      %2930 = vmax.xlane.f32.xlu0 %v2929
      %v2931 = vpop.xlane.xlu0 %2930
      %v2932 = vsel %vm2913, %v2832, -inf
      %2933 = vmax.xlane.f32.xlu0 %v2932
      %v2934 = vpop.xlane.xlu0 %2933
      %v2935 = vsel %vm2913, %v2834, -inf
      %2936 = vmax.xlane.f32.xlu0 %v2935
      %v2937 = vpop.xlane.xlu0 %2936
      %v2938 = vsel %vm2913, %v2894, -inf
      %2939 = vmax.xlane.f32.xlu0 %v2938
      %v2940 = vpop.xlane.xlu0 %2939
      %v2941 = vsel %vm2913, %v2896, -inf
      %2942 = vmax.xlane.f32.xlu0 %v2941
      %v2943 = vpop.xlane.xlu0 %2942
      %v2944 = vsel %vm2913, %v2899, -inf
      %2945 = vmax.xlane.f32.xlu0 %v2944
      %v2946 = vpop.xlane.xlu0 %2945
      %v2947 = vsel %vm2913, %v2901, -inf
      %2948 = vmax.xlane.f32.xlu0 %v2947
      %v2949 = vpop.xlane.xlu0 %2948
      %v2950 = vsel %vm2913, %v2904, -inf
      %2951 = vmax.xlane.f32.xlu0 %v2950
      %v2952 = vpop.xlane.xlu0 %2951
      %v2953 = vsel %vm2913, %v2906, -inf
      %2954 = vmax.xlane.f32.xlu0 %v2953
      %v2955 = vpop.xlane.xlu0 %2954
      %v2956 = vsel %vm2913, %v2909, -inf
      %2957 = vmax.xlane.f32.xlu0 %v2956
      %v2958 = vpop.xlane.xlu0 %2957
      %v2959 = vsel %vm2913, %v2911, -inf
      %2960 = vmax.xlane.f32.xlu0 %v2959
      %v2961 = vpop.xlane.xlu0 %2960
      %v2962 = vsub.f32 %v2817, %v2916
      %v2963 = vsub.f32 %v2819, %v2919
      %v2964 = vsub.f32 %v2822, %v2922
      %v2965 = vsub.f32 %v2824, %v2925
      %v2966 = vsub.f32 %v2827, %v2928
      %v2967 = vsub.f32 %v2829, %v2931
      %v2968 = vsub.f32 %v2832, %v2934
      %v2969 = vsub.f32 %v2834, %v2937
      %v2970 = vsub.f32 %v2894, %v2940
      %v2971 = vsub.f32 %v2896, %v2943
      %v2972 = vsub.f32 %v2899, %v2946
      %v2973 = vsub.f32 %v2901, %v2949
      %v2974 = vsub.f32 %v2904, %v2952
      %v2975 = vsub.f32 %v2906, %v2955
      %v2976 = vsub.f32 %v2909, %v2958
      %v2977 = vsub.f32 %v2911, %v2961
      %v2978 = vmul.f32 %v2962, 1.442695
      %v2979 = vpow.pop %v2978
      %v2980 = vmul.f32 %v2963, 1.442695
      %v2981 = vpow.pop %v2980
      %v2982 = vmul.f32 %v2964, 1.442695
      %v2983 = vpow.pop %v2982
      %v2984 = vmul.f32 %v2965, 1.442695
      %v2985 = vpow.pop %v2984
      %v2986 = vmul.f32 %v2966, 1.442695
      %v2987 = vpow.pop %v2986
      %v2988 = vmul.f32 %v2967, 1.442695
      %v2989 = vpow.pop %v2988
      %v2990 = vmul.f32 %v2968, 1.442695
      %v2991 = vpow.pop %v2990
      %v2992 = vmul.f32 %v2969, 1.442695
      %v2993 = vpow.pop %v2992
      %v2994 = vmul.f32 %v2970, 1.442695
      %v2995 = vpow.pop %v2994
      %v2996 = vmul.f32 %v2971, 1.442695
      %v2997 = vpow.pop %v2996
      %v2998 = vmul.f32 %v2972, 1.442695
      %v2999 = vpow.pop %v2998
      %v3000 = vmul.f32 %v2973, 1.442695
      %v3001 = vpow.pop %v3000
      %v3002 = vmul.f32 %v2974, 1.442695
      %v3003 = vpow.pop %v3002
      %v3004 = vmul.f32 %v2975, 1.442695
      %v3005 = vpow.pop %v3004
      %v3006 = vmul.f32 %v2976, 1.442695
      %v3007 = vpow.pop %v3006
      %v3008 = vmul.f32 %v2977, 1.442695
      %v3009 = vpow.pop %v3008
      %v3010 = vsel %vm2913, %v2979, 0.0
      %3011 = vadd.xlane.f32.xlu0 %v3010
      %v3012 = vpop.xlane.xlu0 %3011
      %v3013 = vsel %vm2913, %v2981, 0.0
      %3014 = vadd.xlane.f32.xlu0 %v3013
      %v3015 = vpop.xlane.xlu0 %3014
      %v3016 = vsel %vm2913, %v2983, 0.0
      %3017 = vadd.xlane.f32.xlu0 %v3016
      %v3018 = vpop.xlane.xlu0 %3017
      %v3019 = vsel %vm2913, %v2985, 0.0
      %3020 = vadd.xlane.f32.xlu0 %v3019
      %v3021 = vpop.xlane.xlu0 %3020
      %v3022 = vsel %vm2913, %v2987, 0.0
      %3023 = vadd.xlane.f32.xlu0 %v3022
      %v3024 = vpop.xlane.xlu0 %3023
      %v3025 = vsel %vm2913, %v2989, 0.0
      %3026 = vadd.xlane.f32.xlu0 %v3025
      %v3027 = vpop.xlane.xlu0 %3026
      %v3028 = vsel %vm2913, %v2991, 0.0
      %3029 = vadd.xlane.f32.xlu0 %v3028
      %v3030 = vpop.xlane.xlu0 %3029
      %v3031 = vsel %vm2913, %v2993, 0.0
      %3032 = vadd.xlane.f32.xlu0 %v3031
      %v3033 = vpop.xlane.xlu0 %3032
      %v3034 = vsel %vm2913, %v2995, 0.0
      %3035 = vadd.xlane.f32.xlu0 %v3034
      %v3036 = vpop.xlane.xlu0 %3035
      %v3037 = vsel %vm2913, %v2997, 0.0
      %3038 = vadd.xlane.f32.xlu0 %v3037
      %v3039 = vpop.xlane.xlu0 %3038
      %v3040 = vsel %vm2913, %v2999, 0.0
      %3041 = vadd.xlane.f32.xlu0 %v3040
      %v3042 = vpop.xlane.xlu0 %3041
      %v3043 = vsel %vm2913, %v3001, 0.0
      %3044 = vadd.xlane.f32.xlu0 %v3043
      %v3045 = vpop.xlane.xlu0 %3044
      %v3046 = vsel %vm2913, %v3003, 0.0
      %3047 = vadd.xlane.f32.xlu0 %v3046
      %v3048 = vpop.xlane.xlu0 %3047
      %v3049 = vsel %vm2913, %v3005, 0.0
      %3050 = vadd.xlane.f32.xlu0 %v3049
      %v3051 = vpop.xlane.xlu0 %3050
      %v3052 = vsel %vm2913, %v3007, 0.0
      %3053 = vadd.xlane.f32.xlu0 %v3052
      %v3054 = vpop.xlane.xlu0 %3053
      %v3055 = vsel %vm2913, %v3009, 0.0
      %3056 = vadd.xlane.f32.xlu0 %v3055
      %v3057 = vpop.xlane.xlu0 %3056
      %v3058 = vrcp.pop %v3012
      %v3059 = vrcp.pop %v3015
      %v3060 = vrcp.pop %v3018
      %v3061 = vrcp.pop %v3021
      %v3062 = vrcp.pop %v3024
      %v3063 = vrcp.pop %v3027
      %v3064 = vrcp.pop %v3030
      %v3065 = vrcp.pop %v3033
      %v3066 = vrcp.pop %v3036
      %v3067 = vrcp.pop %v3039
      %v3068 = vrcp.pop %v3042
      %v3069 = vrcp.pop %v3045
      %v3070 = vrcp.pop %v3048
      %v3071 = vrcp.pop %v3051
      %v3072 = vrcp.pop %v3054
      %v3073 = vrcp.pop %v3057
      %v3074 = vmul.f32 %v2979, %v3058
      %v3075 = vmul.f32 %v2981, %v3059
      %v3076 = vmul.f32 %v2983, %v3060
      %v3077 = vmul.f32 %v2985, %v3061
      %v3078 = vmul.f32 %v2987, %v3062
      %v3079 = vmul.f32 %v2989, %v3063
      %v3080 = vmul.f32 %v2991, %v3064
      %v3081 = vmul.f32 %v2993, %v3065
      %v3082 = vmul.f32 %v2995, %v3066
      %v3083 = vmul.f32 %v2997, %v3067
      %v3084 = vmul.f32 %v2999, %v3068
      %v3085 = vmul.f32 %v3001, %v3069
      %v3086 = vmul.f32 %v3003, %v3070
      %v3087 = vmul.f32 %v3005, %v3071
      %v3088 = vmul.f32 %v3007, %v3072
      %v3089 = vmul.f32 %v3009, %v3073
      %v3090 = vpack.c.bf16 %v3074, %v3074
      %v3091 = vpack.c.bf16 %v3075, %v3075
      %v3092 = vpack.c.bf16 %v3076, %v3076
      %v3093 = vpack.c.bf16 %v3077, %v3077
      %v3094 = vpack.c.bf16 %v3078, %v3078
      %v3095 = vpack.c.bf16 %v3079, %v3079
      %v3096 = vpack.c.bf16 %v3080, %v3080
      %v3097 = vpack.c.bf16 %v3081, %v3081
      %v3098 = vpack.c.bf16 %v3082, %v3082
      %v3099 = vpack.c.bf16 %v3083, %v3083
      %v3100 = vpack.c.bf16 %v3084, %v3084
      %v3101 = vpack.c.bf16 %v3085, %v3085
      %v3102 = vpack.c.bf16 %v3086, %v3086
      %v3103 = vpack.c.bf16 %v3087, %v3087
      %v3104 = vpack.c.bf16 %v3088, %v3088
      %v3105 = vpack.c.bf16 %v3089, %v3089
      %v3114 = vunpack.c.l.b16 %v3090
      %v3115 = vunpack.c.l.b16 %v3091
      %v3116 = vunpack.c.l.b16 %v3092
      %v3117 = vunpack.c.l.b16 %v3093
      %v3118 = vunpack.c.l.b16 %v3094
      %v3119 = vunpack.c.l.b16 %v3095
      %v3120 = vunpack.c.l.b16 %v3096
      %v3121 = vunpack.c.l.b16 %v3097
      %v3122 = vpack.c.b16 %v3115, %v3114
      %v3123 = vpack.c.b16 %v3117, %v3116
      %v3124 = vpack.c.b16 %v3119, %v3118
      %v3125 = vpack.c.b16 %v3121, %v3120
      %v3126 = vunpack.c.l.b16 %v2712
      %v3127 = vunpack.c.l.b16 %v2718
      %v3128 = vunpack.c.l.b16 %v2724
      %v3129 = vunpack.c.l.b16 %v2730
      %v3130 = vunpack.c.l.b16 %v2736
      %v3131 = vunpack.c.l.b16 %v2742
      %v3132 = vunpack.c.l.b16 %v2748
      %v3133 = vunpack.c.l.b16 %v2754
      %v3134 = vpack.c.b16 %v3127, %v3126
      %v3135 = vpack.c.b16 %v3129, %v3128
      %v3136 = vpack.c.b16 %v3131, %v3130
      %v3137 = vpack.c.b16 %v3133, %v3132
      %v3143 = vsel %vm2913, %v3122, 0
      %v3146 = vsel %vm2913, %v3123, 0
      %v3149 = vsel %vm2913, %v3124, 0
      %v3152 = vsel %vm2913, %v3125, 0
      %3154 = vmatpush.bf16.msra.mxu0 0
      %3155 = vmatpush.bf16.msra.mxu0 0
      %3156 = vmatpush.bf16.msra.mxu0 0
      %3157 = vmatpush.bf16.msra.mxu0 0
      %3158 = vmatpush.bf16.msra.mxu0 %v3137
      %3159 = vmatpush.bf16.msra.mxu0 %v3136
      %3160 = vmatpush.bf16.msra.mxu0 %v3135
      %3161 = vmatpush.bf16.msra.mxu0 %v3134
      %3162 = vmatmul.bf16.gmra.mxu0 %v3143
      %v3163 = vpop.f32.mrf.mxu0
      %v3164 = vadd.f32 0.0, %v3163
      %v3165 = vpop.f32.mrf.mxu0
      %v3166 = vadd.f32 0.0, %v3165
      %3167 = vmatmul.bf16.gmra.mxu0 %v3146
      %v3168 = vpop.f32.mrf.mxu0
      %v3169 = vadd.f32 0.0, %v3168
      %v3170 = vpop.f32.mrf.mxu0
      %v3171 = vadd.f32 0.0, %v3170
      %3172 = vmatmul.bf16.gmra.mxu0 %v3149
      %v3173 = vpop.f32.mrf.mxu0
      %v3174 = vadd.f32 0.0, %v3173
      %v3175 = vpop.f32.mrf.mxu0
      %v3176 = vadd.f32 0.0, %v3175
      %3177 = vmatmul.bf16.gmra.mxu0 %v3152
      %v3178 = vpop.f32.mrf.mxu0
      %v3179 = vadd.f32 0.0, %v3178
      %v3180 = vpop.f32.mrf.mxu0
      %v3181 = vadd.f32 0.0, %v3180
      %3182 = vdwg.mxu0
      %v3191 = vunpack.c.l.b16 %v3098
      %v3192 = vunpack.c.l.b16 %v3099
      %v3193 = vunpack.c.l.b16 %v3100
      %v3194 = vunpack.c.l.b16 %v3101
      %v3195 = vunpack.c.l.b16 %v3102
      %v3196 = vunpack.c.l.b16 %v3103
      %v3197 = vunpack.c.l.b16 %v3104
      %v3198 = vunpack.c.l.b16 %v3105
      %v3199 = vpack.c.b16 %v3192, %v3191
      %v3200 = vpack.c.b16 %v3194, %v3193
      %v3201 = vpack.c.b16 %v3196, %v3195
      %v3202 = vpack.c.b16 %v3198, %v3197
      %v3203 = vunpack.c.l.b16 %v2715
      %v3204 = vunpack.c.l.b16 %v2721
      %v3205 = vunpack.c.l.b16 %v2727
      %v3206 = vunpack.c.l.b16 %v2733
      %v3207 = vunpack.c.l.b16 %v2739
      %v3208 = vunpack.c.l.b16 %v2745
      %v3209 = vunpack.c.l.b16 %v2751
      %v3210 = vunpack.c.l.b16 %v2757
      %v3211 = vpack.c.b16 %v3204, %v3203
      %v3212 = vpack.c.b16 %v3206, %v3205
      %v3213 = vpack.c.b16 %v3208, %v3207
      %v3214 = vpack.c.b16 %v3210, %v3209
      %v3220 = vsel %vm2913, %v3199, 0
      %v3223 = vsel %vm2913, %v3200, 0
      %v3226 = vsel %vm2913, %v3201, 0
      %v3229 = vsel %vm2913, %v3202, 0
      %3231 = vmatpush.bf16.msra.mxu0 0
      %3232 = vmatpush.bf16.msra.mxu0 0
      %3233 = vmatpush.bf16.msra.mxu0 0
      %3234 = vmatpush.bf16.msra.mxu0 0
      %3235 = vmatpush.bf16.msra.mxu0 %v3214
      %3236 = vmatpush.bf16.msra.mxu0 %v3213
      %3237 = vmatpush.bf16.msra.mxu0 %v3212
      %3238 = vmatpush.bf16.msra.mxu0 %v3211
      %3239 = vmatmul.bf16.gmra.mxu0 %v3220
      %v3240 = vpop.f32.mrf.mxu0
      %v3241 = vadd.f32 0.0, %v3240
      %v3242 = vpop.f32.mrf.mxu0
      %v3243 = vadd.f32 0.0, %v3242
      %3244 = vmatmul.bf16.gmra.mxu0 %v3223
      %v3245 = vpop.f32.mrf.mxu0
      %v3246 = vadd.f32 0.0, %v3245
      %v3247 = vpop.f32.mrf.mxu0
      %v3248 = vadd.f32 0.0, %v3247
      %3249 = vmatmul.bf16.gmra.mxu0 %v3226
      %v3250 = vpop.f32.mrf.mxu0
      %v3251 = vadd.f32 0.0, %v3250
      %v3252 = vpop.f32.mrf.mxu0
      %v3253 = vadd.f32 0.0, %v3252
      %3254 = vmatmul.bf16.gmra.mxu0 %v3229
      %v3255 = vpop.f32.mrf.mxu0
      %v3256 = vadd.f32 0.0, %v3255
      %v3257 = vpop.f32.mrf.mxu0
      %v3258 = vadd.f32 0.0, %v3257
      %3259 = vdwg.mxu0
      %v3260 = vrot.slane %v3164, 4
      %vm3261 = vcmask 1047556
      %v3262 = vsel %vm3261, 0.0, %v3260
      %v3264 = vunpack.c.l.s4 1983009808
      %v3265 = vunpack.c.0.s8 %v3264
      %v3266 = vperm.slane %v3164, %v3265
      %v3268 = vunpack.c.l.s4 1983009808
      %v3269 = vunpack.c.0.s8 %v3268
      %v3270 = vperm.slane %v3262, %v3269
      %v3271 = vrot.slane %v3241, 4
      %v3272 = vsel %vm3261, 0.0, %v3271
      %v3274 = vunpack.c.l.s4 1983009808
      %v3275 = vunpack.c.0.s8 %v3274
      %v3276 = vperm.slane %v3241, %v3275
      %v3278 = vunpack.c.l.s4 1983009808
      %v3279 = vunpack.c.0.s8 %v3278
      %v3280 = vperm.slane %v3272, %v3279
      %v3281 = vrot.slane %v3276, 4
      %v3282 = vsel %vm3261, %v3281, %v3266
      %v3283 = vrot.slane %v3266, 4
      %v3284 = vsel %vm3261, %v3276, %v3283
      %v3286 = vunpack.c.l.s4 1934713408
      %v3287 = vunpack.c.0.s8 %v3286
      %v3288 = vperm.slane %v3282, %v3287
      %v3290 = vunpack.c.l.s4 1934713408
      %v3291 = vunpack.c.0.s8 %v3290
      %v3292 = vperm.slane %v3284, %v3291
      %v3293 = vrot.slane %v3280, 4
      %v3294 = vsel %vm3261, %v3293, %v3270
      %v3295 = vrot.slane %v3270, 4
      %v3296 = vsel %vm3261, %v3280, %v3295
      %v3298 = vunpack.c.l.s4 1934713408
      %v3299 = vunpack.c.0.s8 %v3298
      %v3300 = vperm.slane %v3294, %v3299
      %v3302 = vunpack.c.l.s4 1934713408
      %v3303 = vunpack.c.0.s8 %v3302
      %v3304 = vperm.slane %v3296, %v3303
      %v3305 = vrot.slane %v3288, 4
      %v3306 = vsel %vm3261, 0.0, %v3305
      %v3307 = vrot.slane %v3292, 4
      %v3308 = vsel %vm3261, 0.0, %v3307
      %v3309 = vrot.slane %v3300, 4
      %v3310 = vsel %vm3261, 0.0, %v3309
      %v3311 = vrot.slane %v3304, 4
      %v3312 = vsel %vm3261, 0.0, %v3311
      %v3313 = vrot.slane %v3166, 4
      %v3314 = vsel %vm3261, 0.0, %v3313
      %v3316 = vunpack.c.l.s4 1983009808
      %v3317 = vunpack.c.0.s8 %v3316
      %v3318 = vperm.slane %v3166, %v3317
      %v3320 = vunpack.c.l.s4 1983009808
      %v3321 = vunpack.c.0.s8 %v3320
      %v3322 = vperm.slane %v3314, %v3321
      %v3323 = vrot.slane %v3243, 4
      %v3324 = vsel %vm3261, 0.0, %v3323
      %v3326 = vunpack.c.l.s4 1983009808
      %v3327 = vunpack.c.0.s8 %v3326
      %v3328 = vperm.slane %v3243, %v3327
      %v3330 = vunpack.c.l.s4 1983009808
      %v3331 = vunpack.c.0.s8 %v3330
      %v3332 = vperm.slane %v3324, %v3331
      %v3333 = vrot.slane %v3328, 4
      %v3334 = vsel %vm3261, %v3333, %v3318
      %v3335 = vrot.slane %v3318, 4
      %v3336 = vsel %vm3261, %v3328, %v3335
      %v3338 = vunpack.c.l.s4 1934713408
      %v3339 = vunpack.c.0.s8 %v3338
      %v3340 = vperm.slane %v3334, %v3339
      %v3342 = vunpack.c.l.s4 1934713408
      %v3343 = vunpack.c.0.s8 %v3342
      %v3344 = vperm.slane %v3336, %v3343
      %v3345 = vrot.slane %v3332, 4
      %v3346 = vsel %vm3261, %v3345, %v3322
      %v3347 = vrot.slane %v3322, 4
      %v3348 = vsel %vm3261, %v3332, %v3347
      %v3350 = vunpack.c.l.s4 1934713408
      %v3351 = vunpack.c.0.s8 %v3350
      %v3352 = vperm.slane %v3346, %v3351
      %v3354 = vunpack.c.l.s4 1934713408
      %v3355 = vunpack.c.0.s8 %v3354
      %v3356 = vperm.slane %v3348, %v3355
      %v3357 = vrot.slane %v3340, 4
      %v3358 = vsel %vm3261, 0.0, %v3357
      %v3359 = vrot.slane %v3344, 4
      %v3360 = vsel %vm3261, 0.0, %v3359
      %v3361 = vrot.slane %v3352, 4
      %v3362 = vsel %vm3261, 0.0, %v3361
      %v3363 = vrot.slane %v3356, 4
      %v3364 = vsel %vm3261, 0.0, %v3363
      %v3365 = vrot.slane %v3169, 4
      %v3366 = vsel %vm3261, 0.0, %v3365
      %v3368 = vunpack.c.l.s4 1983009808
      %v3369 = vunpack.c.0.s8 %v3368
      %v3370 = vperm.slane %v3169, %v3369
      %v3372 = vunpack.c.l.s4 1983009808
      %v3373 = vunpack.c.0.s8 %v3372
      %v3374 = vperm.slane %v3366, %v3373
      %v3375 = vrot.slane %v3246, 4
      %v3376 = vsel %vm3261, 0.0, %v3375
      %v3378 = vunpack.c.l.s4 1983009808
      %v3379 = vunpack.c.0.s8 %v3378
      %v3380 = vperm.slane %v3246, %v3379
      %v3382 = vunpack.c.l.s4 1983009808
      %v3383 = vunpack.c.0.s8 %v3382
      %v3384 = vperm.slane %v3376, %v3383
      %v3385 = vrot.slane %v3380, 4
      %v3386 = vsel %vm3261, %v3385, %v3370
      %v3387 = vrot.slane %v3370, 4
      %v3388 = vsel %vm3261, %v3380, %v3387
      %v3390 = vunpack.c.l.s4 1934713408
      %v3391 = vunpack.c.0.s8 %v3390
      %v3392 = vperm.slane %v3386, %v3391
      %v3394 = vunpack.c.l.s4 1934713408
      %v3395 = vunpack.c.0.s8 %v3394
      %v3396 = vperm.slane %v3388, %v3395
      %v3397 = vrot.slane %v3384, 4
      %v3398 = vsel %vm3261, %v3397, %v3374
      %v3399 = vrot.slane %v3374, 4
      %v3400 = vsel %vm3261, %v3384, %v3399
      %v3402 = vunpack.c.l.s4 1934713408
      %v3403 = vunpack.c.0.s8 %v3402
      %v3404 = vperm.slane %v3398, %v3403
      %v3406 = vunpack.c.l.s4 1934713408
      %v3407 = vunpack.c.0.s8 %v3406
      %v3408 = vperm.slane %v3400, %v3407
      %v3409 = vrot.slane %v3392, 4
      %v3410 = vsel %vm3261, 0.0, %v3409
      %v3411 = vrot.slane %v3396, 4
      %v3412 = vsel %vm3261, 0.0, %v3411
      %v3413 = vrot.slane %v3404, 4
      %v3414 = vsel %vm3261, 0.0, %v3413
      %v3415 = vrot.slane %v3408, 4
      %v3416 = vsel %vm3261, 0.0, %v3415
      %v3417 = vrot.slane %v3171, 4
      %v3418 = vsel %vm3261, 0.0, %v3417
      %v3420 = vunpack.c.l.s4 1983009808
      %v3421 = vunpack.c.0.s8 %v3420
      %v3422 = vperm.slane %v3171, %v3421
      %v3424 = vunpack.c.l.s4 1983009808
      %v3425 = vunpack.c.0.s8 %v3424
      %v3426 = vperm.slane %v3418, %v3425
      %v3427 = vrot.slane %v3248, 4
      %v3428 = vsel %vm3261, 0.0, %v3427
      %v3430 = vunpack.c.l.s4 1983009808
      %v3431 = vunpack.c.0.s8 %v3430
      %v3432 = vperm.slane %v3248, %v3431
      %v3434 = vunpack.c.l.s4 1983009808
      %v3435 = vunpack.c.0.s8 %v3434
      %v3436 = vperm.slane %v3428, %v3435
      %v3437 = vrot.slane %v3432, 4
      %v3438 = vsel %vm3261, %v3437, %v3422
      %v3439 = vrot.slane %v3422, 4
      %v3440 = vsel %vm3261, %v3432, %v3439
      %v3442 = vunpack.c.l.s4 1934713408
      %v3443 = vunpack.c.0.s8 %v3442
      %v3444 = vperm.slane %v3438, %v3443
      %v3446 = vunpack.c.l.s4 1934713408
      %v3447 = vunpack.c.0.s8 %v3446
      %v3448 = vperm.slane %v3440, %v3447
      %v3449 = vrot.slane %v3436, 4
      %v3450 = vsel %vm3261, %v3449, %v3426
      %v3451 = vrot.slane %v3426, 4
      %v3452 = vsel %vm3261, %v3436, %v3451
      %v3454 = vunpack.c.l.s4 1934713408
      %v3455 = vunpack.c.0.s8 %v3454
      %v3456 = vperm.slane %v3450, %v3455
      %v3458 = vunpack.c.l.s4 1934713408
      %v3459 = vunpack.c.0.s8 %v3458
      %v3460 = vperm.slane %v3452, %v3459
      %v3461 = vrot.slane %v3444, 4
      %v3462 = vsel %vm3261, 0.0, %v3461
      %v3463 = vrot.slane %v3448, 4
      %v3464 = vsel %vm3261, 0.0, %v3463
      %v3465 = vrot.slane %v3456, 4
      %v3466 = vsel %vm3261, 0.0, %v3465
      %v3467 = vrot.slane %v3460, 4
      %v3468 = vsel %vm3261, 0.0, %v3467
      %v3469 = vrot.slane %v3174, 4
      %v3470 = vsel %vm3261, 0.0, %v3469
      %v3472 = vunpack.c.l.s4 1983009808
      %v3473 = vunpack.c.0.s8 %v3472
      %v3474 = vperm.slane %v3174, %v3473
      %v3476 = vunpack.c.l.s4 1983009808
      %v3477 = vunpack.c.0.s8 %v3476
      %v3478 = vperm.slane %v3470, %v3477
      %v3479 = vrot.slane %v3251, 4
      %v3480 = vsel %vm3261, 0.0, %v3479
      %v3482 = vunpack.c.l.s4 1983009808
      %v3483 = vunpack.c.0.s8 %v3482
      %v3484 = vperm.slane %v3251, %v3483
      %v3486 = vunpack.c.l.s4 1983009808
      %v3487 = vunpack.c.0.s8 %v3486
      %v3488 = vperm.slane %v3480, %v3487
      %v3489 = vrot.slane %v3484, 4
      %v3490 = vsel %vm3261, %v3489, %v3474
      %v3491 = vrot.slane %v3474, 4
      %v3492 = vsel %vm3261, %v3484, %v3491
      %v3494 = vunpack.c.l.s4 1934713408
      %v3495 = vunpack.c.0.s8 %v3494
      %v3496 = vperm.slane %v3490, %v3495
      %v3498 = vunpack.c.l.s4 1934713408
      %v3499 = vunpack.c.0.s8 %v3498
      %v3500 = vperm.slane %v3492, %v3499
      %v3501 = vrot.slane %v3488, 4
      %v3502 = vsel %vm3261, %v3501, %v3478
      %v3503 = vrot.slane %v3478, 4
      %v3504 = vsel %vm3261, %v3488, %v3503
      %v3506 = vunpack.c.l.s4 1934713408
      %v3507 = vunpack.c.0.s8 %v3506
      %v3508 = vperm.slane %v3502, %v3507
      %v3510 = vunpack.c.l.s4 1934713408
      %v3511 = vunpack.c.0.s8 %v3510
      %v3512 = vperm.slane %v3504, %v3511
      %v3513 = vrot.slane %v3496, 4
      %v3514 = vsel %vm3261, 0.0, %v3513
      %v3515 = vrot.slane %v3500, 4
      %v3516 = vsel %vm3261, 0.0, %v3515
      %v3517 = vrot.slane %v3508, 4
      %v3518 = vsel %vm3261, 0.0, %v3517
      %v3519 = vrot.slane %v3512, 4
      %v3520 = vsel %vm3261, 0.0, %v3519
      %v3521 = vrot.slane %v3176, 4
      %v3522 = vsel %vm3261, 0.0, %v3521
      %v3524 = vunpack.c.l.s4 1983009808
      %v3525 = vunpack.c.0.s8 %v3524
      %v3526 = vperm.slane %v3176, %v3525
      %v3528 = vunpack.c.l.s4 1983009808
      %v3529 = vunpack.c.0.s8 %v3528
      %v3530 = vperm.slane %v3522, %v3529
      %v3531 = vrot.slane %v3253, 4
      %v3532 = vsel %vm3261, 0.0, %v3531
      %v3534 = vunpack.c.l.s4 1983009808
      %v3535 = vunpack.c.0.s8 %v3534
      %v3536 = vperm.slane %v3253, %v3535
      %v3538 = vunpack.c.l.s4 1983009808
      %v3539 = vunpack.c.0.s8 %v3538
      %v3540 = vperm.slane %v3532, %v3539
      %v3541 = vrot.slane %v3536, 4
      %v3542 = vsel %vm3261, %v3541, %v3526
      %v3543 = vrot.slane %v3526, 4
      %v3544 = vsel %vm3261, %v3536, %v3543
      %v3546 = vunpack.c.l.s4 1934713408
      %v3547 = vunpack.c.0.s8 %v3546
      %v3548 = vperm.slane %v3542, %v3547
      %v3550 = vunpack.c.l.s4 1934713408
      %v3551 = vunpack.c.0.s8 %v3550
      %v3552 = vperm.slane %v3544, %v3551
      %v3553 = vrot.slane %v3540, 4
      %v3554 = vsel %vm3261, %v3553, %v3530
      %v3555 = vrot.slane %v3530, 4
      %v3556 = vsel %vm3261, %v3540, %v3555
      %v3558 = vunpack.c.l.s4 1934713408
      %v3559 = vunpack.c.0.s8 %v3558
      %v3560 = vperm.slane %v3554, %v3559
      %v3562 = vunpack.c.l.s4 1934713408
      %v3563 = vunpack.c.0.s8 %v3562
      %v3564 = vperm.slane %v3556, %v3563
      %v3565 = vrot.slane %v3548, 4
      %v3566 = vsel %vm3261, 0.0, %v3565
      %v3567 = vrot.slane %v3552, 4
      %v3568 = vsel %vm3261, 0.0, %v3567
      %v3569 = vrot.slane %v3560, 4
      %v3570 = vsel %vm3261, 0.0, %v3569
      %v3571 = vrot.slane %v3564, 4
      %v3572 = vsel %vm3261, 0.0, %v3571
      %v3573 = vrot.slane %v3179, 4
      %v3574 = vsel %vm3261, 0.0, %v3573
      %v3576 = vunpack.c.l.s4 1983009808
      %v3577 = vunpack.c.0.s8 %v3576
      %v3578 = vperm.slane %v3179, %v3577
      %v3580 = vunpack.c.l.s4 1983009808
      %v3581 = vunpack.c.0.s8 %v3580
      %v3582 = vperm.slane %v3574, %v3581
      %v3583 = vrot.slane %v3256, 4
      %v3584 = vsel %vm3261, 0.0, %v3583
      %v3586 = vunpack.c.l.s4 1983009808
      %v3587 = vunpack.c.0.s8 %v3586
      %v3588 = vperm.slane %v3256, %v3587
      %v3590 = vunpack.c.l.s4 1983009808
      %v3591 = vunpack.c.0.s8 %v3590
      %v3592 = vperm.slane %v3584, %v3591
      %v3593 = vrot.slane %v3588, 4
      %v3594 = vsel %vm3261, %v3593, %v3578
      %v3595 = vrot.slane %v3578, 4
      %v3596 = vsel %vm3261, %v3588, %v3595
      %v3598 = vunpack.c.l.s4 1934713408
      %v3599 = vunpack.c.0.s8 %v3598
      %v3600 = vperm.slane %v3594, %v3599
      %v3602 = vunpack.c.l.s4 1934713408
      %v3603 = vunpack.c.0.s8 %v3602
      %v3604 = vperm.slane %v3596, %v3603
      %v3605 = vrot.slane %v3592, 4
      %v3606 = vsel %vm3261, %v3605, %v3582
      %v3607 = vrot.slane %v3582, 4
      %v3608 = vsel %vm3261, %v3592, %v3607
      %v3610 = vunpack.c.l.s4 1934713408
      %v3611 = vunpack.c.0.s8 %v3610
      %v3612 = vperm.slane %v3606, %v3611
      %v3614 = vunpack.c.l.s4 1934713408
      %v3615 = vunpack.c.0.s8 %v3614
      %v3616 = vperm.slane %v3608, %v3615
      %v3617 = vrot.slane %v3600, 4
      %v3618 = vsel %vm3261, 0.0, %v3617
      %v3619 = vrot.slane %v3604, 4
      %v3620 = vsel %vm3261, 0.0, %v3619
      %v3621 = vrot.slane %v3612, 4
      %v3622 = vsel %vm3261, 0.0, %v3621
      %v3623 = vrot.slane %v3616, 4
      %v3624 = vsel %vm3261, 0.0, %v3623
      %v3625 = vrot.slane %v3181, 4
      %v3626 = vsel %vm3261, 0.0, %v3625
      %v3628 = vunpack.c.l.s4 1983009808
      %v3629 = vunpack.c.0.s8 %v3628
      %v3630 = vperm.slane %v3181, %v3629
      %v3632 = vunpack.c.l.s4 1983009808
      %v3633 = vunpack.c.0.s8 %v3632
      %v3634 = vperm.slane %v3626, %v3633
      %v3635 = vrot.slane %v3258, 4
      %v3636 = vsel %vm3261, 0.0, %v3635
      %v3638 = vunpack.c.l.s4 1983009808
      %v3639 = vunpack.c.0.s8 %v3638
      %v3640 = vperm.slane %v3258, %v3639
      %v3642 = vunpack.c.l.s4 1983009808
      %v3643 = vunpack.c.0.s8 %v3642
      %v3644 = vperm.slane %v3636, %v3643
      %v3645 = vrot.slane %v3640, 4
      %v3646 = vsel %vm3261, %v3645, %v3630
      %v3647 = vrot.slane %v3630, 4
      %v3648 = vsel %vm3261, %v3640, %v3647
      %v3650 = vunpack.c.l.s4 1934713408
      %v3651 = vunpack.c.0.s8 %v3650
      %v3652 = vperm.slane %v3646, %v3651
      %v3654 = vunpack.c.l.s4 1934713408
      %v3655 = vunpack.c.0.s8 %v3654
      %v3656 = vperm.slane %v3648, %v3655
      %v3657 = vrot.slane %v3644, 4
      %v3658 = vsel %vm3261, %v3657, %v3634
      %v3659 = vrot.slane %v3634, 4
      %v3660 = vsel %vm3261, %v3644, %v3659
      %v3662 = vunpack.c.l.s4 1934713408
      %v3663 = vunpack.c.0.s8 %v3662
      %v3664 = vperm.slane %v3658, %v3663
      %v3666 = vunpack.c.l.s4 1934713408
      %v3667 = vunpack.c.0.s8 %v3666
      %v3668 = vperm.slane %v3660, %v3667
      %v3669 = vrot.slane %v3652, 4
      %v3670 = vsel %vm3261, 0.0, %v3669
      %v3671 = vrot.slane %v3656, 4
      %v3672 = vsel %vm3261, 0.0, %v3671
      %v3673 = vrot.slane %v3664, 4
      %v3674 = vsel %vm3261, 0.0, %v3673
      %v3675 = vrot.slane %v3668, 4
      %v3676 = vsel %vm3261, 0.0, %v3675
      %v3677 = vsel %vm3261, %v3307, %v3288
      %v3679 = vunpack.c.l.s4 1983009808
      %v3680 = vunpack.c.0.s8 %v3679
      %v3681 = vperm.slane %v3677, %v3680
      %v3682 = vrot.slane %v3308, 4
      %v3683 = vsel %vm3261, %v3682, %v3306
      %v3685 = vunpack.c.l.s4 1983009808
      %v3686 = vunpack.c.0.s8 %v3685
      %v3687 = vperm.slane %v3683, %v3686
      %v3688 = vsel %vm3261, %v3311, %v3300
      %v3690 = vunpack.c.l.s4 1983009808
      %v3691 = vunpack.c.0.s8 %v3690
      %v3692 = vperm.slane %v3688, %v3691
      %v3693 = vrot.slane %v3312, 4
      %v3694 = vsel %vm3261, %v3693, %v3310
      %v3696 = vunpack.c.l.s4 1983009808
      %v3697 = vunpack.c.0.s8 %v3696
      %v3698 = vperm.slane %v3694, %v3697
      %v3699 = vrot.slane %v3687, 4
      %v3700 = vsel %vm3261, %v3699, %v3681
      %v3702 = vunpack.c.l.s4 1934713408
      %v3703 = vunpack.c.0.s8 %v3702
      %v3704 = vperm.slane %v3700, %v3703
      %v3705 = vrot.slane %v3698, 4
      %v3706 = vsel %vm3261, %v3705, %v3692
      %v3708 = vunpack.c.l.s4 1934713408
      %v3709 = vunpack.c.0.s8 %v3708
      %v3710 = vperm.slane %v3706, %v3709
      %v3711 = vrot.slane %v3710, 4
      %v3712 = vsel %vm3261, %v3711, %v3704
      %v3713 = vrot.slane %v3704, 4
      %v3714 = vsel %vm3261, %v3710, %v3713
      %v3715 = vsel %vm3261, %v3359, %v3340
      %v3717 = vunpack.c.l.s4 1983009808
      %v3718 = vunpack.c.0.s8 %v3717
      %v3719 = vperm.slane %v3715, %v3718
      %v3720 = vrot.slane %v3360, 4
      %v3721 = vsel %vm3261, %v3720, %v3358
      %v3723 = vunpack.c.l.s4 1983009808
      %v3724 = vunpack.c.0.s8 %v3723
      %v3725 = vperm.slane %v3721, %v3724
      %v3726 = vsel %vm3261, %v3363, %v3352
      %v3728 = vunpack.c.l.s4 1983009808
      %v3729 = vunpack.c.0.s8 %v3728
      %v3730 = vperm.slane %v3726, %v3729
      %v3731 = vrot.slane %v3364, 4
      %v3732 = vsel %vm3261, %v3731, %v3362
      %v3734 = vunpack.c.l.s4 1983009808
      %v3735 = vunpack.c.0.s8 %v3734
      %v3736 = vperm.slane %v3732, %v3735
      %v3737 = vrot.slane %v3725, 4
      %v3738 = vsel %vm3261, %v3737, %v3719
      %v3740 = vunpack.c.l.s4 1934713408
      %v3741 = vunpack.c.0.s8 %v3740
      %v3742 = vperm.slane %v3738, %v3741
      %v3743 = vrot.slane %v3736, 4
      %v3744 = vsel %vm3261, %v3743, %v3730
      %v3746 = vunpack.c.l.s4 1934713408
      %v3747 = vunpack.c.0.s8 %v3746
      %v3748 = vperm.slane %v3744, %v3747
      %v3749 = vrot.slane %v3748, 4
      %v3750 = vsel %vm3261, %v3749, %v3742
      %v3751 = vrot.slane %v3742, 4
      %v3752 = vsel %vm3261, %v3748, %v3751
      %v3753 = vsel %vm3261, %v3411, %v3392
      %v3755 = vunpack.c.l.s4 1983009808
      %v3756 = vunpack.c.0.s8 %v3755
      %v3757 = vperm.slane %v3753, %v3756
      %v3758 = vrot.slane %v3412, 4
      %v3759 = vsel %vm3261, %v3758, %v3410
      %v3761 = vunpack.c.l.s4 1983009808
      %v3762 = vunpack.c.0.s8 %v3761
      %v3763 = vperm.slane %v3759, %v3762
      %v3764 = vsel %vm3261, %v3415, %v3404
      %v3766 = vunpack.c.l.s4 1983009808
      %v3767 = vunpack.c.0.s8 %v3766
      %v3768 = vperm.slane %v3764, %v3767
      %v3769 = vrot.slane %v3416, 4
      %v3770 = vsel %vm3261, %v3769, %v3414
      %v3772 = vunpack.c.l.s4 1983009808
      %v3773 = vunpack.c.0.s8 %v3772
      %v3774 = vperm.slane %v3770, %v3773
      %v3775 = vrot.slane %v3763, 4
      %v3776 = vsel %vm3261, %v3775, %v3757
      %v3778 = vunpack.c.l.s4 1934713408
      %v3779 = vunpack.c.0.s8 %v3778
      %v3780 = vperm.slane %v3776, %v3779
      %v3781 = vrot.slane %v3774, 4
      %v3782 = vsel %vm3261, %v3781, %v3768
      %v3784 = vunpack.c.l.s4 1934713408
      %v3785 = vunpack.c.0.s8 %v3784
      %v3786 = vperm.slane %v3782, %v3785
      %v3787 = vrot.slane %v3786, 4
      %v3788 = vsel %vm3261, %v3787, %v3780
      %v3789 = vrot.slane %v3780, 4
      %v3790 = vsel %vm3261, %v3786, %v3789
      %v3791 = vsel %vm3261, %v3463, %v3444
      %v3793 = vunpack.c.l.s4 1983009808
      %v3794 = vunpack.c.0.s8 %v3793
      %v3795 = vperm.slane %v3791, %v3794
      %v3796 = vrot.slane %v3464, 4
      %v3797 = vsel %vm3261, %v3796, %v3462
      %v3799 = vunpack.c.l.s4 1983009808
      %v3800 = vunpack.c.0.s8 %v3799
      %v3801 = vperm.slane %v3797, %v3800
      %v3802 = vsel %vm3261, %v3467, %v3456
      %v3804 = vunpack.c.l.s4 1983009808
      %v3805 = vunpack.c.0.s8 %v3804
      %v3806 = vperm.slane %v3802, %v3805
      %v3807 = vrot.slane %v3468, 4
      %v3808 = vsel %vm3261, %v3807, %v3466
      %v3810 = vunpack.c.l.s4 1983009808
      %v3811 = vunpack.c.0.s8 %v3810
      %v3812 = vperm.slane %v3808, %v3811
      %v3813 = vrot.slane %v3801, 4
      %v3814 = vsel %vm3261, %v3813, %v3795
      %v3816 = vunpack.c.l.s4 1934713408
      %v3817 = vunpack.c.0.s8 %v3816
      %v3818 = vperm.slane %v3814, %v3817
      %v3819 = vrot.slane %v3812, 4
      %v3820 = vsel %vm3261, %v3819, %v3806
      %v3822 = vunpack.c.l.s4 1934713408
      %v3823 = vunpack.c.0.s8 %v3822
      %v3824 = vperm.slane %v3820, %v3823
      %v3825 = vrot.slane %v3824, 4
      %v3826 = vsel %vm3261, %v3825, %v3818
      %v3827 = vrot.slane %v3818, 4
      %v3828 = vsel %vm3261, %v3824, %v3827
      %v3829 = vsel %vm3261, %v3515, %v3496
      %v3831 = vunpack.c.l.s4 1983009808
      %v3832 = vunpack.c.0.s8 %v3831
      %v3833 = vperm.slane %v3829, %v3832
      %v3834 = vrot.slane %v3516, 4
      %v3835 = vsel %vm3261, %v3834, %v3514
      %v3837 = vunpack.c.l.s4 1983009808
      %v3838 = vunpack.c.0.s8 %v3837
      %v3839 = vperm.slane %v3835, %v3838
      %v3840 = vsel %vm3261, %v3519, %v3508
      %v3842 = vunpack.c.l.s4 1983009808
      %v3843 = vunpack.c.0.s8 %v3842
      %v3844 = vperm.slane %v3840, %v3843
      %v3845 = vrot.slane %v3520, 4
      %v3846 = vsel %vm3261, %v3845, %v3518
      %v3848 = vunpack.c.l.s4 1983009808
      %v3849 = vunpack.c.0.s8 %v3848
      %v3850 = vperm.slane %v3846, %v3849
      %v3851 = vrot.slane %v3839, 4
      %v3852 = vsel %vm3261, %v3851, %v3833
      %v3854 = vunpack.c.l.s4 1934713408
      %v3855 = vunpack.c.0.s8 %v3854
      %v3856 = vperm.slane %v3852, %v3855
      %v3857 = vrot.slane %v3850, 4
      %v3858 = vsel %vm3261, %v3857, %v3844
      %v3860 = vunpack.c.l.s4 1934713408
      %v3861 = vunpack.c.0.s8 %v3860
      %v3862 = vperm.slane %v3858, %v3861
      %v3863 = vrot.slane %v3862, 4
      %v3864 = vsel %vm3261, %v3863, %v3856
      %v3865 = vrot.slane %v3856, 4
      %v3866 = vsel %vm3261, %v3862, %v3865
      %v3867 = vsel %vm3261, %v3567, %v3548
      %v3869 = vunpack.c.l.s4 1983009808
      %v3870 = vunpack.c.0.s8 %v3869
      %v3871 = vperm.slane %v3867, %v3870
      %v3872 = vrot.slane %v3568, 4
      %v3873 = vsel %vm3261, %v3872, %v3566
      %v3875 = vunpack.c.l.s4 1983009808
      %v3876 = vunpack.c.0.s8 %v3875
      %v3877 = vperm.slane %v3873, %v3876
      %v3878 = vsel %vm3261, %v3571, %v3560
      %v3880 = vunpack.c.l.s4 1983009808
      %v3881 = vunpack.c.0.s8 %v3880
      %v3882 = vperm.slane %v3878, %v3881
      %v3883 = vrot.slane %v3572, 4
      %v3884 = vsel %vm3261, %v3883, %v3570
      %v3886 = vunpack.c.l.s4 1983009808
      %v3887 = vunpack.c.0.s8 %v3886
      %v3888 = vperm.slane %v3884, %v3887
      %v3889 = vrot.slane %v3877, 4
      %v3890 = vsel %vm3261, %v3889, %v3871
      %v3892 = vunpack.c.l.s4 1934713408
      %v3893 = vunpack.c.0.s8 %v3892
      %v3894 = vperm.slane %v3890, %v3893
      %v3895 = vrot.slane %v3888, 4
      %v3896 = vsel %vm3261, %v3895, %v3882
      %v3898 = vunpack.c.l.s4 1934713408
      %v3899 = vunpack.c.0.s8 %v3898
      %v3900 = vperm.slane %v3896, %v3899
      %v3901 = vrot.slane %v3900, 4
      %v3902 = vsel %vm3261, %v3901, %v3894
      %v3903 = vrot.slane %v3894, 4
      %v3904 = vsel %vm3261, %v3900, %v3903
      %v3905 = vsel %vm3261, %v3619, %v3600
      %v3907 = vunpack.c.l.s4 1983009808
      %v3908 = vunpack.c.0.s8 %v3907
      %v3909 = vperm.slane %v3905, %v3908
      %v3910 = vrot.slane %v3620, 4
      %v3911 = vsel %vm3261, %v3910, %v3618
      %v3913 = vunpack.c.l.s4 1983009808
      %v3914 = vunpack.c.0.s8 %v3913
      %v3915 = vperm.slane %v3911, %v3914
      %v3916 = vsel %vm3261, %v3623, %v3612
      %v3918 = vunpack.c.l.s4 1983009808
      %v3919 = vunpack.c.0.s8 %v3918
      %v3920 = vperm.slane %v3916, %v3919
      %v3921 = vrot.slane %v3624, 4
      %v3922 = vsel %vm3261, %v3921, %v3622
      %v3924 = vunpack.c.l.s4 1983009808
      %v3925 = vunpack.c.0.s8 %v3924
      %v3926 = vperm.slane %v3922, %v3925
      %v3927 = vrot.slane %v3915, 4
      %v3928 = vsel %vm3261, %v3927, %v3909
      %v3930 = vunpack.c.l.s4 1934713408
      %v3931 = vunpack.c.0.s8 %v3930
      %v3932 = vperm.slane %v3928, %v3931
      %v3933 = vrot.slane %v3926, 4
      %v3934 = vsel %vm3261, %v3933, %v3920
      %v3936 = vunpack.c.l.s4 1934713408
      %v3937 = vunpack.c.0.s8 %v3936
      %v3938 = vperm.slane %v3934, %v3937
      %v3939 = vrot.slane %v3938, 4
      %v3940 = vsel %vm3261, %v3939, %v3932
      %v3941 = vrot.slane %v3932, 4
      %v3942 = vsel %vm3261, %v3938, %v3941
      %v3943 = vsel %vm3261, %v3671, %v3652
      %v3945 = vunpack.c.l.s4 1983009808
      %v3946 = vunpack.c.0.s8 %v3945
      %v3947 = vperm.slane %v3943, %v3946
      %v3948 = vrot.slane %v3672, 4
      %v3949 = vsel %vm3261, %v3948, %v3670
      %v3951 = vunpack.c.l.s4 1983009808
      %v3952 = vunpack.c.0.s8 %v3951
      %v3953 = vperm.slane %v3949, %v3952
      %v3954 = vsel %vm3261, %v3675, %v3664
      %v3956 = vunpack.c.l.s4 1983009808
      %v3957 = vunpack.c.0.s8 %v3956
      %v3958 = vperm.slane %v3954, %v3957
      %v3959 = vrot.slane %v3676, 4
      %v3960 = vsel %vm3261, %v3959, %v3674
      %v3962 = vunpack.c.l.s4 1983009808
      %v3963 = vunpack.c.0.s8 %v3962
      %v3964 = vperm.slane %v3960, %v3963
      %v3965 = vrot.slane %v3953, 4
      %v3966 = vsel %vm3261, %v3965, %v3947
      %v3968 = vunpack.c.l.s4 1934713408
      %v3969 = vunpack.c.0.s8 %v3968
      %v3970 = vperm.slane %v3966, %v3969
      %v3971 = vrot.slane %v3964, 4
      %v3972 = vsel %vm3261, %v3971, %v3958
      %v3974 = vunpack.c.l.s4 1934713408
      %v3975 = vunpack.c.0.s8 %v3974
      %v3976 = vperm.slane %v3972, %v3975
      %v3977 = vrot.slane %v3976, 4
      %v3978 = vsel %vm3261, %v3977, %v3970
      %v3979 = vrot.slane %v3970, 4
      %v3980 = vsel %vm3261, %v3976, %v3979
      %3989 = vrot.lane.b32.xlu0 %v3714, 16
      %v3990 = vpop.permute.xlu0 %3989
      %3991 = vrot.lane.b32.xlu0 %v3752, 16
      %v3992 = vpop.permute.xlu0 %3991
      %3993 = vrot.lane.b32.xlu0 %v3790, 16
      %v3994 = vpop.permute.xlu0 %3993
      %3995 = vrot.lane.b32.xlu0 %v3828, 16
      %v3996 = vpop.permute.xlu0 %3995
      %3997 = vrot.lane.b32.xlu0 %v3866, 16
      %v3998 = vpop.permute.xlu0 %3997
      %3999 = vrot.lane.b32.xlu0 %v3904, 16
      %v4000 = vpop.permute.xlu0 %3999
      %4001 = vrot.lane.b32.xlu0 %v3942, 16
      %v4002 = vpop.permute.xlu0 %4001
      %4003 = vrot.lane.b32.xlu0 %v3980, 16
      %v4004 = vpop.permute.xlu0 %4003
      %v4013 = vsel %vm2782, %v3712, %v3990
      %v4014 = vsel %vm2782, %v3750, %v3992
      %v4015 = vsel %vm2782, %v3788, %v3994
      %v4016 = vsel %vm2782, %v3826, %v3996
      %v4017 = vsel %vm2782, %v3864, %v3998
      %v4018 = vsel %vm2782, %v3902, %v4000
      %v4019 = vsel %vm2782, %v3940, %v4002
      %v4020 = vsel %vm2782, %v3978, %v4004
      %v4021 = vpack.c.bf16 %v4014, %v4013
      %v4022 = vpack.c.bf16 %v4016, %v4015
      %v4023 = vpack.c.bf16 %v4018, %v4017
      %v4024 = vpack.c.bf16 %v4020, %v4019
      %v4025 = vld [vmem:[%s7] sm:$0xf]
      %v4026 = vld [vmem:[%s7 + $0x4] sm:$0xf]
      %v4027 = vld [vmem:[%s7 + $0x8] sm:$0xf]
      %v4028 = vld [vmem:[%s7 + $0xc] sm:$0xf]
      %v4029 = vld [vmem:[%s8] sm:$0x1]
      %v4031 = vperm.slane %v4029, 0
      %v4037 = vunpack.c.l.b16 %v4025
      %v4038 = vunpack.c.l.b16 %v4026
      %v4039 = vunpack.c.l.b16 %v4027
      %v4040 = vunpack.c.l.b16 %v4028
      %v4041 = vpack.c.b16 %v4038, %v4037
      %v4042 = vpack.c.b16 %v4040, %v4039
      %v4046 = vsel %vm501, %v4021, 0
      %v4049 = vsel %vm501, %v4022, 0
      %v4052 = vsel %vm501, %v4023, 0
      %v4055 = vsel %vm501, %v4024, 0
      %4057 = vmatpush.bf16.msra.mxu0 0
      %4058 = vmatpush.bf16.msra.mxu0 0
      %4059 = vmatpush.bf16.msra.mxu0 0
      %4060 = vmatpush.bf16.msra.mxu0 0
      %4061 = vmatpush.bf16.msra.mxu0 0
      %4062 = vmatpush.bf16.msra.mxu0 0
      %4063 = vmatpush.bf16.msra.mxu0 %v4042
      %4064 = vmatpush.bf16.msra.mxu0 %v4041
      %4065 = vmatmul.bf16.gmra.mxu0 %v4046
      %v4066 = vpop.f32.mrf.mxu0
      %v4067 = vadd.f32 %v4031, %v4066
      %v4068 = vpop.f32.mrf.mxu0
      %v4069 = vadd.f32 %v4031, %v4068
      %4070 = vmatmul.bf16.gmra.mxu0 %v4049
      %v4071 = vpop.f32.mrf.mxu0
      %v4072 = vadd.f32 %v4031, %v4071
      %v4073 = vpop.f32.mrf.mxu0
      %v4074 = vadd.f32 %v4031, %v4073
      %4075 = vmatmul.bf16.gmra.mxu0 %v4052
      %v4076 = vpop.f32.mrf.mxu0
      %v4077 = vadd.f32 %v4031, %v4076
      %v4078 = vpop.f32.mrf.mxu0
      %v4079 = vadd.f32 %v4031, %v4078
      %4080 = vmatmul.bf16.gmra.mxu0 %v4055
      %v4081 = vpop.f32.mrf.mxu0
      %v4082 = vadd.f32 %v4031, %v4081
      %v4083 = vpop.f32.mrf.mxu0
      %v4084 = vadd.f32 %v4031, %v4083
      %4085 = vdwg.mxu0
      %v4086 = vadd.f32 %v4067, %v431
      %v4087 = vadd.f32 %v4069, %v432
      %v4088 = vadd.f32 %v4072, %v433
      %v4089 = vadd.f32 %v4074, %v434
      %v4090 = vadd.f32 %v4077, %v435
      %v4091 = vadd.f32 %v4079, %v436
      %v4092 = vadd.f32 %v4082, %v437
      %v4093 = vadd.f32 %v4084, %v438
      %4094 = vst.msk [vmem:[%s418] sm:$0xff] %vm501, %v4086
      %4095 = vst.msk [vmem:[%s418 + $0x8] sm:$0xff] %vm501, %v4087
      %4096 = vst.msk [vmem:[%s418 + $0x10] sm:$0xff] %vm501, %v4088
      %4097 = vst.msk [vmem:[%s418 + $0x18] sm:$0xff] %vm501, %v4089
      %4098 = vst.msk [vmem:[%s418 + $0x20] sm:$0xff] %vm501, %v4090
      %4099 = vst.msk [vmem:[%s418 + $0x28] sm:$0xff] %vm501, %v4091
      %4100 = vst.msk [vmem:[%s418 + $0x30] sm:$0xff] %vm501, %v4092
      %4101 = vst.msk [vmem:[%s418 + $0x38] sm:$0xff] %vm501, %v4093
      %s4102 = smul.u32 8, %s25
      %p4103 = scmp.lt.s32.totalorder %s24, 1
      %s4104 = scalar_select %p4103, %s24, 1
      %p4105 = scmp.lt.s32.totalorder %s4102, 7
      %s4106 = scalar_select %p4105, %s4102, 7
      %s4107 = smul.addr %s4104, 8
      %s4108 = sadd.s32 %s4106, %s4107
      %s4109 = smul.addr %s4108, 8
      %s4110 = scalar_lea.vmem %s9, %s4109
      // Predicated region
      $region57: #{tpu_custom_call.1} parent=55 // pred_check
        %p4111 = pneg %p263
      $region58: #{tpu_custom_call.1} parent=55 // pred_check_branch
        %4113 = sbr.rel (%p4111) target = $region60
      $region59: #{tpu_custom_call.1} parent=55 // pred_region
        %s4114 = smul.u32 8, %s25
      $region60: #{tpu_custom_call.1} parent=55 // pred_fallthru
        _
    $region56: #{tpu_custom_call.1} parent=5 // pred_fallthru
      _
    %p4115 = scmp.le.s32.totalorder 2, %s15
    // Predicated region
    $region61: #{tpu_custom_call.1} parent=5 // pred_check
      %p4116 = pneg %p4115
    $region62: #{tpu_custom_call.1} parent=5 // pred_check_branch
      %4118 = sbr.rel (%p4116) target = $region64
    $region63: #{tpu_custom_call.1} parent=5 // pred_region
      %s4119 = ssub.s32 %s15, 2
      // Predicated region
      $region65: #{tpu_custom_call.1} parent=63 // pred_check
        %p4120 = pneg %p269
      $region66: #{tpu_custom_call.1} parent=63 // pred_check_branch
        %4122 = sbr.rel (%p4120) target = $region68
      $region67: #{tpu_custom_call.1} parent=63 // pred_region
        %s4123 = smul.u32 8, %s27
        %p4124 = scmp.lt.s32.totalorder %s26, 1
        %s4125 = scalar_select %p4124, %s26, 1
        %p4126 = scmp.lt.s32.totalorder %s4123, 7
        %s4127 = scalar_select %p4126, %s4123, 7
        %s4128 = smul.addr %s4125, 8
        %s4129 = sadd.s32 %s4127, %s4128
        %s4130 = smul.addr %s4129, 8
        %s4131 = scalar_lea.vmem %s9, %s4130
      $region68: #{tpu_custom_call.1} parent=63 // pred_fallthru
        _
    $region64: #{tpu_custom_call.1} parent=5 // pred_fallthru
      _
  $region6: #{tpu_custom_call.1} parent=0 // loop_footer
    %s19 = sadd.s32 1, %s15
  $region7: #{tpu_custom_call.1} parent=0 // loop_footer_branch
    %14 = sbr.rel target = $region3
  $region8: #{tpu_custom_call.1} parent=0 // loop_exit
    _

</llo_original>
